<compile_context>
chip_gen: v7x
topology: tpu7x:2x2x1
jax: 0.10.0
libtpu: 0.0.40
codegen_flags: <defaults>
</compile_context>

<pallas_src>
import jax
import jax.numpy as jnp
from jax.experimental import pallas as pl
from jax.experimental.pallas import tpu as pltpu


# ----------------------------------------------------------------------------
# Fused Pallas kernel: one batch element per grid step, everything in VMEM.
# ----------------------------------------------------------------------------
def _lenet_fused_kernel(x_ref, t1_ref, b1_ref, r24_ref, c144_ref,
                        t2_ref, b2_ref, r8_ref, c96_ref,
                        w1p_ref, bf1_ref, w2t_ref, bf2_ref, w3t_ref, bo_ref,
                        o_ref):
    f32 = jnp.float32

    def mm(a, b):
        return jnp.dot(a, b, preferred_element_type=f32)

    x = x_ref[0]                                    # (28, 28)

    # --- conv1 + bias + ReLU:  Y1[p, q*6 + c] -------------------------------
    y1 = mm(x[0:24, :], t1_ref[0])
    for kh in range(1, 5):
        y1 = y1 + mm(x[kh:kh + 24, :], t1_ref[kh])
    y1 = jnp.maximum(y1 + b1_ref[...], 0.0)         # (24, 144)

    # --- 2x2 max-pool, stride 2 (fused, via 0/1 selection matmuls) ----------
    a0 = mm(r24_ref[0], y1)                         # even conv rows (12, 144)
    a1 = mm(r24_ref[1], y1)                         # odd  conv rows
    p1 = jnp.maximum(
        jnp.maximum(mm(a0, c144_ref[0]), mm(a0, c144_ref[1])),
        jnp.maximum(mm(a1, c144_ref[0]), mm(a1, c144_ref[1])))   # (12, 72)

    # --- conv2 + bias + ReLU:  Y2[p, q*12 + co] -----------------------------
    y2 = mm(p1[0:8, :], t2_ref[0])
    for kh in range(1, 5):
        y2 = y2 + mm(p1[kh:kh + 8, :], t2_ref[kh])
    y2 = jnp.maximum(y2 + b2_ref[...], 0.0)         # (8, 96)

    # --- 2x2 max-pool, stride 2 ---------------------------------------------
    a0 = mm(r8_ref[0], y2)                          # (4, 96)
    a1 = mm(r8_ref[1], y2)
    p2 = jnp.maximum(
        jnp.maximum(mm(a0, c96_ref[0]), mm(a0, c96_ref[1])),
        jnp.maximum(mm(a1, c96_ref[0]), mm(a1, c96_ref[1])))     # (4, 48)

    # --- fc1 + ReLU (PyTorch flatten order folded into pre-permuted W1) -----
    z1 = bf1_ref[...]                               # (1, 120)
    for i in range(4):
        z1 = z1 + mm(p2[i:i + 1, :], w1p_ref[i])
    z1 = jnp.maximum(z1, 0.0)

    # --- fc2 + ReLU ----------------------------------------------------------
    z2 = jnp.maximum(mm(z1, w2t_ref[...]) + bf2_ref[...], 0.0)   # (1, 60)

    # --- out layer -----------------------------------------------------------
    o_ref[0] = mm(z2, w3t_ref[...]) + bo_ref[...]                # (1, 10)


# ----------------------------------------------------------------------------
# One-time (init-time) weight preprocessing -> kernel-ready operands.
# ----------------------------------------------------------------------------
def prepare_kernel_params(params):
    f32 = jnp.float32
    w1 = params["conv1_w"].astype(f32)        # (6, 1, 5, 5)
    b1 = params["conv1_b"].astype(f32)        # (6,)
    w2 = params["conv2_w"].astype(f32)        # (12, 6, 5, 5)
    b2 = params["conv2_b"].astype(f32)        # (12,)

    # conv1 Toeplitz expansion: T1[kh, w, q*6 + c] = w1[c,0,kh,w-q], 0<=w-q<5
    w_idx = jnp.arange(28)[:, None]
    q_idx = jnp.arange(24)[None, :]
    kw = w_idx - q_idx                                        # (28, 24)
    valid = (kw >= 0) & (kw < 5)
    w1k = jnp.transpose(w1[:, 0], (1, 2, 0))                  # (kh, kw, c)
    t1 = jnp.where(valid[None, :, :, None],
                   w1k[:, jnp.clip(kw, 0, 4), :], 0.0)        # (5, 28, 24, 6)
    t1 = t1.reshape(5, 28, 144)

    # conv2 Toeplitz: T2[kh, Q*6 + ci, q*12 + co] = w2[co,ci,kh,Q-q], 0<=Q-q<5
    Q_idx = jnp.arange(12)[:, None]
    q2_idx = jnp.arange(8)[None, :]
    kw2 = Q_idx - q2_idx                                      # (12, 8)
    valid2 = (kw2 >= 0) & (kw2 < 5)
    w2k = jnp.transpose(w2, (2, 3, 1, 0))                     # (kh, kw, ci, co)
    t2 = w2k[:, jnp.clip(kw2, 0, 4), :, :]                    # (5, 12, 8, 6, 12)
    t2 = jnp.transpose(t2, (0, 1, 3, 2, 4))                   # (kh, Q, ci, q, co)
    t2 = jnp.where(valid2[None, :, None, :, None], t2, 0.0)
    t2 = t2.reshape(5, 72, 96)

    # 0/1 selection matrices implementing the four 2x2-pool taps.
    def row_select(n_out, n_in):
        i = jnp.arange(n_out)[:, None]
        p = jnp.arange(n_in)[None, :]
        return jnp.stack([(p == 2 * i + r).astype(f32) for r in (0, 1)])

    def col_select(groups_in, groups_out, c):
        m = jnp.arange(groups_in * c)[:, None]
        n = jnp.arange(groups_out * c)[None, :]
        return jnp.stack(
            [(m == 2 * c * (n // c) + c * s + (n % c)).astype(f32)
             for s in (0, 1)])

    r24 = row_select(12, 24)        # (2, 12, 24)
    c144 = col_select(24, 12, 6)    # (2, 144, 72)
    r8 = row_select(4, 8)           # (2, 4, 8)
    c96 = col_select(8, 4, 12)      # (2, 96, 48)

    # fc1 permuted so W1p[i, j*12 + co, o] = fc1_w[o, co*16 + i*4 + j]
    w1p = params["fc1_w"].astype(f32).reshape(120, 12, 4, 4)  # (o, co, i, j)
    w1p = jnp.transpose(w1p, (2, 3, 1, 0)).reshape(4, 48, 120)

    return {
        "t1": t1, "b1row": jnp.tile(b1, 24).reshape(1, 144),
        "r24": r24, "c144": c144,
        "t2": t2, "b2row": jnp.tile(b2, 8).reshape(1, 96),
        "r8": r8, "c96": c96,
        "w1p": w1p, "bf1": params["fc1_b"].astype(f32).reshape(1, 120),
        "w2t": params["fc2_w"].astype(f32).T,                 # (120, 60)
        "bf2": params["fc2_b"].astype(f32).reshape(1, 60),
        "w3t": params["out_w"].astype(f32).T,                 # (60, 10)
        "bo": params["out_b"].astype(f32).reshape(1, 10),
    }


# ----------------------------------------------------------------------------
# Forward pass: one pallas_call over a "parallel" batch grid.
# ----------------------------------------------------------------------------
def network_forward(x_nchw, kp):
    n = x_nchw.shape[0]
    x3 = x_nchw.reshape(n, 28, 28)          # Cin == 1

    def full(shape):
        return pl.BlockSpec(shape, lambda b, _s=len(shape): (0,) * _s)

    out = pl.pallas_call(
        _lenet_fused_kernel,
        out_shape=jax.ShapeDtypeStruct((n, 1, 10), jnp.float32),
        grid=(n,),
        in_specs=[
            pl.BlockSpec((1, 28, 28), lambda b: (b, 0, 0)),   # input image
            full((5, 28, 144)), full((1, 144)),               # conv1
            full((2, 12, 24)), full((2, 144, 72)),            # pool1 selectors
            full((5, 72, 96)), full((1, 96)),                 # conv2
            full((2, 4, 8)), full((2, 96, 48)),               # pool2 selectors
            full((4, 48, 120)), full((1, 120)),               # fc1
            full((120, 60)), full((1, 60)),                   # fc2
            full((60, 10)), full((1, 10)),                    # out
        ],
        out_specs=pl.BlockSpec((1, 1, 10), lambda b: (b, 0, 0)),
        compiler_params=pltpu.CompilerParams(
            dimension_semantics=("parallel",)),
    )(x3, kp["t1"], kp["b1row"], kp["r24"], kp["c144"],
      kp["t2"], kp["b2row"], kp["r8"], kp["c96"],
      kp["w1p"], kp["bf1"], kp["w2t"], kp["bf2"], kp["w3t"], kp["bo"])
    return out.reshape(n, 10)


# ----------------------------------------------------------------------------
# Params + pure-JAX reference (for a correctness check).
# ----------------------------------------------------------------------------
def init_params(key):
    ks = jax.random.split(key, 10)
    return {
        "conv1_w": 0.1 * jax.random.normal(ks[0], (6, 1, 5, 5), jnp.float32),
        "conv1_b": 0.1 * jax.random.normal(ks[1], (6,), jnp.float32),
        "conv2_w": 0.1 * jax.random.normal(ks[2], (12, 6, 5, 5), jnp.float32),
        "conv2_b": 0.1 * jax.random.normal(ks[3], (12,), jnp.float32),
        "fc1_w":   0.1 * jax.random.normal(ks[4], (120, 192), jnp.float32),
        "fc1_b":   0.1 * jax.random.normal(ks[5], (120,), jnp.float32),
        "fc2_w":   0.1 * jax.random.normal(ks[6], (60, 120), jnp.float32),
        "fc2_b":   0.1 * jax.random.normal(ks[7], (60,), jnp.float32),
        "out_w":   0.1 * jax.random.normal(ks[8], (10, 60), jnp.float32),
        "out_b":   0.1 * jax.random.normal(ks[9], (10,), jnp.float32),
    }


def reference_forward(x_nchw, params):
    prec = jax.lax.Precision.HIGHEST
    dn = ("NCHW", "OIHW", "NCHW")
    t = jax.lax.conv_general_dilated(x_nchw, params["conv1_w"], (1, 1), "VALID",
                                     dimension_numbers=dn, precision=prec)
    t = jax.nn.relu(t + params["conv1_b"][None, :, None, None])
    t = jax.lax.reduce_window(t, -jnp.inf, jax.lax.max,
                              (1, 1, 2, 2), (1, 1, 2, 2), "VALID")
    t = jax.lax.conv_general_dilated(t, params["conv2_w"], (1, 1), "VALID",
                                     dimension_numbers=dn, precision=prec)
    t = jax.nn.relu(t + params["conv2_b"][None, :, None, None])
    t = jax.lax.reduce_window(t, -jnp.inf, jax.lax.max,
                              (1, 1, 2, 2), (1, 1, 2, 2), "VALID")
    t = t.reshape(t.shape[0], -1)
    t = jax.nn.relu(jnp.dot(t, params["fc1_w"].T, precision=prec)
                    + params["fc1_b"])
    t = jax.nn.relu(jnp.dot(t, params["fc2_w"].T, precision=prec)
                    + params["fc2_b"])
    return jnp.dot(t, params["out_w"].T, precision=prec) + params["out_b"]


if __name__ == "__main__":
    key = jax.random.PRNGKey(0)
    k_x, k_p = jax.random.split(key)
    # MNIST-like input implied by fc1 (12*4*4): (N=2, C=1, H=28, W=28), NCHW.
    x = jax.random.normal(k_x, (2, 1, 28, 28), jnp.float32)
    params = init_params(k_p)
    kparams = prepare_kernel_params(params)      # one-time weight repack

    fwd = jax.jit(network_forward)
    out = jax.block_until_ready(fwd(x, kparams))
    assert out.shape == (2, 10) and out.dtype == jnp.float32

    ref = reference_forward(x, params)
    if not jnp.allclose(out, ref, atol=5e-2, rtol=5e-2):
        max_err = float(jnp.max(jnp.abs(out - ref)))
        raise AssertionError(f"Pallas output mismatch, max |err| = {max_err:.3e}")
    print("KERNEL_OK")
</pallas_src>

<mosaic_0001>
module attributes {stable_mosaic.version = 11 : i64} {
  func.func @_lenet_fused_kernel(%arg0: i32, %arg1: memref<1x28x28xf32, #tpu.memory_space<vmem>>, %arg2: memref<5x28x144xf32, #tpu.memory_space<vmem>>, %arg3: memref<1x144xf32, #tpu.memory_space<vmem>>, %arg4: memref<2x12x24xf32, #tpu.memory_space<vmem>>, %arg5: memref<2x144x72xf32, #tpu.memory_space<vmem>>, %arg6: memref<5x72x96xf32, #tpu.memory_space<vmem>>, %arg7: memref<1x96xf32, #tpu.memory_space<vmem>>, %arg8: memref<2x4x8xf32, #tpu.memory_space<vmem>>, %arg9: memref<2x96x48xf32, #tpu.memory_space<vmem>>, %arg10: memref<4x48x120xf32, #tpu.memory_space<vmem>>, %arg11: memref<1x120xf32, #tpu.memory_space<vmem>>, %arg12: memref<120x60xf32, #tpu.memory_space<vmem>>, %arg13: memref<1x60xf32, #tpu.memory_space<vmem>>, %arg14: memref<60x10xf32, #tpu.memory_space<vmem>>, %arg15: memref<1x10xf32, #tpu.memory_space<vmem>>, %arg16: memref<1x1x10xf32, #tpu.memory_space<vmem>>) attributes {dimension_semantics = [#tpu.dimension_semantics<parallel>], iteration_bounds = array<i64: 2>, scalar_prefetch = 0 : i64, scratch_operands = 0 : i64, tpu.core_type = #tpu.core_type<tc>, window_params = [{transform_indices = @transform_0, window_bounds = array<i64: 1, 28, 28>}, {pipeline_mode = #tpu.pipeline_mode<synchronous>, transform_indices = @transform_1, window_bounds = array<i64: 5, 28, 144>}, {pipeline_mode = #tpu.pipeline_mode<synchronous>, transform_indices = @transform_2, window_bounds = array<i64: 1, 144>}, {pipeline_mode = #tpu.pipeline_mode<synchronous>, transform_indices = @transform_3, window_bounds = array<i64: 2, 12, 24>}, {pipeline_mode = #tpu.pipeline_mode<synchronous>, transform_indices = @transform_4, window_bounds = array<i64: 2, 144, 72>}, {pipeline_mode = #tpu.pipeline_mode<synchronous>, transform_indices = @transform_5, window_bounds = array<i64: 5, 72, 96>}, {pipeline_mode = #tpu.pipeline_mode<synchronous>, transform_indices = @transform_6, window_bounds = array<i64: 1, 96>}, {pipeline_mode = #tpu.pipeline_mode<synchronous>, transform_indices = @transform_7, window_bounds = array<i64: 2, 4, 8>}, {pipeline_mode = #tpu.pipeline_mode<synchronous>, transform_indices = @transform_8, window_bounds = array<i64: 2, 96, 48>}, {pipeline_mode = #tpu.pipeline_mode<synchronous>, transform_indices = @transform_9, window_bounds = array<i64: 4, 48, 120>}, {pipeline_mode = #tpu.pipeline_mode<synchronous>, transform_indices = @transform_10, window_bounds = array<i64: 1, 120>}, {pipeline_mode = #tpu.pipeline_mode<synchronous>, transform_indices = @transform_11, window_bounds = array<i64: 120, 60>}, {pipeline_mode = #tpu.pipeline_mode<synchronous>, transform_indices = @transform_12, window_bounds = array<i64: 1, 60>}, {pipeline_mode = #tpu.pipeline_mode<synchronous>, transform_indices = @transform_13, window_bounds = array<i64: 60, 10>}, {pipeline_mode = #tpu.pipeline_mode<synchronous>, transform_indices = @transform_14, window_bounds = array<i64: 1, 10>}, {transform_indices = @transform_15, window_bounds = array<i64: 1, 1, 10>}]} {
    %c0 = arith.constant 0 : index
    %c0_0 = arith.constant 0 : index
    %c0_1 = arith.constant 0 : index
    %0 = vector.load %arg1[%c0, %c0_0, %c0_1] : memref<1x28x28xf32, #tpu.memory_space<vmem>>, vector<1x28x28xf32>
    %1 = vector.shape_cast %0 : vector<1x28x28xf32> to vector<28x28xf32>
    %2 = vector.extract_strided_slice %1 {offsets = [0, 0], sizes = [24, 28], strides = [1, 1]} : vector<28x28xf32> to vector<24x28xf32>
    %c0_2 = arith.constant 0 : index
    %c0_3 = arith.constant 0 : index
    %c0_4 = arith.constant 0 : index
    %3 = vector.load %arg2[%c0_2, %c0_3, %c0_4] : memref<5x28x144xf32, #tpu.memory_space<vmem>>, vector<1x28x144xf32>
    %4 = vector.shape_cast %3 : vector<1x28x144xf32> to vector<28x144xf32>
    %cst = arith.constant dense<0.000000e+00> : vector<24x144xf32>
    %5 = tpu.matmul %2, %4, %cst {dimension_numbers = #tpu.dot_dimension_numbers<[1], [0], [0], [1], [0, 0, 1, 1], [], []>} : vector<24x28xf32>, vector<28x144xf32>, vector<24x144xf32> -> vector<24x144xf32>
    %6 = vector.extract_strided_slice %1 {offsets = [1, 0], sizes = [24, 28], strides = [1, 1]} : vector<28x28xf32> to vector<24x28xf32>
    %c1 = arith.constant 1 : index
    %c0_5 = arith.constant 0 : index
    %c0_6 = arith.constant 0 : index
    %7 = vector.load %arg2[%c1, %c0_5, %c0_6] : memref<5x28x144xf32, #tpu.memory_space<vmem>>, vector<1x28x144xf32>
    %8 = vector.shape_cast %7 : vector<1x28x144xf32> to vector<28x144xf32>
    %cst_7 = arith.constant dense<0.000000e+00> : vector<24x144xf32>
    %9 = tpu.matmul %6, %8, %cst_7 {dimension_numbers = #tpu.dot_dimension_numbers<[1], [0], [0], [1], [0, 0, 1, 1], [], []>} : vector<24x28xf32>, vector<28x144xf32>, vector<24x144xf32> -> vector<24x144xf32>
    %10 = arith.addf %5, %9 : vector<24x144xf32>
    %11 = vector.extract_strided_slice %1 {offsets = [2, 0], sizes = [24, 28], strides = [1, 1]} : vector<28x28xf32> to vector<24x28xf32>
    %c2 = arith.constant 2 : index
    %c0_8 = arith.constant 0 : index
    %c0_9 = arith.constant 0 : index
    %12 = vector.load %arg2[%c2, %c0_8, %c0_9] : memref<5x28x144xf32, #tpu.memory_space<vmem>>, vector<1x28x144xf32>
    %13 = vector.shape_cast %12 : vector<1x28x144xf32> to vector<28x144xf32>
    %cst_10 = arith.constant dense<0.000000e+00> : vector<24x144xf32>
    %14 = tpu.matmul %11, %13, %cst_10 {dimension_numbers = #tpu.dot_dimension_numbers<[1], [0], [0], [1], [0, 0, 1, 1], [], []>} : vector<24x28xf32>, vector<28x144xf32>, vector<24x144xf32> -> vector<24x144xf32>
    %15 = arith.addf %10, %14 : vector<24x144xf32>
    %16 = vector.extract_strided_slice %1 {offsets = [3, 0], sizes = [24, 28], strides = [1, 1]} : vector<28x28xf32> to vector<24x28xf32>
    %c3 = arith.constant 3 : index
    %c0_11 = arith.constant 0 : index
    %c0_12 = arith.constant 0 : index
    %17 = vector.load %arg2[%c3, %c0_11, %c0_12] : memref<5x28x144xf32, #tpu.memory_space<vmem>>, vector<1x28x144xf32>
    %18 = vector.shape_cast %17 : vector<1x28x144xf32> to vector<28x144xf32>
    %cst_13 = arith.constant dense<0.000000e+00> : vector<24x144xf32>
    %19 = tpu.matmul %16, %18, %cst_13 {dimension_numbers = #tpu.dot_dimension_numbers<[1], [0], [0], [1], [0, 0, 1, 1], [], []>} : vector<24x28xf32>, vector<28x144xf32>, vector<24x144xf32> -> vector<24x144xf32>
    %20 = arith.addf %15, %19 : vector<24x144xf32>
    %21 = vector.extract_strided_slice %1 {offsets = [4, 0], sizes = [24, 28], strides = [1, 1]} : vector<28x28xf32> to vector<24x28xf32>
    %c4 = arith.constant 4 : index
    %c0_14 = arith.constant 0 : index
    %c0_15 = arith.constant 0 : index
    %22 = vector.load %arg2[%c4, %c0_14, %c0_15] : memref<5x28x144xf32, #tpu.memory_space<vmem>>, vector<1x28x144xf32>
    %23 = vector.shape_cast %22 : vector<1x28x144xf32> to vector<28x144xf32>
    %cst_16 = arith.constant dense<0.000000e+00> : vector<24x144xf32>
    %24 = tpu.matmul %21, %23, %cst_16 {dimension_numbers = #tpu.dot_dimension_numbers<[1], [0], [0], [1], [0, 0, 1, 1], [], []>} : vector<24x28xf32>, vector<28x144xf32>, vector<24x144xf32> -> vector<24x144xf32>
    %25 = arith.addf %20, %24 : vector<24x144xf32>
    %c0_17 = arith.constant 0 : index
    %c0_18 = arith.constant 0 : index
    %26 = vector.load %arg3[%c0_17, %c0_18] : memref<1x144xf32, #tpu.memory_space<vmem>>, vector<1x144xf32>
    %27 = vector.broadcast %26 : vector<1x144xf32> to vector<24x144xf32>
    %28 = arith.addf %25, %27 : vector<24x144xf32>
    %cst_19 = arith.constant 0.000000e+00 : f32
    %29 = vector.broadcast %cst_19 : f32 to vector<24x144xf32>
    %30 = arith.maximumf %28, %29 : vector<24x144xf32>
    %c0_20 = arith.constant 0 : index
    %c0_21 = arith.constant 0 : index
    %c0_22 = arith.constant 0 : index
    %31 = vector.load %arg4[%c0_20, %c0_21, %c0_22] : memref<2x12x24xf32, #tpu.memory_space<vmem>>, vector<1x12x24xf32>
    %32 = vector.shape_cast %31 : vector<1x12x24xf32> to vector<12x24xf32>
    %cst_23 = arith.constant dense<0.000000e+00> : vector<12x144xf32>
    %33 = tpu.matmul %32, %30, %cst_23 {dimension_numbers = #tpu.dot_dimension_numbers<[1], [0], [0], [1], [0, 0, 1, 1], [], []>} : vector<12x24xf32>, vector<24x144xf32>, vector<12x144xf32> -> vector<12x144xf32>
    %c1_24 = arith.constant 1 : index
    %c0_25 = arith.constant 0 : index
    %c0_26 = arith.constant 0 : index
    %34 = vector.load %arg4[%c1_24, %c0_25, %c0_26] : memref<2x12x24xf32, #tpu.memory_space<vmem>>, vector<1x12x24xf32>
    %35 = vector.shape_cast %34 : vector<1x12x24xf32> to vector<12x24xf32>
    %cst_27 = arith.constant dense<0.000000e+00> : vector<12x144xf32>
    %36 = tpu.matmul %35, %30, %cst_27 {dimension_numbers = #tpu.dot_dimension_numbers<[1], [0], [0], [1], [0, 0, 1, 1], [], []>} : vector<12x24xf32>, vector<24x144xf32>, vector<12x144xf32> -> vector<12x144xf32>
    %c0_28 = arith.constant 0 : index
    %c0_29 = arith.constant 0 : index
    %c0_30 = arith.constant 0 : index
    %37 = vector.load %arg5[%c0_28, %c0_29, %c0_30] : memref<2x144x72xf32, #tpu.memory_space<vmem>>, vector<1x144x72xf32>
    %38 = vector.shape_cast %37 : vector<1x144x72xf32> to vector<144x72xf32>
    %cst_31 = arith.constant dense<0.000000e+00> : vector<12x72xf32>
    %39 = tpu.matmul %33, %38, %cst_31 {dimension_numbers = #tpu.dot_dimension_numbers<[1], [0], [0], [1], [0, 0, 1, 1], [], []>} : vector<12x144xf32>, vector<144x72xf32>, vector<12x72xf32> -> vector<12x72xf32>
    %c1_32 = arith.constant 1 : index
    %c0_33 = arith.constant 0 : index
    %c0_34 = arith.constant 0 : index
    %40 = vector.load %arg5[%c1_32, %c0_33, %c0_34] : memref<2x144x72xf32, #tpu.memory_space<vmem>>, vector<1x144x72xf32>
    %41 = vector.shape_cast %40 : vector<1x144x72xf32> to vector<144x72xf32>
    %cst_35 = arith.constant dense<0.000000e+00> : vector<12x72xf32>
    %42 = tpu.matmul %33, %41, %cst_35 {dimension_numbers = #tpu.dot_dimension_numbers<[1], [0], [0], [1], [0, 0, 1, 1], [], []>} : vector<12x144xf32>, vector<144x72xf32>, vector<12x72xf32> -> vector<12x72xf32>
    %43 = arith.maximumf %39, %42 : vector<12x72xf32>
    %c0_36 = arith.constant 0 : index
    %c0_37 = arith.constant 0 : index
    %c0_38 = arith.constant 0 : index
    %44 = vector.load %arg5[%c0_36, %c0_37, %c0_38] : memref<2x144x72xf32, #tpu.memory_space<vmem>>, vector<1x144x72xf32>
    %45 = vector.shape_cast %44 : vector<1x144x72xf32> to vector<144x72xf32>
    %cst_39 = arith.constant dense<0.000000e+00> : vector<12x72xf32>
    %46 = tpu.matmul %36, %45, %cst_39 {dimension_numbers = #tpu.dot_dimension_numbers<[1], [0], [0], [1], [0, 0, 1, 1], [], []>} : vector<12x144xf32>, vector<144x72xf32>, vector<12x72xf32> -> vector<12x72xf32>
    %c1_40 = arith.constant 1 : index
    %c0_41 = arith.constant 0 : index
    %c0_42 = arith.constant 0 : index
    %47 = vector.load %arg5[%c1_40, %c0_41, %c0_42] : memref<2x144x72xf32, #tpu.memory_space<vmem>>, vector<1x144x72xf32>
    %48 = vector.shape_cast %47 : vector<1x144x72xf32> to vector<144x72xf32>
    %cst_43 = arith.constant dense<0.000000e+00> : vector<12x72xf32>
    %49 = tpu.matmul %36, %48, %cst_43 {dimension_numbers = #tpu.dot_dimension_numbers<[1], [0], [0], [1], [0, 0, 1, 1], [], []>} : vector<12x144xf32>, vector<144x72xf32>, vector<12x72xf32> -> vector<12x72xf32>
    %50 = arith.maximumf %46, %49 : vector<12x72xf32>
    %51 = arith.maximumf %43, %50 : vector<12x72xf32>
    %52 = vector.extract_strided_slice %51 {offsets = [0, 0], sizes = [8, 72], strides = [1, 1]} : vector<12x72xf32> to vector<8x72xf32>
    %c0_44 = arith.constant 0 : index
    %c0_45 = arith.constant 0 : index
    %c0_46 = arith.constant 0 : index
    %53 = vector.load %arg6[%c0_44, %c0_45, %c0_46] : memref<5x72x96xf32, #tpu.memory_space<vmem>>, vector<1x72x96xf32>
    %54 = vector.shape_cast %53 : vector<1x72x96xf32> to vector<72x96xf32>
    %cst_47 = arith.constant dense<0.000000e+00> : vector<8x96xf32>
    %55 = tpu.matmul %52, %54, %cst_47 {dimension_numbers = #tpu.dot_dimension_numbers<[1], [0], [0], [1], [0, 0, 1, 1], [], []>} : vector<8x72xf32>, vector<72x96xf32>, vector<8x96xf32> -> vector<8x96xf32>
    %56 = vector.extract_strided_slice %51 {offsets = [1, 0], sizes = [8, 72], strides = [1, 1]} : vector<12x72xf32> to vector<8x72xf32>
    %c1_48 = arith.constant 1 : index
    %c0_49 = arith.constant 0 : index
    %c0_50 = arith.constant 0 : index
    %57 = vector.load %arg6[%c1_48, %c0_49, %c0_50] : memref<5x72x96xf32, #tpu.memory_space<vmem>>, vector<1x72x96xf32>
    %58 = vector.shape_cast %57 : vector<1x72x96xf32> to vector<72x96xf32>
    %cst_51 = arith.constant dense<0.000000e+00> : vector<8x96xf32>
    %59 = tpu.matmul %56, %58, %cst_51 {dimension_numbers = #tpu.dot_dimension_numbers<[1], [0], [0], [1], [0, 0, 1, 1], [], []>} : vector<8x72xf32>, vector<72x96xf32>, vector<8x96xf32> -> vector<8x96xf32>
    %60 = arith.addf %55, %59 : vector<8x96xf32>
    %61 = vector.extract_strided_slice %51 {offsets = [2, 0], sizes = [8, 72], strides = [1, 1]} : vector<12x72xf32> to vector<8x72xf32>
    %c2_52 = arith.constant 2 : index
    %c0_53 = arith.constant 0 : index
    %c0_54 = arith.constant 0 : index
    %62 = vector.load %arg6[%c2_52, %c0_53, %c0_54] : memref<5x72x96xf32, #tpu.memory_space<vmem>>, vector<1x72x96xf32>
    %63 = vector.shape_cast %62 : vector<1x72x96xf32> to vector<72x96xf32>
    %cst_55 = arith.constant dense<0.000000e+00> : vector<8x96xf32>
    %64 = tpu.matmul %61, %63, %cst_55 {dimension_numbers = #tpu.dot_dimension_numbers<[1], [0], [0], [1], [0, 0, 1, 1], [], []>} : vector<8x72xf32>, vector<72x96xf32>, vector<8x96xf32> -> vector<8x96xf32>
    %65 = arith.addf %60, %64 : vector<8x96xf32>
    %66 = vector.extract_strided_slice %51 {offsets = [3, 0], sizes = [8, 72], strides = [1, 1]} : vector<12x72xf32> to vector<8x72xf32>
    %c3_56 = arith.constant 3 : index
    %c0_57 = arith.constant 0 : index
    %c0_58 = arith.constant 0 : index
    %67 = vector.load %arg6[%c3_56, %c0_57, %c0_58] : memref<5x72x96xf32, #tpu.memory_space<vmem>>, vector<1x72x96xf32>
    %68 = vector.shape_cast %67 : vector<1x72x96xf32> to vector<72x96xf32>
    %cst_59 = arith.constant dense<0.000000e+00> : vector<8x96xf32>
    %69 = tpu.matmul %66, %68, %cst_59 {dimension_numbers = #tpu.dot_dimension_numbers<[1], [0], [0], [1], [0, 0, 1, 1], [], []>} : vector<8x72xf32>, vector<72x96xf32>, vector<8x96xf32> -> vector<8x96xf32>
    %70 = arith.addf %65, %69 : vector<8x96xf32>
    %71 = vector.extract_strided_slice %51 {offsets = [4, 0], sizes = [8, 72], strides = [1, 1]} : vector<12x72xf32> to vector<8x72xf32>
    %c4_60 = arith.constant 4 : index
    %c0_61 = arith.constant 0 : index
    %c0_62 = arith.constant 0 : index
    %72 = vector.load %arg6[%c4_60, %c0_61, %c0_62] : memref<5x72x96xf32, #tpu.memory_space<vmem>>, vector<1x72x96xf32>
    %73 = vector.shape_cast %72 : vector<1x72x96xf32> to vector<72x96xf32>
    %cst_63 = arith.constant dense<0.000000e+00> : vector<8x96xf32>
    %74 = tpu.matmul %71, %73, %cst_63 {dimension_numbers = #tpu.dot_dimension_numbers<[1], [0], [0], [1], [0, 0, 1, 1], [], []>} : vector<8x72xf32>, vector<72x96xf32>, vector<8x96xf32> -> vector<8x96xf32>
    %75 = arith.addf %70, %74 : vector<8x96xf32>
    %c0_64 = arith.constant 0 : index
    %c0_65 = arith.constant 0 : index
    %76 = vector.load %arg7[%c0_64, %c0_65] : memref<1x96xf32, #tpu.memory_space<vmem>>, vector<1x96xf32>
    %77 = vector.broadcast %76 : vector<1x96xf32> to vector<8x96xf32>
    %78 = arith.addf %75, %77 : vector<8x96xf32>
    %cst_66 = arith.constant 0.000000e+00 : f32
    %79 = vector.broadcast %cst_66 : f32 to vector<8x96xf32>
    %80 = arith.maximumf %78, %79 : vector<8x96xf32>
    %c0_67 = arith.constant 0 : index
    %c0_68 = arith.constant 0 : index
    %c0_69 = arith.constant 0 : index
    %81 = vector.load %arg8[%c0_67, %c0_68, %c0_69] : memref<2x4x8xf32, #tpu.memory_space<vmem>>, vector<1x4x8xf32>
    %82 = vector.shape_cast %81 : vector<1x4x8xf32> to vector<4x8xf32>
    %cst_70 = arith.constant dense<0.000000e+00> : vector<4x96xf32>
    %83 = tpu.matmul %82, %80, %cst_70 {dimension_numbers = #tpu.dot_dimension_numbers<[1], [0], [0], [1], [0, 0, 1, 1], [], []>} : vector<4x8xf32>, vector<8x96xf32>, vector<4x96xf32> -> vector<4x96xf32>
    %c1_71 = arith.constant 1 : index
    %c0_72 = arith.constant 0 : index
    %c0_73 = arith.constant 0 : index
    %84 = vector.load %arg8[%c1_71, %c0_72, %c0_73] : memref<2x4x8xf32, #tpu.memory_space<vmem>>, vector<1x4x8xf32>
    %85 = vector.shape_cast %84 : vector<1x4x8xf32> to vector<4x8xf32>
    %cst_74 = arith.constant dense<0.000000e+00> : vector<4x96xf32>
    %86 = tpu.matmul %85, %80, %cst_74 {dimension_numbers = #tpu.dot_dimension_numbers<[1], [0], [0], [1], [0, 0, 1, 1], [], []>} : vector<4x8xf32>, vector<8x96xf32>, vector<4x96xf32> -> vector<4x96xf32>
    %c0_75 = arith.constant 0 : index
    %c0_76 = arith.constant 0 : index
    %c0_77 = arith.constant 0 : index
    %87 = vector.load %arg9[%c0_75, %c0_76, %c0_77] : memref<2x96x48xf32, #tpu.memory_space<vmem>>, vector<1x96x48xf32>
    %88 = vector.shape_cast %87 : vector<1x96x48xf32> to vector<96x48xf32>
    %cst_78 = arith.constant dense<0.000000e+00> : vector<4x48xf32>
    %89 = tpu.matmul %83, %88, %cst_78 {dimension_numbers = #tpu.dot_dimension_numbers<[1], [0], [0], [1], [0, 0, 1, 1], [], []>} : vector<4x96xf32>, vector<96x48xf32>, vector<4x48xf32> -> vector<4x48xf32>
    %c1_79 = arith.constant 1 : index
    %c0_80 = arith.constant 0 : index
    %c0_81 = arith.constant 0 : index
    %90 = vector.load %arg9[%c1_79, %c0_80, %c0_81] : memref<2x96x48xf32, #tpu.memory_space<vmem>>, vector<1x96x48xf32>
    %91 = vector.shape_cast %90 : vector<1x96x48xf32> to vector<96x48xf32>
    %cst_82 = arith.constant dense<0.000000e+00> : vector<4x48xf32>
    %92 = tpu.matmul %83, %91, %cst_82 {dimension_numbers = #tpu.dot_dimension_numbers<[1], [0], [0], [1], [0, 0, 1, 1], [], []>} : vector<4x96xf32>, vector<96x48xf32>, vector<4x48xf32> -> vector<4x48xf32>
    %93 = arith.maximumf %89, %92 : vector<4x48xf32>
    %c0_83 = arith.constant 0 : index
    %c0_84 = arith.constant 0 : index
    %c0_85 = arith.constant 0 : index
    %94 = vector.load %arg9[%c0_83, %c0_84, %c0_85] : memref<2x96x48xf32, #tpu.memory_space<vmem>>, vector<1x96x48xf32>
    %95 = vector.shape_cast %94 : vector<1x96x48xf32> to vector<96x48xf32>
    %cst_86 = arith.constant dense<0.000000e+00> : vector<4x48xf32>
    %96 = tpu.matmul %86, %95, %cst_86 {dimension_numbers = #tpu.dot_dimension_numbers<[1], [0], [0], [1], [0, 0, 1, 1], [], []>} : vector<4x96xf32>, vector<96x48xf32>, vector<4x48xf32> -> vector<4x48xf32>
    %c1_87 = arith.constant 1 : index
    %c0_88 = arith.constant 0 : index
    %c0_89 = arith.constant 0 : index
    %97 = vector.load %arg9[%c1_87, %c0_88, %c0_89] : memref<2x96x48xf32, #tpu.memory_space<vmem>>, vector<1x96x48xf32>
    %98 = vector.shape_cast %97 : vector<1x96x48xf32> to vector<96x48xf32>
    %cst_90 = arith.constant dense<0.000000e+00> : vector<4x48xf32>
    %99 = tpu.matmul %86, %98, %cst_90 {dimension_numbers = #tpu.dot_dimension_numbers<[1], [0], [0], [1], [0, 0, 1, 1], [], []>} : vector<4x96xf32>, vector<96x48xf32>, vector<4x48xf32> -> vector<4x48xf32>
    %100 = arith.maximumf %96, %99 : vector<4x48xf32>
    %101 = arith.maximumf %93, %100 : vector<4x48xf32>
    %c0_91 = arith.constant 0 : index
    %c0_92 = arith.constant 0 : index
    %102 = vector.load %arg11[%c0_91, %c0_92] : memref<1x120xf32, #tpu.memory_space<vmem>>, vector<1x120xf32>
    %103 = vector.extract_strided_slice %101 {offsets = [0, 0], sizes = [1, 48], strides = [1, 1]} : vector<4x48xf32> to vector<1x48xf32>
    %c0_93 = arith.constant 0 : index
    %c0_94 = arith.constant 0 : index
    %c0_95 = arith.constant 0 : index
    %104 = vector.load %arg10[%c0_93, %c0_94, %c0_95] : memref<4x48x120xf32, #tpu.memory_space<vmem>>, vector<1x48x120xf32>
    %105 = vector.shape_cast %104 : vector<1x48x120xf32> to vector<48x120xf32>
    %cst_96 = arith.constant dense<0.000000e+00> : vector<1x120xf32>
    %106 = tpu.matmul %103, %105, %cst_96 {dimension_numbers = #tpu.dot_dimension_numbers<[1], [0], [0], [1], [0, 0, 1, 1], [], []>} : vector<1x48xf32>, vector<48x120xf32>, vector<1x120xf32> -> vector<1x120xf32>
    %107 = arith.addf %102, %106 : vector<1x120xf32>
    %108 = vector.extract_strided_slice %101 {offsets = [1, 0], sizes = [1, 48], strides = [1, 1]} : vector<4x48xf32> to vector<1x48xf32>
    %c1_97 = arith.constant 1 : index
    %c0_98 = arith.constant 0 : index
    %c0_99 = arith.constant 0 : index
    %109 = vector.load %arg10[%c1_97, %c0_98, %c0_99] : memref<4x48x120xf32, #tpu.memory_space<vmem>>, vector<1x48x120xf32>
    %110 = vector.shape_cast %109 : vector<1x48x120xf32> to vector<48x120xf32>
    %cst_100 = arith.constant dense<0.000000e+00> : vector<1x120xf32>
    %111 = tpu.matmul %108, %110, %cst_100 {dimension_numbers = #tpu.dot_dimension_numbers<[1], [0], [0], [1], [0, 0, 1, 1], [], []>} : vector<1x48xf32>, vector<48x120xf32>, vector<1x120xf32> -> vector<1x120xf32>
    %112 = arith.addf %107, %111 : vector<1x120xf32>
    %113 = vector.extract_strided_slice %101 {offsets = [2, 0], sizes = [1, 48], strides = [1, 1]} : vector<4x48xf32> to vector<1x48xf32>
    %c2_101 = arith.constant 2 : index
    %c0_102 = arith.constant 0 : index
    %c0_103 = arith.constant 0 : index
    %114 = vector.load %arg10[%c2_101, %c0_102, %c0_103] : memref<4x48x120xf32, #tpu.memory_space<vmem>>, vector<1x48x120xf32>
    %115 = vector.shape_cast %114 : vector<1x48x120xf32> to vector<48x120xf32>
    %cst_104 = arith.constant dense<0.000000e+00> : vector<1x120xf32>
    %116 = tpu.matmul %113, %115, %cst_104 {dimension_numbers = #tpu.dot_dimension_numbers<[1], [0], [0], [1], [0, 0, 1, 1], [], []>} : vector<1x48xf32>, vector<48x120xf32>, vector<1x120xf32> -> vector<1x120xf32>
    %117 = arith.addf %112, %116 : vector<1x120xf32>
    %118 = vector.extract_strided_slice %101 {offsets = [3, 0], sizes = [1, 48], strides = [1, 1]} : vector<4x48xf32> to vector<1x48xf32>
    %c3_105 = arith.constant 3 : index
    %c0_106 = arith.constant 0 : index
    %c0_107 = arith.constant 0 : index
    %119 = vector.load %arg10[%c3_105, %c0_106, %c0_107] : memref<4x48x120xf32, #tpu.memory_space<vmem>>, vector<1x48x120xf32>
    %120 = vector.shape_cast %119 : vector<1x48x120xf32> to vector<48x120xf32>
    %cst_108 = arith.constant dense<0.000000e+00> : vector<1x120xf32>
    %121 = tpu.matmul %118, %120, %cst_108 {dimension_numbers = #tpu.dot_dimension_numbers<[1], [0], [0], [1], [0, 0, 1, 1], [], []>} : vector<1x48xf32>, vector<48x120xf32>, vector<1x120xf32> -> vector<1x120xf32>
    %122 = arith.addf %117, %121 : vector<1x120xf32>
    %cst_109 = arith.constant 0.000000e+00 : f32
    %123 = vector.broadcast %cst_109 : f32 to vector<1x120xf32>
    %124 = arith.maximumf %122, %123 : vector<1x120xf32>
    %c0_110 = arith.constant 0 : index
    %c0_111 = arith.constant 0 : index
    %125 = vector.load %arg12[%c0_110, %c0_111] : memref<120x60xf32, #tpu.memory_space<vmem>>, vector<120x60xf32>
    %cst_112 = arith.constant dense<0.000000e+00> : vector<1x60xf32>
    %126 = tpu.matmul %124, %125, %cst_112 {dimension_numbers = #tpu.dot_dimension_numbers<[1], [0], [0], [1], [0, 0, 1, 1], [], []>} : vector<1x120xf32>, vector<120x60xf32>, vector<1x60xf32> -> vector<1x60xf32>
    %c0_113 = arith.constant 0 : index
    %c0_114 = arith.constant 0 : index
    %127 = vector.load %arg13[%c0_113, %c0_114] : memref<1x60xf32, #tpu.memory_space<vmem>>, vector<1x60xf32>
    %128 = arith.addf %126, %127 : vector<1x60xf32>
    %cst_115 = arith.constant 0.000000e+00 : f32
    %129 = vector.broadcast %cst_115 : f32 to vector<1x60xf32>
    %130 = arith.maximumf %128, %129 : vector<1x60xf32>
    %c0_116 = arith.constant 0 : index
    %c0_117 = arith.constant 0 : index
    %131 = vector.load %arg14[%c0_116, %c0_117] : memref<60x10xf32, #tpu.memory_space<vmem>>, vector<60x10xf32>
    %cst_118 = arith.constant dense<0.000000e+00> : vector<1x10xf32>
    %132 = tpu.matmul %130, %131, %cst_118 {dimension_numbers = #tpu.dot_dimension_numbers<[1], [0], [0], [1], [0, 0, 1, 1], [], []>} : vector<1x60xf32>, vector<60x10xf32>, vector<1x10xf32> -> vector<1x10xf32>
    %c0_119 = arith.constant 0 : index
    %c0_120 = arith.constant 0 : index
    %133 = vector.load %arg15[%c0_119, %c0_120] : memref<1x10xf32, #tpu.memory_space<vmem>>, vector<1x10xf32>
    %134 = arith.addf %132, %133 : vector<1x10xf32>
    %c0_121 = arith.constant 0 : index
    %c0_122 = arith.constant 0 : index
    %c0_123 = arith.constant 0 : index
    %135 = vector.load %arg16[%c0_121, %c0_122, %c0_123] : memref<1x1x10xf32, #tpu.memory_space<vmem>>, vector<1x1x10xf32>
    %136 = vector.shape_cast %135 : vector<1x1x10xf32> to vector<1x10xf32>
    %137 = vector.shape_cast %134 : vector<1x10xf32> to vector<1x1x10xf32>
    tpu.vector_store %arg16[%c0_121, %c0_122, %c0_123], %137 {strides = array<i32>} : memref<1x1x10xf32, #tpu.memory_space<vmem>>, vector<1x1x10xf32>,
    return
  }
  func.func @transform_0(%arg0: i32) -> (i32, i32, i32) {
    %c0_i32 = arith.constant 0 : i32
    %c0_i32_0 = arith.constant 0 : i32
    %c0_i32_1 = arith.constant 0 : i32
    return %arg0, %c0_i32, %c0_i32_0 : i32, i32, i32
  }
  func.func @transform_1(%arg0: i32) -> (i32, i32, i32) {
    %c0_i32 = arith.constant 0 : i32
    %c0_i32_0 = arith.constant 0 : i32
    %c0_i32_1 = arith.constant 0 : i32
    %c0_i32_2 = arith.constant 0 : i32
    return %c0_i32, %c0_i32_0, %c0_i32_1 : i32, i32, i32
  }
  func.func @transform_2(%arg0: i32) -> (i32, i32) {
    %c0_i32 = arith.constant 0 : i32
    %c0_i32_0 = arith.constant 0 : i32
    %c0_i32_1 = arith.constant 0 : i32
    return %c0_i32, %c0_i32_0 : i32, i32
  }
  func.func @transform_3(%arg0: i32) -> (i32, i32, i32) {
    %c0_i32 = arith.constant 0 : i32
    %c0_i32_0 = arith.constant 0 : i32
    %c0_i32_1 = arith.constant 0 : i32
    %c0_i32_2 = arith.constant 0 : i32
    return %c0_i32, %c0_i32_0, %c0_i32_1 : i32, i32, i32
  }
  func.func @transform_4(%arg0: i32) -> (i32, i32, i32) {
    %c0_i32 = arith.constant 0 : i32
    %c0_i32_0 = arith.constant 0 : i32
    %c0_i32_1 = arith.constant 0 : i32
    %c0_i32_2 = arith.constant 0 : i32
    return %c0_i32, %c0_i32_0, %c0_i32_1 : i32, i32, i32
  }
  func.func @transform_5(%arg0: i32) -> (i32, i32, i32) {
    %c0_i32 = arith.constant 0 : i32
    %c0_i32_0 = arith.constant 0 : i32
    %c0_i32_1 = arith.constant 0 : i32
    %c0_i32_2 = arith.constant 0 : i32
    return %c0_i32, %c0_i32_0, %c0_i32_1 : i32, i32, i32
  }
  func.func @transform_6(%arg0: i32) -> (i32, i32) {
    %c0_i32 = arith.constant 0 : i32
    %c0_i32_0 = arith.constant 0 : i32
    %c0_i32_1 = arith.constant 0 : i32
    return %c0_i32, %c0_i32_0 : i32, i32
  }
  func.func @transform_7(%arg0: i32) -> (i32, i32, i32) {
    %c0_i32 = arith.constant 0 : i32
    %c0_i32_0 = arith.constant 0 : i32
    %c0_i32_1 = arith.constant 0 : i32
    %c0_i32_2 = arith.constant 0 : i32
    return %c0_i32, %c0_i32_0, %c0_i32_1 : i32, i32, i32
  }
  func.func @transform_8(%arg0: i32) -> (i32, i32, i32) {
    %c0_i32 = arith.constant 0 : i32
    %c0_i32_0 = arith.constant 0 : i32
    %c0_i32_1 = arith.constant 0 : i32
    %c0_i32_2 = arith.constant 0 : i32
    return %c0_i32, %c0_i32_0, %c0_i32_1 : i32, i32, i32
  }
  func.func @transform_9(%arg0: i32) -> (i32, i32, i32) {
    %c0_i32 = arith.constant 0 : i32
    %c0_i32_0 = arith.constant 0 : i32
    %c0_i32_1 = arith.constant 0 : i32
    %c0_i32_2 = arith.constant 0 : i32
    return %c0_i32, %c0_i32_0, %c0_i32_1 : i32, i32, i32
  }
  func.func @transform_10(%arg0: i32) -> (i32, i32) {
    %c0_i32 = arith.constant 0 : i32
    %c0_i32_0 = arith.constant 0 : i32
    %c0_i32_1 = arith.constant 0 : i32
    return %c0_i32, %c0_i32_0 : i32, i32
  }
  func.func @transform_11(%arg0: i32) -> (i32, i32) {
    %c0_i32 = arith.constant 0 : i32
    %c0_i32_0 = arith.constant 0 : i32
    %c0_i32_1 = arith.constant 0 : i32
    return %c0_i32, %c0_i32_0 : i32, i32
  }
  func.func @transform_12(%arg0: i32) -> (i32, i32) {
    %c0_i32 = arith.constant 0 : i32
    %c0_i32_0 = arith.constant 0 : i32
    %c0_i32_1 = arith.constant 0 : i32
    return %c0_i32, %c0_i32_0 : i32, i32
  }
  func.func @transform_13(%arg0: i32) -> (i32, i32) {
    %c0_i32 = arith.constant 0 : i32
    %c0_i32_0 = arith.constant 0 : i32
    %c0_i32_1 = arith.constant 0 : i32
    return %c0_i32, %c0_i32_0 : i32, i32
  }
  func.func @transform_14(%arg0: i32) -> (i32, i32) {
    %c0_i32 = arith.constant 0 : i32
    %c0_i32_0 = arith.constant 0 : i32
    %c0_i32_1 = arith.constant 0 : i32
    return %c0_i32, %c0_i32_0 : i32, i32
  }
  func.func @transform_15(%arg0: i32) -> (i32, i32, i32) {
    %c0_i32 = arith.constant 0 : i32
    %c0_i32_0 = arith.constant 0 : i32
    %c0_i32_1 = arith.constant 0 : i32
    return %arg0, %c0_i32, %c0_i32_0 : i32, i32, i32
  }
}

</mosaic_0001>

<llo_original>
// kernel: network_forward.1
$region0: #{network_forward.1}
  #allocation0 [shape = 'u32[]', space=smem, size = 0x4, offset = 0x4, fixed_abs, tag = 'smem constant byte address 0x4 - core index']
  #allocation1 [shape = 'u32[144,128]{1,0:T(1,128)}', space=vmem, size = 0x12000, scoped, tag = 'internal scratch']
  %s0 = inlined_call_operand.vmem [shape: f32[2,28,28], index: 0, kind: input, shape index: {}]
  %s1 = inlined_call_operand.vmem [shape: f32[5,28,144], index: 1, kind: input, shape index: {}]
  %s2 = inlined_call_operand.hbm [shape: f32[1,144], index: 2, kind: input, shape index: {}]
  %s3 = inlined_call_operand.vmem [shape: f32[2,12,24], index: 3, kind: input, shape index: {}]
  %s4 = inlined_call_operand.hbm [shape: f32[2,144,72], index: 4, kind: input, shape index: {}]
  %s5 = inlined_call_operand.vmem [shape: f32[5,72,96], index: 5, kind: input, shape index: {}]
  %s6 = inlined_call_operand.vmem [shape: f32[1,96], index: 6, kind: input, shape index: {}]
  %s7 = inlined_call_operand.hbm [shape: f32[2,4,8], index: 7, kind: input, shape index: {}]
  %s8 = inlined_call_operand.vmem [shape: f32[2,96,48], index: 8, kind: input, shape index: {}]
  %s9 = inlined_call_operand.vmem [shape: f32[4,48,120], index: 9, kind: input, shape index: {}]
  %s10 = inlined_call_operand.hbm [shape: f32[1,120], index: 10, kind: input, shape index: {}]
  %s11 = inlined_call_operand.vmem [shape: f32[120,60], index: 11, kind: input, shape index: {}]
  %s12 = inlined_call_operand.hbm [shape: f32[1,60], index: 12, kind: input, shape index: {}]
  %s13 = inlined_call_operand.vmem [shape: f32[60,10], index: 13, kind: input, shape index: {}]
  %s14 = inlined_call_operand.hbm [shape: f32[1,10], index: 14, kind: input, shape index: {}]
  %s15 = inlined_call_operand.hbm [shape: f32[2,1,10], index: 15, kind: output, shape index: {}]
  %s16 = sld [smem:[#allocation0]]
  $region117: #{network_forward.1} parent=0
    _
  %s18 = ssub.s32 1, %s16
  %s19 = scalar_select 0, %s18, %s16
  $region1: #{network_forward.1} parent=0
    #allocation2 [shape = 'u8[1024]{0}', space=vmem, size = 0x400, scoped, tag = 'input window, operand 2, single buffered']
    #allocation3 [shape = 's32[2]{0}', space=sflag, size = 0x8, scoped, tag = 'scoped memory for network_forward.1']
    #allocation4 [shape = 's32[2]{0}', space=sflag, size = 0x8, scoped, tag = 'scoped memory for network_forward.1']
    #allocation5 [shape = 'u8[147456]{0}', space=vmem, size = 0x24000, scoped, tag = 'input window, operand 4, single buffered']
    #allocation6 [shape = 's32[1]{0}', space=sflag, size = 0x4, scoped, tag = 'scoped memory for network_forward.1']
    #allocation7 [shape = 'u8[4096]{0}', space=vmem, size = 0x1000, scoped, tag = 'input window, operand 7, single buffered']
    #allocation8 [shape = 'u8[512]{0}', space=vmem, size = 0x400, scoped, tag = 'input window, operand 10, single buffered']
    #allocation9 [shape = 's32[1]{0}', space=sflag, size = 0x4, scoped, tag = 'scoped memory for network_forward.1']
    #allocation10 [shape = 'u8[512]{0}', space=vmem, size = 0x400, scoped, tag = 'input window, operand 12, single buffered']
    #allocation11 [shape = 'u8[512]{0}', space=vmem, size = 0x400, scoped, tag = 'input window, operand 14, single buffered']
    #allocation12 [shape = 's32[1]{0}', space=sflag, size = 0x4, scoped, tag = 'scoped memory for network_forward.1']
    #allocation13 [shape = 'u8[1024]{0}', space=vmem, size = 0x400, scoped, tag = 'output window, operand 0']
    %20 = vsyncpa [#allocation3], 0
    %21 = vsyncpa [#allocation6], 0
    %22 = vsyncpa [#allocation9], 0
    %23 = vsyncpa [#allocation12], 0
    %24 = vsyncpa [#allocation4], 0
    %s25 = scalar_lea.sflag [#allocation4], 1
    %26 = vsyncpa %s25, 0
    loop: start=0, step=1, limit=4
    $region2: #{network_forward.1} parent=1 // loop_pre_header
      _
    $region3: #{network_forward.1} parent=1 // loop_header
      %s28 = sphi 0, %s32
      %p29 = scmp.ge.s32.totalorder %s28, 4
      %s38 = sphi 0, %s40
      %s41 = sphi 0, %s38
      %s42 = sphi 0, %s41
      %s58 = sphi 0, %s42
      %s62 = sphi 0, %s62
      %s64 = sphi 0, %s62
      %s65 = sphi 0, %s64
      %s79 = sphi 0, %s65
      %s83 = sphi 0, %s83
      %s85 = sphi 0, %s83
      %s86 = sphi 0, %s85
      %s100 = sphi 0, %s86
      %s104 = sphi 0, %s104
      %s106 = sphi 0, %s104
      %s107 = sphi 0, %s106
      %s121 = sphi 0, %s107
      %s125 = sphi 0, %s125
      %s127 = sphi 0, %s125
      %s128 = sphi 0, %s127
      %s142 = sphi 0, %s128
      %s146 = sphi 0, %s146
      %s148 = sphi 0, %s146
      %s149 = sphi 0, %s148
      %s163 = sphi 0, %s149
      %s167 = sphi 0, %s167
      %s169 = sphi 0, %s167
      %s170 = sphi 0, %s169
      %s184 = sphi 0, %s170
      %s188 = sphi 0, %s188
      %s190 = sphi 0, %s188
      %s191 = sphi 0, %s190
      %s205 = sphi 0, %s191
      %s209 = sphi 0, %s209
      %s211 = sphi 0, %s209
      %s212 = sphi 0, %s211
      %s226 = sphi 0, %s212
      %s230 = sphi 0, %s230
      %s232 = sphi 0, %s230
      %s233 = sphi 0, %s232
      %s247 = sphi 0, %s233
      %s251 = sphi 0, %s251
      %s253 = sphi 0, %s251
      %s254 = sphi 0, %s253
      %s268 = sphi 0, %s254
      %s272 = sphi 0, %s272
      %s274 = sphi 0, %s272
      %s275 = sphi 0, %s274
      %s289 = sphi 0, %s275
      %s293 = sphi 0, %s293
      %s295 = sphi 0, %s293
      %s296 = sphi 0, %s295
      %s310 = sphi 0, %s296
      %s314 = sphi 0, %s314
      %s316 = sphi 0, %s314
      %s317 = sphi 0, %s316
      %s331 = sphi 0, %s317
      %s335 = sphi 0, %s335
      %s337 = sphi 0, %s335
      %s338 = sphi 0, %s337
      %s352 = sphi 0, %s338
      %s358 = sphi 0, %s360
      %s361 = sphi 0, %s358
      %s362 = sphi 0, %s361
      %s378 = sphi 0, %s362
    $region4: #{network_forward.1} parent=1 // loop_header_branch
      %31 = sbr.rel (%p29) target = $region8
    $region5: #{network_forward.1} parent=1 // loop_body
      %s33 = ssub.s32 %s28, 1
      %s34 = ssub.s32 %s28, 2
      %s35 = sadd.s32 %s28, 1
      %s36 = ssub.s32 %s28, %s35
      %p37 = scmp.eq.s32.totalorder %s36, 0
      %s39 = sadd.s32 %s38, 1
      %s40 = scalar_select %p37, %s38, %s39
      %p43 = pneg %p37
      %p44 = scmp.eq.s32.totalorder %s28, 1
      %p45 = por %p43, %p44
      %p46 = scmp.ne.s32.totalorder %s38, %s41
      %p47 = scmp.eq.s32.totalorder %s28, 0
      %p48 = por %p46, %p47
      %p49 = scmp.ne.s32.totalorder %s38, %s41
      %p50 = scmp.eq.s32.totalorder %s33, 1
      %p51 = por %p49, %p50
      %p52 = scmp.ne.s32.totalorder %s41, %s42
      %p53 = scmp.eq.s32.totalorder %s33, 0
      %p54 = por %p52, %p53
      %p55 = scmp.ne.s32.totalorder %s41, %s42
      %p56 = scmp.eq.s32.totalorder %s34, 1
      %p57 = por %p55, %p56
      %p59 = scmp.ne.s32.totalorder %s42, %s58
      %p60 = scmp.eq.s32.totalorder %s34, 0
      %p61 = por %p59, %p60
      %s63 = sadd.s32 %s62, 1
      %p66 = scmp.eq.s32.totalorder %s28, 1
      %p67 = scmp.ne.s32.totalorder %s62, %s64
      %p68 = scmp.eq.s32.totalorder %s28, 0
      %p69 = por %p67, %p68
      %p70 = scmp.ne.s32.totalorder %s62, %s64
      %p71 = scmp.eq.s32.totalorder %s33, 1
      %p72 = por %p70, %p71
      %p73 = scmp.ne.s32.totalorder %s64, %s65
      %p74 = scmp.eq.s32.totalorder %s33, 0
      %p75 = por %p73, %p74
      %p76 = scmp.ne.s32.totalorder %s64, %s65
      %p77 = scmp.eq.s32.totalorder %s34, 1
      %p78 = por %p76, %p77
      %p80 = scmp.ne.s32.totalorder %s65, %s79
      %p81 = scmp.eq.s32.totalorder %s34, 0
      %p82 = por %p80, %p81
      %s84 = sadd.s32 %s83, 1
      %p87 = scmp.eq.s32.totalorder %s28, 1
      %p88 = scmp.ne.s32.totalorder %s83, %s85
      %p89 = scmp.eq.s32.totalorder %s28, 0
      %p90 = por %p88, %p89
      %p91 = scmp.ne.s32.totalorder %s83, %s85
      %p92 = scmp.eq.s32.totalorder %s33, 1
      %p93 = por %p91, %p92
      %p94 = scmp.ne.s32.totalorder %s85, %s86
      %p95 = scmp.eq.s32.totalorder %s33, 0
      %p96 = por %p94, %p95
      %p97 = scmp.ne.s32.totalorder %s85, %s86
      %p98 = scmp.eq.s32.totalorder %s34, 1
      %p99 = por %p97, %p98
      %p101 = scmp.ne.s32.totalorder %s86, %s100
      %p102 = scmp.eq.s32.totalorder %s34, 0
      %p103 = por %p101, %p102
      %s105 = sadd.s32 %s104, 1
      %p108 = scmp.eq.s32.totalorder %s28, 1
      %p109 = scmp.ne.s32.totalorder %s104, %s106
      %p110 = scmp.eq.s32.totalorder %s28, 0
      %p111 = por %p109, %p110
      %p112 = scmp.ne.s32.totalorder %s104, %s106
      %p113 = scmp.eq.s32.totalorder %s33, 1
      %p114 = por %p112, %p113
      %p115 = scmp.ne.s32.totalorder %s106, %s107
      %p116 = scmp.eq.s32.totalorder %s33, 0
      %p117 = por %p115, %p116
      %p118 = scmp.ne.s32.totalorder %s106, %s107
      %p119 = scmp.eq.s32.totalorder %s34, 1
      %p120 = por %p118, %p119
      %p122 = scmp.ne.s32.totalorder %s107, %s121
      %p123 = scmp.eq.s32.totalorder %s34, 0
      %p124 = por %p122, %p123
      %s126 = sadd.s32 %s125, 1
      %p129 = scmp.eq.s32.totalorder %s28, 1
      %p130 = scmp.ne.s32.totalorder %s125, %s127
      %p131 = scmp.eq.s32.totalorder %s28, 0
      %p132 = por %p130, %p131
      %p133 = scmp.ne.s32.totalorder %s125, %s127
      %p134 = scmp.eq.s32.totalorder %s33, 1
      %p135 = por %p133, %p134
      %p136 = scmp.ne.s32.totalorder %s127, %s128
      %p137 = scmp.eq.s32.totalorder %s33, 0
      %p138 = por %p136, %p137
      %p139 = scmp.ne.s32.totalorder %s127, %s128
      %p140 = scmp.eq.s32.totalorder %s34, 1
      %p141 = por %p139, %p140
      %p143 = scmp.ne.s32.totalorder %s128, %s142
      %p144 = scmp.eq.s32.totalorder %s34, 0
      %p145 = por %p143, %p144
      %s147 = sadd.s32 %s146, 1
      %p150 = scmp.eq.s32.totalorder %s28, 1
      %p151 = scmp.ne.s32.totalorder %s146, %s148
      %p152 = scmp.eq.s32.totalorder %s28, 0
      %p153 = por %p151, %p152
      %p154 = scmp.ne.s32.totalorder %s146, %s148
      %p155 = scmp.eq.s32.totalorder %s33, 1
      %p156 = por %p154, %p155
      %p157 = scmp.ne.s32.totalorder %s148, %s149
      %p158 = scmp.eq.s32.totalorder %s33, 0
      %p159 = por %p157, %p158
      %p160 = scmp.ne.s32.totalorder %s148, %s149
      %p161 = scmp.eq.s32.totalorder %s34, 1
      %p162 = por %p160, %p161
      %p164 = scmp.ne.s32.totalorder %s149, %s163
      %p165 = scmp.eq.s32.totalorder %s34, 0
      %p166 = por %p164, %p165
      %s168 = sadd.s32 %s167, 1
      %p171 = scmp.eq.s32.totalorder %s28, 1
      %p172 = scmp.ne.s32.totalorder %s167, %s169
      %p173 = scmp.eq.s32.totalorder %s28, 0
      %p174 = por %p172, %p173
      %p175 = scmp.ne.s32.totalorder %s167, %s169
      %p176 = scmp.eq.s32.totalorder %s33, 1
      %p177 = por %p175, %p176
      %p178 = scmp.ne.s32.totalorder %s169, %s170
      %p179 = scmp.eq.s32.totalorder %s33, 0
      %p180 = por %p178, %p179
      %p181 = scmp.ne.s32.totalorder %s169, %s170
      %p182 = scmp.eq.s32.totalorder %s34, 1
      %p183 = por %p181, %p182
      %p185 = scmp.ne.s32.totalorder %s170, %s184
      %p186 = scmp.eq.s32.totalorder %s34, 0
      %p187 = por %p185, %p186
      %s189 = sadd.s32 %s188, 1
      %p192 = scmp.eq.s32.totalorder %s28, 1
      %p193 = scmp.ne.s32.totalorder %s188, %s190
      %p194 = scmp.eq.s32.totalorder %s28, 0
      %p195 = por %p193, %p194
      %p196 = scmp.ne.s32.totalorder %s188, %s190
      %p197 = scmp.eq.s32.totalorder %s33, 1
      %p198 = por %p196, %p197
      %p199 = scmp.ne.s32.totalorder %s190, %s191
      %p200 = scmp.eq.s32.totalorder %s33, 0
      %p201 = por %p199, %p200
      %p202 = scmp.ne.s32.totalorder %s190, %s191
      %p203 = scmp.eq.s32.totalorder %s34, 1
      %p204 = por %p202, %p203
      %p206 = scmp.ne.s32.totalorder %s191, %s205
      %p207 = scmp.eq.s32.totalorder %s34, 0
      %p208 = por %p206, %p207
      %s210 = sadd.s32 %s209, 1
      %p213 = scmp.eq.s32.totalorder %s28, 1
      %p214 = scmp.ne.s32.totalorder %s209, %s211
      %p215 = scmp.eq.s32.totalorder %s28, 0
      %p216 = por %p214, %p215
      %p217 = scmp.ne.s32.totalorder %s209, %s211
      %p218 = scmp.eq.s32.totalorder %s33, 1
      %p219 = por %p217, %p218
      %p220 = scmp.ne.s32.totalorder %s211, %s212
      %p221 = scmp.eq.s32.totalorder %s33, 0
      %p222 = por %p220, %p221
      %p223 = scmp.ne.s32.totalorder %s211, %s212
      %p224 = scmp.eq.s32.totalorder %s34, 1
      %p225 = por %p223, %p224
      %p227 = scmp.ne.s32.totalorder %s212, %s226
      %p228 = scmp.eq.s32.totalorder %s34, 0
      %p229 = por %p227, %p228
      %s231 = sadd.s32 %s230, 1
      %p234 = scmp.eq.s32.totalorder %s28, 1
      %p235 = scmp.ne.s32.totalorder %s230, %s232
      %p236 = scmp.eq.s32.totalorder %s28, 0
      %p237 = por %p235, %p236
      %p238 = scmp.ne.s32.totalorder %s230, %s232
      %p239 = scmp.eq.s32.totalorder %s33, 1
      %p240 = por %p238, %p239
      %p241 = scmp.ne.s32.totalorder %s232, %s233
      %p242 = scmp.eq.s32.totalorder %s33, 0
      %p243 = por %p241, %p242
      %p244 = scmp.ne.s32.totalorder %s232, %s233
      %p245 = scmp.eq.s32.totalorder %s34, 1
      %p246 = por %p244, %p245
      %p248 = scmp.ne.s32.totalorder %s233, %s247
      %p249 = scmp.eq.s32.totalorder %s34, 0
      %p250 = por %p248, %p249
      %s252 = sadd.s32 %s251, 1
      %p255 = scmp.eq.s32.totalorder %s28, 1
      %p256 = scmp.ne.s32.totalorder %s251, %s253
      %p257 = scmp.eq.s32.totalorder %s28, 0
      %p258 = por %p256, %p257
      %p259 = scmp.ne.s32.totalorder %s251, %s253
      %p260 = scmp.eq.s32.totalorder %s33, 1
      %p261 = por %p259, %p260
      %p262 = scmp.ne.s32.totalorder %s253, %s254
      %p263 = scmp.eq.s32.totalorder %s33, 0
      %p264 = por %p262, %p263
      %p265 = scmp.ne.s32.totalorder %s253, %s254
      %p266 = scmp.eq.s32.totalorder %s34, 1
      %p267 = por %p265, %p266
      %p269 = scmp.ne.s32.totalorder %s254, %s268
      %p270 = scmp.eq.s32.totalorder %s34, 0
      %p271 = por %p269, %p270
      %s273 = sadd.s32 %s272, 1
      %p276 = scmp.eq.s32.totalorder %s28, 1
      %p277 = scmp.ne.s32.totalorder %s272, %s274
      %p278 = scmp.eq.s32.totalorder %s28, 0
      %p279 = por %p277, %p278
      %p280 = scmp.ne.s32.totalorder %s272, %s274
      %p281 = scmp.eq.s32.totalorder %s33, 1
      %p282 = por %p280, %p281
      %p283 = scmp.ne.s32.totalorder %s274, %s275
      %p284 = scmp.eq.s32.totalorder %s33, 0
      %p285 = por %p283, %p284
      %p286 = scmp.ne.s32.totalorder %s274, %s275
      %p287 = scmp.eq.s32.totalorder %s34, 1
      %p288 = por %p286, %p287
      %p290 = scmp.ne.s32.totalorder %s275, %s289
      %p291 = scmp.eq.s32.totalorder %s34, 0
      %p292 = por %p290, %p291
      %s294 = sadd.s32 %s293, 1
      %p297 = scmp.eq.s32.totalorder %s28, 1
      %p298 = scmp.ne.s32.totalorder %s293, %s295
      %p299 = scmp.eq.s32.totalorder %s28, 0
      %p300 = por %p298, %p299
      %p301 = scmp.ne.s32.totalorder %s293, %s295
      %p302 = scmp.eq.s32.totalorder %s33, 1
      %p303 = por %p301, %p302
      %p304 = scmp.ne.s32.totalorder %s295, %s296
      %p305 = scmp.eq.s32.totalorder %s33, 0
      %p306 = por %p304, %p305
      %p307 = scmp.ne.s32.totalorder %s295, %s296
      %p308 = scmp.eq.s32.totalorder %s34, 1
      %p309 = por %p307, %p308
      %p311 = scmp.ne.s32.totalorder %s296, %s310
      %p312 = scmp.eq.s32.totalorder %s34, 0
      %p313 = por %p311, %p312
      %s315 = sadd.s32 %s314, 1
      %p318 = scmp.eq.s32.totalorder %s28, 1
      %p319 = scmp.ne.s32.totalorder %s314, %s316
      %p320 = scmp.eq.s32.totalorder %s28, 0
      %p321 = por %p319, %p320
      %p322 = scmp.ne.s32.totalorder %s314, %s316
      %p323 = scmp.eq.s32.totalorder %s33, 1
      %p324 = por %p322, %p323
      %p325 = scmp.ne.s32.totalorder %s316, %s317
      %p326 = scmp.eq.s32.totalorder %s33, 0
      %p327 = por %p325, %p326
      %p328 = scmp.ne.s32.totalorder %s316, %s317
      %p329 = scmp.eq.s32.totalorder %s34, 1
      %p330 = por %p328, %p329
      %p332 = scmp.ne.s32.totalorder %s317, %s331
      %p333 = scmp.eq.s32.totalorder %s34, 0
      %p334 = por %p332, %p333
      %s336 = sadd.s32 %s335, 1
      %p339 = scmp.eq.s32.totalorder %s28, 1
      %p340 = scmp.ne.s32.totalorder %s335, %s337
      %p341 = scmp.eq.s32.totalorder %s28, 0
      %p342 = por %p340, %p341
      %p343 = scmp.ne.s32.totalorder %s335, %s337
      %p344 = scmp.eq.s32.totalorder %s33, 1
      %p345 = por %p343, %p344
      %p346 = scmp.ne.s32.totalorder %s337, %s338
      %p347 = scmp.eq.s32.totalorder %s33, 0
      %p348 = por %p346, %p347
      %p349 = scmp.ne.s32.totalorder %s337, %s338
      %p350 = scmp.eq.s32.totalorder %s34, 1
      %p351 = por %p349, %p350
      %p353 = scmp.ne.s32.totalorder %s338, %s352
      %p354 = scmp.eq.s32.totalorder %s34, 0
      %p355 = por %p353, %p354
      %s356 = ssub.s32 %s28, %s35
      %p357 = scmp.eq.s32.totalorder %s356, 0
      %s359 = sadd.s32 %s358, 1
      %s360 = scalar_select %p357, %s358, %s359
      %p363 = pneg %p357
      %p364 = scmp.eq.s32.totalorder %s28, 1
      %p365 = por %p363, %p364
      %p366 = scmp.ne.s32.totalorder %s358, %s361
      %p367 = scmp.eq.s32.totalorder %s28, 0
      %p368 = por %p366, %p367
      %p369 = scmp.ne.s32.totalorder %s358, %s361
      %p370 = scmp.eq.s32.totalorder %s33, 1
      %p371 = por %p369, %p370
      %p372 = scmp.ne.s32.totalorder %s361, %s362
      %p373 = scmp.eq.s32.totalorder %s33, 0
      %p374 = por %p372, %p373
      %p375 = scmp.ne.s32.totalorder %s361, %s362
      %p376 = scmp.eq.s32.totalorder %s34, 1
      %p377 = por %p375, %p376
      %p379 = scmp.ne.s32.totalorder %s362, %s378
      %p380 = scmp.eq.s32.totalorder %s34, 0
      %p381 = por %p379, %p380
      %p382 = scmp.le.s32.totalorder 1, %s28
      %p383 = scmp.lt.s32.totalorder %s28, 3
      %p384 = pnand %p382, %p383
      %p385 = pneg %p384
      // Predicated region
      $region9: #{network_forward.1} parent=5 // pred_check
        _
      $region10: #{network_forward.1} parent=5 // pred_check_branch
        %387 = sbr.rel (%p384) target = $region12
      $region11: #{network_forward.1} parent=5 // pred_region
        %s388 = ssub.s32 %s28, 1
        // Predicated region
        $region13: #{network_forward.1} parent=11 // pred_check
          %p389 = pneg %p75
        $region14: #{network_forward.1} parent=11 // pred_check_branch
          %391 = sbr.rel (%p389) target = $region16
        $region15: #{network_forward.1} parent=11 // pred_region
          _
        $region16: #{network_forward.1} parent=11 // pred_fallthru
          _
        // Predicated region
        $region17: #{network_forward.1} parent=11 // pred_check
          %p392 = pneg %p96
        $region18: #{network_forward.1} parent=11 // pred_check_branch
          %394 = sbr.rel (%p392) target = $region20
        $region19: #{network_forward.1} parent=11 // pred_region
          %s396 = ssub.s32 32, 32
          %397 = vsyncadd [#allocation3], %s396
          %s399 = sshll.u32 [#allocation2], 4
          %s400 = int_to_ptr.vmem [resolvable:$true] %s399
          %402 = dma.hbm_to_vmem [thread:$0]  %s2, 32, %s400, [#allocation3]
        $region20: #{network_forward.1} parent=11 // pred_fallthru
          _
        // Predicated region
        $region21: #{network_forward.1} parent=11 // pred_check
          %p403 = pneg %p117
        $region22: #{network_forward.1} parent=11 // pred_check_branch
          %405 = sbr.rel (%p403) target = $region24
        $region23: #{network_forward.1} parent=11 // pred_region
          _
        $region24: #{network_forward.1} parent=11 // pred_fallthru
          _
        // Predicated region
        $region25: #{network_forward.1} parent=11 // pred_check
          %p406 = pneg %p138
        $region26: #{network_forward.1} parent=11 // pred_check_branch
          %408 = sbr.rel (%p406) target = $region28
        $region27: #{network_forward.1} parent=11 // pred_region
          %s410 = ssub.s32 4608, 4608
          %411 = vsyncadd [#allocation6], %s410
          %s412 = sshll.u32 [#allocation5], 4
          %s413 = int_to_ptr.vmem [resolvable:$true] %s412
          %418 = dma.hbm_to_vmem [thread:$0]  %s4, 4608, %s413, [#allocation6], 128, 128, 8
        $region28: #{network_forward.1} parent=11 // pred_fallthru
          _
        // Predicated region
        $region29: #{network_forward.1} parent=11 // pred_check
          %p419 = pneg %p159
        $region30: #{network_forward.1} parent=11 // pred_check_branch
          %421 = sbr.rel (%p419) target = $region32
        $region31: #{network_forward.1} parent=11 // pred_region
          _
        $region32: #{network_forward.1} parent=11 // pred_fallthru
          _
        // Predicated region
        $region33: #{network_forward.1} parent=11 // pred_check
          %p422 = pneg %p180
        $region34: #{network_forward.1} parent=11 // pred_check_branch
          %424 = sbr.rel (%p422) target = $region36
        $region35: #{network_forward.1} parent=11 // pred_region
          _
        $region36: #{network_forward.1} parent=11 // pred_fallthru
          _
        // Predicated region
        $region37: #{network_forward.1} parent=11 // pred_check
          %p425 = pneg %p201
        $region38: #{network_forward.1} parent=11 // pred_check_branch
          %427 = sbr.rel (%p425) target = $region40
        $region39: #{network_forward.1} parent=11 // pred_region
          %s429 = ssub.s32 128, 128
          %430 = vsyncadd [#allocation6], %s429
          %s431 = sshll.u32 [#allocation7], 4
          %s432 = int_to_ptr.vmem [resolvable:$true] %s431
          %437 = dma.hbm_to_vmem [thread:$0]  %s7, 128, %s432, [#allocation6], 64, 64, 4
        $region40: #{network_forward.1} parent=11 // pred_fallthru
          _
        // Predicated region
        $region41: #{network_forward.1} parent=11 // pred_check
          %p438 = pneg %p222
        $region42: #{network_forward.1} parent=11 // pred_check_branch
          %440 = sbr.rel (%p438) target = $region44
        $region43: #{network_forward.1} parent=11 // pred_region
          _
        $region44: #{network_forward.1} parent=11 // pred_fallthru
          _
        // Predicated region
        $region45: #{network_forward.1} parent=11 // pred_check
          %p441 = pneg %p243
        $region46: #{network_forward.1} parent=11 // pred_check_branch
          %443 = sbr.rel (%p441) target = $region48
        $region47: #{network_forward.1} parent=11 // pred_region
          _
        $region48: #{network_forward.1} parent=11 // pred_fallthru
          _
        // Predicated region
        $region49: #{network_forward.1} parent=11 // pred_check
          %p444 = pneg %p264
        $region50: #{network_forward.1} parent=11 // pred_check_branch
          %446 = sbr.rel (%p444) target = $region52
        $region51: #{network_forward.1} parent=11 // pred_region
          %s448 = ssub.s32 16, 16
          %449 = vsyncadd [#allocation9], %s448
          %s451 = sshll.u32 [#allocation8], 4
          %s452 = int_to_ptr.vmem [resolvable:$true] %s451
          %454 = dma.hbm_to_vmem [thread:$0]  %s10, 16, %s452, [#allocation9]
        $region52: #{network_forward.1} parent=11 // pred_fallthru
          _
        // Predicated region
        $region53: #{network_forward.1} parent=11 // pred_check
          %p455 = pneg %p285
        $region54: #{network_forward.1} parent=11 // pred_check_branch
          %457 = sbr.rel (%p455) target = $region56
        $region55: #{network_forward.1} parent=11 // pred_region
          _
        $region56: #{network_forward.1} parent=11 // pred_fallthru
          _
        // Predicated region
        $region57: #{network_forward.1} parent=11 // pred_check
          %p458 = pneg %p306
        $region58: #{network_forward.1} parent=11 // pred_check_branch
          %460 = sbr.rel (%p458) target = $region60
        $region59: #{network_forward.1} parent=11 // pred_region
          %s462 = ssub.s32 16, 16
          %463 = vsyncadd [#allocation9], %s462
          %s465 = sshll.u32 [#allocation10], 4
          %s466 = int_to_ptr.vmem [resolvable:$true] %s465
          %468 = dma.hbm_to_vmem [thread:$0]  %s12, 16, %s466, [#allocation9]
        $region60: #{network_forward.1} parent=11 // pred_fallthru
          _
        // Predicated region
        $region61: #{network_forward.1} parent=11 // pred_check
          %p469 = pneg %p327
        $region62: #{network_forward.1} parent=11 // pred_check_branch
          %471 = sbr.rel (%p469) target = $region64
        $region63: #{network_forward.1} parent=11 // pred_region
          _
        $region64: #{network_forward.1} parent=11 // pred_fallthru
          _
        // Predicated region
        $region65: #{network_forward.1} parent=11 // pred_check
          %p472 = pneg %p348
        $region66: #{network_forward.1} parent=11 // pred_check_branch
          %474 = sbr.rel (%p472) target = $region68
        $region67: #{network_forward.1} parent=11 // pred_region
          %s476 = ssub.s32 16, 16
          %477 = vsyncadd [#allocation12], %s476
          %s479 = sshll.u32 [#allocation11], 4
          %s480 = int_to_ptr.vmem [resolvable:$true] %s479
          %482 = dma.hbm_to_vmem [thread:$0]  %s14, 16, %s480, [#allocation12]
        $region68: #{network_forward.1} parent=11 // pred_fallthru
          _
      $region12: #{network_forward.1} parent=5 // pred_fallthru
        _
      %p483 = scmp.lt.s32.totalorder %s28, 2
      // Predicated region
      $region69: #{network_forward.1} parent=5 // pred_check
        %p484 = pneg %p483
      $region70: #{network_forward.1} parent=5 // pred_check_branch
        %486 = sbr.rel (%p484) target = $region72
      $region71: #{network_forward.1} parent=5 // pred_region
        // Predicated region
        $region73: #{network_forward.1} parent=71 // pred_check
          %p487 = pneg %p48
        $region74: #{network_forward.1} parent=71 // pred_check_branch
          %489 = sbr.rel (%p487) target = $region76
        $region75: #{network_forward.1} parent=71 // pred_region
          %p490 = scmp.lt.s32.totalorder %s28, 1
          %s491 = scalar_select %p490, %s28, 1
          %s492 = smul.addr %s491, 4
          %s493 = smul.addr %s492, 8
          %s494 = scalar_lea.vmem %s0, %s493
        $region76: #{network_forward.1} parent=71 // pred_fallthru
          _
      $region72: #{network_forward.1} parent=5 // pred_fallthru
        _
      %p495 = scmp.le.s32.totalorder 1, %s28
      %p496 = scmp.lt.s32.totalorder %s28, 3
      %p497 = pnand %p495, %p496
      %p498 = pneg %p497
      // Predicated region
      $region77: #{network_forward.1} parent=5 // pred_check
        _
      $region78: #{network_forward.1} parent=5 // pred_check_branch
        %500 = sbr.rel (%p497) target = $region80
      $region79: #{network_forward.1} parent=5 // pred_region
        %s501 = ssub.s32 %s28, 1
        // Predicated region
        $region81: #{network_forward.1} parent=79 // pred_check
          %p502 = pneg %p96
        $region82: #{network_forward.1} parent=79 // pred_check_branch
          %504 = sbr.rel (%p502) target = $region84
        $region83: #{network_forward.1} parent=79 // pred_region
          %505 = dma.done [#allocation3], 32
        $region84: #{network_forward.1} parent=79 // pred_fallthru
          _
        // Predicated region
        $region85: #{network_forward.1} parent=79 // pred_check
          %p506 = pneg %p138
        $region86: #{network_forward.1} parent=79 // pred_check_branch
          %508 = sbr.rel (%p506) target = $region88
        $region87: #{network_forward.1} parent=79 // pred_region
          %509 = dma.done [#allocation6], 4608
        $region88: #{network_forward.1} parent=79 // pred_fallthru
          _
        // Predicated region
        $region89: #{network_forward.1} parent=79 // pred_check
          %p510 = pneg %p201
        $region90: #{network_forward.1} parent=79 // pred_check_branch
          %512 = sbr.rel (%p510) target = $region92
        $region91: #{network_forward.1} parent=79 // pred_region
          %513 = dma.done [#allocation6], 128
        $region92: #{network_forward.1} parent=79 // pred_fallthru
          _
        // Predicated region
        $region93: #{network_forward.1} parent=79 // pred_check
          %p514 = pneg %p264
        $region94: #{network_forward.1} parent=79 // pred_check_branch
          %516 = sbr.rel (%p514) target = $region96
        $region95: #{network_forward.1} parent=79 // pred_region
          %517 = dma.done [#allocation9], 16
        $region96: #{network_forward.1} parent=79 // pred_fallthru
          _
        // Predicated region
        $region97: #{network_forward.1} parent=79 // pred_check
          %p518 = pneg %p306
        $region98: #{network_forward.1} parent=79 // pred_check_branch
          %520 = sbr.rel (%p518) target = $region100
        $region99: #{network_forward.1} parent=79 // pred_region
          %521 = dma.done [#allocation9], 16
        $region100: #{network_forward.1} parent=79 // pred_fallthru
          _
        // Predicated region
        $region101: #{network_forward.1} parent=79 // pred_check
          %p522 = pneg %p348
        $region102: #{network_forward.1} parent=79 // pred_check_branch
          %524 = sbr.rel (%p522) target = $region104
        $region103: #{network_forward.1} parent=79 // pred_region
          %525 = dma.done [#allocation12], 16
        $region104: #{network_forward.1} parent=79 // pred_fallthru
          _
        %p526 = scmp.lt.s32.totalorder %s33, 1
        %s527 = scalar_select %p526, %s33, 1
        %s528 = smul.addr %s527, 4
        %s529 = smul.addr %s528, 8
        %s530 = scalar_lea.vmem %s0, %s529
        %p531 = pneg %p54
        %p532 = pneg %p51
        %p533 = pneg %p75
        %p534 = pneg %p72
        %p535 = pneg %p96
        %p536 = pneg %p93
        %p537 = pneg %p117
        %p538 = pneg %p114
        %p539 = pneg %p138
        %p540 = pneg %p135
        %p541 = pneg %p159
        %p542 = pneg %p156
        %p543 = pneg %p180
        %p544 = pneg %p177
        %p545 = pneg %p201
        %p546 = pneg %p198
        %p547 = pneg %p222
        %p548 = pneg %p219
        %p549 = pneg %p243
        %p550 = pneg %p240
        %p551 = pneg %p264
        %p552 = pneg %p261
        %p553 = pneg %p285
        %p554 = pneg %p282
        %p555 = pneg %p306
        %p556 = pneg %p303
        %p557 = pneg %p327
        %p558 = pneg %p324
        %p559 = pneg %p348
        %p560 = pneg %p345
        %p561 = pneg %p374
        %p562 = pneg %p371
        %s563 = sand.u32 %s361, 1
        %s564 = scalar_lea.sflag [#allocation4], %s563
        %s565 = sand.u32 %s361, 1
        %s566 = scalar_lea.vmem [#allocation13], %s565
        %p567 = scmp.lt.s32.totalorder %s33, 1
        %s568 = scalar_select %p567, %s33, 1
        %s569 = smul.addr %s568, 4
        %s570 = smul.addr %s569, 8
        %s571 = scalar_lea.vmem %s0, %s570
        %v572 = vld [vmem:[%s571] sm:$0xff]
        %v573 = vld [vmem:[%s571 + $0x8] sm:$0xff]
        %v574 = vld [vmem:[%s571 + $0x10] sm:$0xff]
        %v575 = vld [vmem:[%s571 + $0x18] sm:$0xf]
        %v576 = vld [vmem:[%s1] sm:$0xff]
        %v577 = vld [vmem:[%s1 + $0x8] sm:$0xff]
        %v578 = vld [vmem:[%s1 + $0x10] sm:$0xff]
        %v579 = vld [vmem:[%s1 + $0x18] sm:$0xff]
        %v580 = vld [vmem:[%s1 + $0x20] sm:$0xff]
        %v581 = vld [vmem:[%s1 + $0x28] sm:$0xff]
        %v582 = vld [vmem:[%s1 + $0x30] sm:$0xf]
        %v583 = vld [vmem:[%s1 + $0x38] sm:$0xf]
        %s584 = scalar_lea.vmem %s1, 64
        %v585 = vld [vmem:[%s584] sm:$0xff]
        %v586 = vld [vmem:[%s584 + $0x8] sm:$0xff]
        %v587 = vld [vmem:[%s584 + $0x10] sm:$0xff]
        %v588 = vld [vmem:[%s584 + $0x18] sm:$0xff]
        %v589 = vld [vmem:[%s584 + $0x20] sm:$0xff]
        %v590 = vld [vmem:[%s584 + $0x28] sm:$0xff]
        %v591 = vld [vmem:[%s584 + $0x30] sm:$0xf]
        %v592 = vld [vmem:[%s584 + $0x38] sm:$0xf]
        %vm597 = vcmask 1046528
        %v598 = vrot.slane %v572, 1
        %v599 = vrot.slane %v573, 1
        %v600 = vsel %vm597, %v598, %v599
        %v601 = vrot.slane %v574, 1
        %v602 = vsel %vm597, %v599, %v601
        %v603 = vrot.slane %v575, 1
        %v604 = vsel %vm597, %v601, %v603
        %vm605 = vcmask 228352
        %v606 = vsel %vm605, %v600, 0
        %v608 = vsel %vm605, %v602, 0
        %v610 = vsel %vm605, %v604, 0
        %vm612 = vcmask 1043456
        %v614 = vsel %vm612, %v591, 0
        %v617 = vsel %vm612, %v592, 0
        %619 = vmatprep.subr.mxu0 %v586
        %620 = vmatpush1.msra.mxu0 %v585
        %621 = vmatprep.subr.mxu0 %v588
        %622 = vmatpush1.msra.mxu0 %v587
        %623 = vmatprep.subr.mxu0 %v590
        %624 = vmatpush1.msra.mxu0 %v589
        %625 = vmatprep.subr.mxu0 %v617
        %626 = vmatpush1.msra.mxu0 %v614
        %627 = vmatprep.subr.mxu0 0.0
        %628 = vmatpush1.msra.mxu0 0.0
        %629 = vmatprep.subr.mxu0 0.0
        %630 = vmatpush1.msra.mxu0 0.0
        %631 = vmatprep.subr.mxu0 0.0
        %632 = vmatpush1.msra.mxu0 0.0
        %633 = vmatprep.subr.mxu0 0.0
        %634 = vmatpush1.msra.mxu0 0.0
        %635 = vmatprep.subr.mxu0 0.0
        %636 = vmatpush1.msra.mxu0 0.0
        %637 = vmatprep.subr.mxu0 0.0
        %638 = vmatpush1.msra.mxu0 0.0
        %639 = vmatprep.subr.mxu0 0.0
        %640 = vmatpush1.msra.mxu0 0.0
        %641 = vmatprep.subr.mxu0 0.0
        %642 = vmatpush1.msra.mxu0 0.0
        %643 = vmatprep.subr.mxu0 0.0
        %644 = vmatpush1.msra.mxu0 0.0
        %645 = vmatprep.subr.mxu0 0.0
        %646 = vmatpush1.msra.mxu0 0.0
        %647 = vmatprep.subr.mxu0 0.0
        %648 = vmatpush1.msra.mxu0 0.0
        %649 = vmatprep.subr.mxu0 0.0
        %650 = vmatpush1.msra.mxu0 0.0
        %651 = vmatprep.subr.mxu0 0.0
        %652 = vmatpush1.msra.mxu0 0.0
        %653 = vmatprep.subr.mxu0 0.0
        %654 = vmatpush1.msra.mxu0 0.0
        %655 = vmatprep.subr.mxu0 0.0
        %656 = vmatpush1.msra.mxu0 0.0
        %657 = vmatprep.subr.mxu0 0.0
        %658 = vmatpush1.msra.mxu0 0.0
        %659 = vmatprep.subr.mxu0 0.0
        %660 = vmatpush1.msra.mxu0 0.0
        %661 = vmatprep.subr.mxu0 0.0
        %662 = vmatpush1.msra.mxu0 0.0
        %663 = vmatprep.subr.mxu0 0.0
        %664 = vmatpush1.msra.mxu0 0.0
        %665 = vmatprep.subr.mxu0 0.0
        %666 = vmatpush1.msra.mxu0 0.0
        %667 = vmatprep.subr.mxu0 0.0
        %668 = vmatpush1.msra.mxu0 0.0
        %669 = vmatprep.subr.mxu0 0.0
        %670 = vmatpush1.msra.mxu0 0.0
        %671 = vmatprep.subr.mxu0 0.0
        %672 = vmatpush1.msra.mxu0 0.0
        %673 = vmatprep.subr.mxu0 0.0
        %674 = vmatpush1.msra.mxu0 0.0
        %675 = vmatprep.subr.mxu0 0.0
        %676 = vmatpush1.msra.mxu0 0.0
        %677 = vmatprep.subr.mxu0 0.0
        %678 = vmatpush1.msra.mxu0 0.0
        %679 = vmatprep.subr.mxu0 0.0
        %680 = vmatpush1.msra.mxu0 0.0
        %681 = vmatprep.subr.mxu0 0.0
        %682 = vmatpush1.msra.mxu0 0.0
        %683 = vmatprep.mubr.f32.mxu0 0.0
        %684 = vmatmul.mubr.f32.gmra.mrb[0].mxu0 %v606
        %v685 = vpop.f32.mrb[0].mxu0
        %v686 = vadd.f32 0.0, %v685
        %v687 = vpop.f32.mrb[0].mxu0
        %v688 = vadd.f32 0.0, %v687
        %689 = vmatprep.mubr.f32.mxu0 0.0
        %690 = vmatmul.mubr.f32.gmra.mrb[0].mxu0 %v608
        %v691 = vpop.f32.mrb[0].mxu0
        %v692 = vadd.f32 0.0, %v691
        %v693 = vpop.f32.mrb[0].mxu0
        %v694 = vadd.f32 0.0, %v693
        %695 = vmatprep.mubr.f32.mxu0 0.0
        %696 = vmatmul.mubr.f32.gmra.mrb[0].mxu0 %v610
        %v697 = vpop.f32.mrb[0].mxu0
        %v698 = vadd.f32 0.0, %v697
        %v699 = vpop.f32.mrb[0].mxu0
        %v700 = vadd.f32 0.0, %v699
        %701 = vdwg.mxu0
        %v702 = vsel %vm605, %v572, 0
        %v704 = vsel %vm605, %v573, 0
        %v706 = vsel %vm605, %v574, 0
        %v709 = vsel %vm612, %v582, 0
        %v712 = vsel %vm612, %v583, 0
        %714 = vmatprep.subr.mxu0 %v577
        %715 = vmatpush1.msra.mxu0 %v576
        %716 = vmatprep.subr.mxu0 %v579
        %717 = vmatpush1.msra.mxu0 %v578
        %718 = vmatprep.subr.mxu0 %v581
        %719 = vmatpush1.msra.mxu0 %v580
        %720 = vmatprep.subr.mxu0 %v712
        %721 = vmatpush1.msra.mxu0 %v709
        %722 = vmatprep.subr.mxu0 0.0
        %723 = vmatpush1.msra.mxu0 0.0
        %724 = vmatprep.subr.mxu0 0.0
        %725 = vmatpush1.msra.mxu0 0.0
        %726 = vmatprep.subr.mxu0 0.0
        %727 = vmatpush1.msra.mxu0 0.0
        %728 = vmatprep.subr.mxu0 0.0
        %729 = vmatpush1.msra.mxu0 0.0
        %730 = vmatprep.subr.mxu0 0.0
        %731 = vmatpush1.msra.mxu0 0.0
        %732 = vmatprep.subr.mxu0 0.0
        %733 = vmatpush1.msra.mxu0 0.0
        %734 = vmatprep.subr.mxu0 0.0
        %735 = vmatpush1.msra.mxu0 0.0
        %736 = vmatprep.subr.mxu0 0.0
        %737 = vmatpush1.msra.mxu0 0.0
        %738 = vmatprep.subr.mxu0 0.0
        %739 = vmatpush1.msra.mxu0 0.0
        %740 = vmatprep.subr.mxu0 0.0
        %741 = vmatpush1.msra.mxu0 0.0
        %742 = vmatprep.subr.mxu0 0.0
        %743 = vmatpush1.msra.mxu0 0.0
        %744 = vmatprep.subr.mxu0 0.0
        %745 = vmatpush1.msra.mxu0 0.0
        %746 = vmatprep.subr.mxu0 0.0
        %747 = vmatpush1.msra.mxu0 0.0
        %748 = vmatprep.subr.mxu0 0.0
        %749 = vmatpush1.msra.mxu0 0.0
        %750 = vmatprep.subr.mxu0 0.0
        %751 = vmatpush1.msra.mxu0 0.0
        %752 = vmatprep.subr.mxu0 0.0
        %753 = vmatpush1.msra.mxu0 0.0
        %754 = vmatprep.subr.mxu0 0.0
        %755 = vmatpush1.msra.mxu0 0.0
        %756 = vmatprep.subr.mxu0 0.0
        %757 = vmatpush1.msra.mxu0 0.0
        %758 = vmatprep.subr.mxu0 0.0
        %759 = vmatpush1.msra.mxu0 0.0
        %760 = vmatprep.subr.mxu0 0.0
        %761 = vmatpush1.msra.mxu0 0.0
        %762 = vmatprep.subr.mxu0 0.0
        %763 = vmatpush1.msra.mxu0 0.0
        %764 = vmatprep.subr.mxu0 0.0
        %765 = vmatpush1.msra.mxu0 0.0
        %766 = vmatprep.subr.mxu0 0.0
        %767 = vmatpush1.msra.mxu0 0.0
        %768 = vmatprep.subr.mxu0 0.0
        %769 = vmatpush1.msra.mxu0 0.0
        %770 = vmatprep.subr.mxu0 0.0
        %771 = vmatpush1.msra.mxu0 0.0
        %772 = vmatprep.subr.mxu0 0.0
        %773 = vmatpush1.msra.mxu0 0.0
        %774 = vmatprep.subr.mxu0 0.0
        %775 = vmatpush1.msra.mxu0 0.0
        %776 = vmatprep.subr.mxu0 0.0
        %777 = vmatpush1.msra.mxu0 0.0
        %778 = vmatprep.mubr.f32.mxu0 0.0
        %779 = vmatmul.mubr.f32.gmra.mrb[0].mxu0 %v702
        %v780 = vpop.f32.mrb[0].mxu0
        %v781 = vadd.f32 %v686, %v780
        %v782 = vpop.f32.mrb[0].mxu0
        %v783 = vadd.f32 %v688, %v782
        %784 = vmatprep.mubr.f32.mxu0 0.0
        %785 = vmatmul.mubr.f32.gmra.mrb[0].mxu0 %v704
        %v786 = vpop.f32.mrb[0].mxu0
        %v787 = vadd.f32 %v692, %v786
        %v788 = vpop.f32.mrb[0].mxu0
        %v789 = vadd.f32 %v694, %v788
        %790 = vmatprep.mubr.f32.mxu0 0.0
        %791 = vmatmul.mubr.f32.gmra.mrb[0].mxu0 %v706
        %v792 = vpop.f32.mrb[0].mxu0
        %v793 = vadd.f32 %v698, %v792
        %v794 = vpop.f32.mrb[0].mxu0
        %v795 = vadd.f32 %v700, %v794
        %796 = vdwg.mxu0
        %s797 = scalar_lea.vmem %s1, 128
        %v798 = vld [vmem:[%s797] sm:$0xff]
        %v799 = vld [vmem:[%s797 + $0x8] sm:$0xff]
        %v800 = vld [vmem:[%s797 + $0x10] sm:$0xff]
        %v801 = vld [vmem:[%s797 + $0x18] sm:$0xff]
        %v802 = vld [vmem:[%s797 + $0x20] sm:$0xff]
        %v803 = vld [vmem:[%s797 + $0x28] sm:$0xff]
        %v804 = vld [vmem:[%s797 + $0x30] sm:$0xf]
        %v805 = vld [vmem:[%s797 + $0x38] sm:$0xf]
        %vm806 = vcmask 1045504
        %v807 = vrot.slane %v572, 2
        %v808 = vrot.slane %v573, 2
        %v809 = vsel %vm806, %v807, %v808
        %v810 = vrot.slane %v574, 2
        %v811 = vsel %vm806, %v808, %v810
        %v812 = vrot.slane %v575, 2
        %v813 = vsel %vm806, %v810, %v812
        %v814 = vsel %vm605, %v809, 0
        %v816 = vsel %vm605, %v811, 0
        %v818 = vsel %vm605, %v813, 0
        %v821 = vsel %vm612, %v804, 0
        %v824 = vsel %vm612, %v805, 0
        %826 = vmatprep.subr.mxu0 %v799
        %827 = vmatpush1.msra.mxu0 %v798
        %828 = vmatprep.subr.mxu0 %v801
        %829 = vmatpush1.msra.mxu0 %v800
        %830 = vmatprep.subr.mxu0 %v803
        %831 = vmatpush1.msra.mxu0 %v802
        %832 = vmatprep.subr.mxu0 %v824
        %833 = vmatpush1.msra.mxu0 %v821
        %834 = vmatprep.subr.mxu0 0.0
        %835 = vmatpush1.msra.mxu0 0.0
        %836 = vmatprep.subr.mxu0 0.0
        %837 = vmatpush1.msra.mxu0 0.0
        %838 = vmatprep.subr.mxu0 0.0
        %839 = vmatpush1.msra.mxu0 0.0
        %840 = vmatprep.subr.mxu0 0.0
        %841 = vmatpush1.msra.mxu0 0.0
        %842 = vmatprep.subr.mxu0 0.0
        %843 = vmatpush1.msra.mxu0 0.0
        %844 = vmatprep.subr.mxu0 0.0
        %845 = vmatpush1.msra.mxu0 0.0
        %846 = vmatprep.subr.mxu0 0.0
        %847 = vmatpush1.msra.mxu0 0.0
        %848 = vmatprep.subr.mxu0 0.0
        %849 = vmatpush1.msra.mxu0 0.0
        %850 = vmatprep.subr.mxu0 0.0
        %851 = vmatpush1.msra.mxu0 0.0
        %852 = vmatprep.subr.mxu0 0.0
        %853 = vmatpush1.msra.mxu0 0.0
        %854 = vmatprep.subr.mxu0 0.0
        %855 = vmatpush1.msra.mxu0 0.0
        %856 = vmatprep.subr.mxu0 0.0
        %857 = vmatpush1.msra.mxu0 0.0
        %858 = vmatprep.subr.mxu0 0.0
        %859 = vmatpush1.msra.mxu0 0.0
        %860 = vmatprep.subr.mxu0 0.0
        %861 = vmatpush1.msra.mxu0 0.0
        %862 = vmatprep.subr.mxu0 0.0
        %863 = vmatpush1.msra.mxu0 0.0
        %864 = vmatprep.subr.mxu0 0.0
        %865 = vmatpush1.msra.mxu0 0.0
        %866 = vmatprep.subr.mxu0 0.0
        %867 = vmatpush1.msra.mxu0 0.0
        %868 = vmatprep.subr.mxu0 0.0
        %869 = vmatpush1.msra.mxu0 0.0
        %870 = vmatprep.subr.mxu0 0.0
        %871 = vmatpush1.msra.mxu0 0.0
        %872 = vmatprep.subr.mxu0 0.0
        %873 = vmatpush1.msra.mxu0 0.0
        %874 = vmatprep.subr.mxu0 0.0
        %875 = vmatpush1.msra.mxu0 0.0
        %876 = vmatprep.subr.mxu0 0.0
        %877 = vmatpush1.msra.mxu0 0.0
        %878 = vmatprep.subr.mxu0 0.0
        %879 = vmatpush1.msra.mxu0 0.0
        %880 = vmatprep.subr.mxu0 0.0
        %881 = vmatpush1.msra.mxu0 0.0
        %882 = vmatprep.subr.mxu0 0.0
        %883 = vmatpush1.msra.mxu0 0.0
        %884 = vmatprep.subr.mxu0 0.0
        %885 = vmatpush1.msra.mxu0 0.0
        %886 = vmatprep.subr.mxu0 0.0
        %887 = vmatpush1.msra.mxu0 0.0
        %888 = vmatprep.subr.mxu0 0.0
        %889 = vmatpush1.msra.mxu0 0.0
        %890 = vmatprep.mubr.f32.mxu0 0.0
        %891 = vmatmul.mubr.f32.gmra.mrb[0].mxu0 %v814
        %v892 = vpop.f32.mrb[0].mxu0
        %v893 = vadd.f32 0.0, %v892
        %v894 = vpop.f32.mrb[0].mxu0
        %v895 = vadd.f32 0.0, %v894
        %896 = vmatprep.mubr.f32.mxu0 0.0
        %897 = vmatmul.mubr.f32.gmra.mrb[0].mxu0 %v816
        %v898 = vpop.f32.mrb[0].mxu0
        %v899 = vadd.f32 0.0, %v898
        %v900 = vpop.f32.mrb[0].mxu0
        %v901 = vadd.f32 0.0, %v900
        %902 = vmatprep.mubr.f32.mxu0 0.0
        %903 = vmatmul.mubr.f32.gmra.mrb[0].mxu0 %v818
        %v904 = vpop.f32.mrb[0].mxu0
        %v905 = vadd.f32 0.0, %v904
        %v906 = vpop.f32.mrb[0].mxu0
        %v907 = vadd.f32 0.0, %v906
        %908 = vdwg.mxu0
        %v909 = vadd.f32 %v781, %v893
        %v910 = vadd.f32 %v783, %v895
        %v911 = vadd.f32 %v787, %v899
        %v912 = vadd.f32 %v789, %v901
        %v913 = vadd.f32 %v793, %v905
        %v914 = vadd.f32 %v795, %v907
        %s915 = scalar_lea.vmem %s1, 192
        %v916 = vld [vmem:[%s915] sm:$0xff]
        %v917 = vld [vmem:[%s915 + $0x8] sm:$0xff]
        %v918 = vld [vmem:[%s915 + $0x10] sm:$0xff]
        %v919 = vld [vmem:[%s915 + $0x18] sm:$0xff]
        %v920 = vld [vmem:[%s915 + $0x20] sm:$0xff]
        %v921 = vld [vmem:[%s915 + $0x28] sm:$0xff]
        %v922 = vld [vmem:[%s915 + $0x30] sm:$0xf]
        %v923 = vld [vmem:[%s915 + $0x38] sm:$0xf]
        %vm924 = vcmask 1044480
        %v925 = vrot.slane %v572, 3
        %v926 = vrot.slane %v573, 3
        %v927 = vsel %vm924, %v925, %v926
        %v928 = vrot.slane %v574, 3
        %v929 = vsel %vm924, %v926, %v928
        %v930 = vrot.slane %v575, 3
        %v931 = vsel %vm924, %v928, %v930
        %v932 = vsel %vm605, %v927, 0
        %v934 = vsel %vm605, %v929, 0
        %v936 = vsel %vm605, %v931, 0
        %v939 = vsel %vm612, %v922, 0
        %v942 = vsel %vm612, %v923, 0
        %944 = vmatprep.subr.mxu0 %v917
        %945 = vmatpush1.msra.mxu0 %v916
        %946 = vmatprep.subr.mxu0 %v919
        %947 = vmatpush1.msra.mxu0 %v918
        %948 = vmatprep.subr.mxu0 %v921
        %949 = vmatpush1.msra.mxu0 %v920
        %950 = vmatprep.subr.mxu0 %v942
        %951 = vmatpush1.msra.mxu0 %v939
        %952 = vmatprep.subr.mxu0 0.0
        %953 = vmatpush1.msra.mxu0 0.0
        %954 = vmatprep.subr.mxu0 0.0
        %955 = vmatpush1.msra.mxu0 0.0
        %956 = vmatprep.subr.mxu0 0.0
        %957 = vmatpush1.msra.mxu0 0.0
        %958 = vmatprep.subr.mxu0 0.0
        %959 = vmatpush1.msra.mxu0 0.0
        %960 = vmatprep.subr.mxu0 0.0
        %961 = vmatpush1.msra.mxu0 0.0
        %962 = vmatprep.subr.mxu0 0.0
        %963 = vmatpush1.msra.mxu0 0.0
        %964 = vmatprep.subr.mxu0 0.0
        %965 = vmatpush1.msra.mxu0 0.0
        %966 = vmatprep.subr.mxu0 0.0
        %967 = vmatpush1.msra.mxu0 0.0
        %968 = vmatprep.subr.mxu0 0.0
        %969 = vmatpush1.msra.mxu0 0.0
        %970 = vmatprep.subr.mxu0 0.0
        %971 = vmatpush1.msra.mxu0 0.0
        %972 = vmatprep.subr.mxu0 0.0
        %973 = vmatpush1.msra.mxu0 0.0
        %974 = vmatprep.subr.mxu0 0.0
        %975 = vmatpush1.msra.mxu0 0.0
        %976 = vmatprep.subr.mxu0 0.0
        %977 = vmatpush1.msra.mxu0 0.0
        %978 = vmatprep.subr.mxu0 0.0
        %979 = vmatpush1.msra.mxu0 0.0
        %980 = vmatprep.subr.mxu0 0.0
        %981 = vmatpush1.msra.mxu0 0.0
        %982 = vmatprep.subr.mxu0 0.0
        %983 = vmatpush1.msra.mxu0 0.0
        %984 = vmatprep.subr.mxu0 0.0
        %985 = vmatpush1.msra.mxu0 0.0
        %986 = vmatprep.subr.mxu0 0.0
        %987 = vmatpush1.msra.mxu0 0.0
        %988 = vmatprep.subr.mxu0 0.0
        %989 = vmatpush1.msra.mxu0 0.0
        %990 = vmatprep.subr.mxu0 0.0
        %991 = vmatpush1.msra.mxu0 0.0
        %992 = vmatprep.subr.mxu0 0.0
        %993 = vmatpush1.msra.mxu0 0.0
        %994 = vmatprep.subr.mxu0 0.0
        %995 = vmatpush1.msra.mxu0 0.0
        %996 = vmatprep.subr.mxu0 0.0
        %997 = vmatpush1.msra.mxu0 0.0
        %998 = vmatprep.subr.mxu0 0.0
        %999 = vmatpush1.msra.mxu0 0.0
        %1000 = vmatprep.subr.mxu0 0.0
        %1001 = vmatpush1.msra.mxu0 0.0
        %1002 = vmatprep.subr.mxu0 0.0
        %1003 = vmatpush1.msra.mxu0 0.0
        %1004 = vmatprep.subr.mxu0 0.0
        %1005 = vmatpush1.msra.mxu0 0.0
        %1006 = vmatprep.subr.mxu0 0.0
        %1007 = vmatpush1.msra.mxu0 0.0
        %1008 = vmatprep.mubr.f32.mxu0 0.0
        %1009 = vmatmul.mubr.f32.gmra.mrb[0].mxu0 %v932
        %v1010 = vpop.f32.mrb[0].mxu0
        %v1011 = vadd.f32 0.0, %v1010
        %v1012 = vpop.f32.mrb[0].mxu0
        %v1013 = vadd.f32 0.0, %v1012
        %1014 = vmatprep.mubr.f32.mxu0 0.0
        %1015 = vmatmul.mubr.f32.gmra.mrb[0].mxu0 %v934
        %v1016 = vpop.f32.mrb[0].mxu0
        %v1017 = vadd.f32 0.0, %v1016
        %v1018 = vpop.f32.mrb[0].mxu0
        %v1019 = vadd.f32 0.0, %v1018
        %1020 = vmatprep.mubr.f32.mxu0 0.0
        %1021 = vmatmul.mubr.f32.gmra.mrb[0].mxu0 %v936
        %v1022 = vpop.f32.mrb[0].mxu0
        %v1023 = vadd.f32 0.0, %v1022
        %v1024 = vpop.f32.mrb[0].mxu0
        %v1025 = vadd.f32 0.0, %v1024
        %1026 = vdwg.mxu0
        %v1027 = vadd.f32 %v909, %v1011
        %v1028 = vadd.f32 %v910, %v1013
        %v1029 = vadd.f32 %v911, %v1017
        %v1030 = vadd.f32 %v912, %v1019
        %v1031 = vadd.f32 %v913, %v1023
        %v1032 = vadd.f32 %v914, %v1025
        %s1033 = scalar_lea.vmem %s1, 256
        %v1034 = vld [vmem:[%s1033] sm:$0xff]
        %v1035 = vld [vmem:[%s1033 + $0x8] sm:$0xff]
        %v1036 = vld [vmem:[%s1033 + $0x10] sm:$0xff]
        %v1037 = vld [vmem:[%s1033 + $0x18] sm:$0xff]
        %v1038 = vld [vmem:[%s1033 + $0x20] sm:$0xff]
        %v1039 = vld [vmem:[%s1033 + $0x28] sm:$0xff]
        %v1040 = vld [vmem:[%s1033 + $0x30] sm:$0xf]
        %v1041 = vld [vmem:[%s1033 + $0x38] sm:$0xf]
        %v1042 = vrot.slane %v572, 4
        %v1043 = vrot.slane %v573, 4
        %v1044 = vsel %vm612, %v1042, %v1043
        %v1045 = vrot.slane %v574, 4
        %v1046 = vsel %vm612, %v1043, %v1045
        %v1047 = vrot.slane %v575, 4
        %v1048 = vsel %vm612, %v1045, %v1047
        %v1049 = vsel %vm605, %v1044, 0
        %v1051 = vsel %vm605, %v1046, 0
        %v1053 = vsel %vm605, %v1048, 0
        %v1056 = vsel %vm612, %v1040, 0
        %v1059 = vsel %vm612, %v1041, 0
        %1061 = vmatprep.subr.mxu0 %v1035
        %1062 = vmatpush1.msra.mxu0 %v1034
        %1063 = vmatprep.subr.mxu0 %v1037
        %1064 = vmatpush1.msra.mxu0 %v1036
        %1065 = vmatprep.subr.mxu0 %v1039
        %1066 = vmatpush1.msra.mxu0 %v1038
        %1067 = vmatprep.subr.mxu0 %v1059
        %1068 = vmatpush1.msra.mxu0 %v1056
        %1069 = vmatprep.subr.mxu0 0.0
        %1070 = vmatpush1.msra.mxu0 0.0
        %1071 = vmatprep.subr.mxu0 0.0
        %1072 = vmatpush1.msra.mxu0 0.0
        %1073 = vmatprep.subr.mxu0 0.0
        %1074 = vmatpush1.msra.mxu0 0.0
        %1075 = vmatprep.subr.mxu0 0.0
        %1076 = vmatpush1.msra.mxu0 0.0
        %1077 = vmatprep.subr.mxu0 0.0
        %1078 = vmatpush1.msra.mxu0 0.0
        %1079 = vmatprep.subr.mxu0 0.0
        %1080 = vmatpush1.msra.mxu0 0.0
        %1081 = vmatprep.subr.mxu0 0.0
        %1082 = vmatpush1.msra.mxu0 0.0
        %1083 = vmatprep.subr.mxu0 0.0
        %1084 = vmatpush1.msra.mxu0 0.0
        %1085 = vmatprep.subr.mxu0 0.0
        %1086 = vmatpush1.msra.mxu0 0.0
        %1087 = vmatprep.subr.mxu0 0.0
        %1088 = vmatpush1.msra.mxu0 0.0
        %1089 = vmatprep.subr.mxu0 0.0
        %1090 = vmatpush1.msra.mxu0 0.0
        %1091 = vmatprep.subr.mxu0 0.0
        %1092 = vmatpush1.msra.mxu0 0.0
        %1093 = vmatprep.subr.mxu0 0.0
        %1094 = vmatpush1.msra.mxu0 0.0
        %1095 = vmatprep.subr.mxu0 0.0
        %1096 = vmatpush1.msra.mxu0 0.0
        %1097 = vmatprep.subr.mxu0 0.0
        %1098 = vmatpush1.msra.mxu0 0.0
        %1099 = vmatprep.subr.mxu0 0.0
        %1100 = vmatpush1.msra.mxu0 0.0
        %1101 = vmatprep.subr.mxu0 0.0
        %1102 = vmatpush1.msra.mxu0 0.0
        %1103 = vmatprep.subr.mxu0 0.0
        %1104 = vmatpush1.msra.mxu0 0.0
        %1105 = vmatprep.subr.mxu0 0.0
        %1106 = vmatpush1.msra.mxu0 0.0
        %1107 = vmatprep.subr.mxu0 0.0
        %1108 = vmatpush1.msra.mxu0 0.0
        %1109 = vmatprep.subr.mxu0 0.0
        %1110 = vmatpush1.msra.mxu0 0.0
        %1111 = vmatprep.subr.mxu0 0.0
        %1112 = vmatpush1.msra.mxu0 0.0
        %1113 = vmatprep.subr.mxu0 0.0
        %1114 = vmatpush1.msra.mxu0 0.0
        %1115 = vmatprep.subr.mxu0 0.0
        %1116 = vmatpush1.msra.mxu0 0.0
        %1117 = vmatprep.subr.mxu0 0.0
        %1118 = vmatpush1.msra.mxu0 0.0
        %1119 = vmatprep.subr.mxu0 0.0
        %1120 = vmatpush1.msra.mxu0 0.0
        %1121 = vmatprep.subr.mxu0 0.0
        %1122 = vmatpush1.msra.mxu0 0.0
        %1123 = vmatprep.subr.mxu0 0.0
        %1124 = vmatpush1.msra.mxu0 0.0
        %1125 = vmatprep.mubr.f32.mxu0 0.0
        %1126 = vmatmul.mubr.f32.gmra.mrb[0].mxu0 %v1049
        %v1127 = vpop.f32.mrb[0].mxu0
        %v1128 = vadd.f32 0.0, %v1127
        %v1129 = vpop.f32.mrb[0].mxu0
        %v1130 = vadd.f32 0.0, %v1129
        %1131 = vmatprep.mubr.f32.mxu0 0.0
        %1132 = vmatmul.mubr.f32.gmra.mrb[0].mxu0 %v1051
        %v1133 = vpop.f32.mrb[0].mxu0
        %v1134 = vadd.f32 0.0, %v1133
        %v1135 = vpop.f32.mrb[0].mxu0
        %v1136 = vadd.f32 0.0, %v1135
        %1137 = vmatprep.mubr.f32.mxu0 0.0
        %1138 = vmatmul.mubr.f32.gmra.mrb[0].mxu0 %v1053
        %v1139 = vpop.f32.mrb[0].mxu0
        %v1140 = vadd.f32 0.0, %v1139
        %v1141 = vpop.f32.mrb[0].mxu0
        %v1142 = vadd.f32 0.0, %v1141
        %1143 = vdwg.mxu0
        %v1144 = vadd.f32 %v1027, %v1128
        %v1145 = vadd.f32 %v1028, %v1130
        %v1146 = vadd.f32 %v1029, %v1134
        %v1147 = vadd.f32 %v1030, %v1136
        %v1148 = vadd.f32 %v1031, %v1140
        %v1149 = vadd.f32 %v1032, %v1142
        %v1150 = vld [vmem:[#allocation2] sm:$0x3]
        %v1152 = vlaneseq
        %v1153 = vshrl.u32 %v1152, 7
        %v1154 = vsub.s32 0, %v1153
        %v1155 = vrot.slane %v1150, %v1154
        %v1156 = vlaneseq
        %v1157 = vshrl.u32 %v1156, 7
        %v1158 = vsub.s32 1, %v1157
        %v1159 = vrot.slane %v1150, %v1158
        %v1162 = vadd.f32 %v1144, %v1155
        %v1163 = vadd.f32 %v1145, %v1159
        %v1164 = vadd.f32 %v1146, %v1155
        %v1165 = vadd.f32 %v1147, %v1159
        %v1166 = vadd.f32 %v1148, %v1155
        %v1167 = vadd.f32 %v1149, %v1159
        %v1168 = vmax.f32 %v1162, 0.0
        %v1169 = vmax.f32 %v1163, 0.0
        %v1170 = vmax.f32 %v1164, 0.0
        %v1171 = vmax.f32 %v1165, 0.0
        %v1172 = vmax.f32 %v1166, 0.0
        %v1173 = vmax.f32 %v1167, 0.0
        %v1174 = vld [vmem:[%s3] sm:$0xff]
        %v1175 = vld [vmem:[%s3 + $0x8] sm:$0xf]
        %vm1176 = vcmask 195584
        %v1178 = vsel %vm1176, %v1174, 0
        %v1181 = vsel %vm1176, %v1175, 0
        %1183 = vmatprep.subr.mxu0 %v1169
        %1184 = vmatpush1.msra.mxu0 %v1168
        %1185 = vmatprep.subr.mxu0 %v1171
        %1186 = vmatpush1.msra.mxu0 %v1170
        %1187 = vmatprep.subr.mxu0 %v1173
        %1188 = vmatpush1.msra.mxu0 %v1172
        %1189 = vmatprep.subr.mxu0 0.0
        %1190 = vmatpush1.msra.mxu0 0.0
        %1191 = vmatprep.subr.mxu0 0.0
        %1192 = vmatpush1.msra.mxu0 0.0
        %1193 = vmatprep.subr.mxu0 0.0
        %1194 = vmatpush1.msra.mxu0 0.0
        %1195 = vmatprep.subr.mxu0 0.0
        %1196 = vmatpush1.msra.mxu0 0.0
        %1197 = vmatprep.subr.mxu0 0.0
        %1198 = vmatpush1.msra.mxu0 0.0
        %1199 = vmatprep.subr.mxu0 0.0
        %1200 = vmatpush1.msra.mxu0 0.0
        %1201 = vmatprep.subr.mxu0 0.0
        %1202 = vmatpush1.msra.mxu0 0.0
        %1203 = vmatprep.subr.mxu0 0.0
        %1204 = vmatpush1.msra.mxu0 0.0
        %1205 = vmatprep.subr.mxu0 0.0
        %1206 = vmatpush1.msra.mxu0 0.0
        %1207 = vmatprep.subr.mxu0 0.0
        %1208 = vmatpush1.msra.mxu0 0.0
        %1209 = vmatprep.subr.mxu0 0.0
        %1210 = vmatpush1.msra.mxu0 0.0
        %1211 = vmatprep.subr.mxu0 0.0
        %1212 = vmatpush1.msra.mxu0 0.0
        %1213 = vmatprep.subr.mxu0 0.0
        %1214 = vmatpush1.msra.mxu0 0.0
        %1215 = vmatprep.subr.mxu0 0.0
        %1216 = vmatpush1.msra.mxu0 0.0
        %1217 = vmatprep.subr.mxu0 0.0
        %1218 = vmatpush1.msra.mxu0 0.0
        %1219 = vmatprep.subr.mxu0 0.0
        %1220 = vmatpush1.msra.mxu0 0.0
        %1221 = vmatprep.subr.mxu0 0.0
        %1222 = vmatpush1.msra.mxu0 0.0
        %1223 = vmatprep.subr.mxu0 0.0
        %1224 = vmatpush1.msra.mxu0 0.0
        %1225 = vmatprep.subr.mxu0 0.0
        %1226 = vmatpush1.msra.mxu0 0.0
        %1227 = vmatprep.subr.mxu0 0.0
        %1228 = vmatpush1.msra.mxu0 0.0
        %1229 = vmatprep.subr.mxu0 0.0
        %1230 = vmatpush1.msra.mxu0 0.0
        %1231 = vmatprep.subr.mxu0 0.0
        %1232 = vmatpush1.msra.mxu0 0.0
        %1233 = vmatprep.subr.mxu0 0.0
        %1234 = vmatpush1.msra.mxu0 0.0
        %1235 = vmatprep.subr.mxu0 0.0
        %1236 = vmatpush1.msra.mxu0 0.0
        %1237 = vmatprep.subr.mxu0 0.0
        %1238 = vmatpush1.msra.mxu0 0.0
        %1239 = vmatprep.subr.mxu0 0.0
        %1240 = vmatpush1.msra.mxu0 0.0
        %1241 = vmatprep.subr.mxu0 0.0
        %1242 = vmatpush1.msra.mxu0 0.0
        %1243 = vmatprep.subr.mxu0 0.0
        %1244 = vmatpush1.msra.mxu0 0.0
        %1245 = vmatprep.subr.mxu0 0.0
        %1246 = vmatpush1.msra.mxu0 0.0
        %1247 = vmatprep.mubr.f32.mxu0 0.0
        %1248 = vmatmul.mubr.f32.gmra.mrb[0].mxu0 %v1178
        %v1249 = vpop.f32.mrb[0].mxu0
        %v1250 = vadd.f32 0.0, %v1249
        %v1251 = vpop.f32.mrb[0].mxu0
        %v1252 = vadd.f32 0.0, %v1251
        %1253 = vmatprep.mubr.f32.mxu0 0.0
        %1254 = vmatmul.mubr.f32.gmra.mrb[0].mxu0 %v1181
        %v1255 = vpop.f32.mrb[0].mxu0
        %v1256 = vadd.f32 0.0, %v1255
        %v1257 = vpop.f32.mrb[0].mxu0
        %v1258 = vadd.f32 0.0, %v1257
        %1259 = vdwg.mxu0
        %s1260 = scalar_lea.vmem %s3, 16
        %v1261 = vld [vmem:[%s1260] sm:$0xff]
        %v1262 = vld [vmem:[%s1260 + $0x8] sm:$0xf]
        %v1264 = vsel %vm1176, %v1261, 0
        %v1267 = vsel %vm1176, %v1262, 0
        %1269 = vmatprep.subr.mxu0 %v1169
        %1270 = vmatpush1.msra.mxu0 %v1168
        %1271 = vmatprep.subr.mxu0 %v1171
        %1272 = vmatpush1.msra.mxu0 %v1170
        %1273 = vmatprep.subr.mxu0 %v1173
        %1274 = vmatpush1.msra.mxu0 %v1172
        %1275 = vmatprep.subr.mxu0 0.0
        %1276 = vmatpush1.msra.mxu0 0.0
        %1277 = vmatprep.subr.mxu0 0.0
        %1278 = vmatpush1.msra.mxu0 0.0
        %1279 = vmatprep.subr.mxu0 0.0
        %1280 = vmatpush1.msra.mxu0 0.0
        %1281 = vmatprep.subr.mxu0 0.0
        %1282 = vmatpush1.msra.mxu0 0.0
        %1283 = vmatprep.subr.mxu0 0.0
        %1284 = vmatpush1.msra.mxu0 0.0
        %1285 = vmatprep.subr.mxu0 0.0
        %1286 = vmatpush1.msra.mxu0 0.0
        %1287 = vmatprep.subr.mxu0 0.0
        %1288 = vmatpush1.msra.mxu0 0.0
        %1289 = vmatprep.subr.mxu0 0.0
        %1290 = vmatpush1.msra.mxu0 0.0
        %1291 = vmatprep.subr.mxu0 0.0
        %1292 = vmatpush1.msra.mxu0 0.0
        %1293 = vmatprep.subr.mxu0 0.0
        %1294 = vmatpush1.msra.mxu0 0.0
        %1295 = vmatprep.subr.mxu0 0.0
        %1296 = vmatpush1.msra.mxu0 0.0
        %1297 = vmatprep.subr.mxu0 0.0
        %1298 = vmatpush1.msra.mxu0 0.0
        %1299 = vmatprep.subr.mxu0 0.0
        %1300 = vmatpush1.msra.mxu0 0.0
        %1301 = vmatprep.subr.mxu0 0.0
        %1302 = vmatpush1.msra.mxu0 0.0
        %1303 = vmatprep.subr.mxu0 0.0
        %1304 = vmatpush1.msra.mxu0 0.0
        %1305 = vmatprep.subr.mxu0 0.0
        %1306 = vmatpush1.msra.mxu0 0.0
        %1307 = vmatprep.subr.mxu0 0.0
        %1308 = vmatpush1.msra.mxu0 0.0
        %1309 = vmatprep.subr.mxu0 0.0
        %1310 = vmatpush1.msra.mxu0 0.0
        %1311 = vmatprep.subr.mxu0 0.0
        %1312 = vmatpush1.msra.mxu0 0.0
        %1313 = vmatprep.subr.mxu0 0.0
        %1314 = vmatpush1.msra.mxu0 0.0
        %1315 = vmatprep.subr.mxu0 0.0
        %1316 = vmatpush1.msra.mxu0 0.0
        %1317 = vmatprep.subr.mxu0 0.0
        %1318 = vmatpush1.msra.mxu0 0.0
        %1319 = vmatprep.subr.mxu0 0.0
        %1320 = vmatpush1.msra.mxu0 0.0
        %1321 = vmatprep.subr.mxu0 0.0
        %1322 = vmatpush1.msra.mxu0 0.0
        %1323 = vmatprep.subr.mxu0 0.0
        %1324 = vmatpush1.msra.mxu0 0.0
        %1325 = vmatprep.subr.mxu0 0.0
        %1326 = vmatpush1.msra.mxu0 0.0
        %1327 = vmatprep.subr.mxu0 0.0
        %1328 = vmatpush1.msra.mxu0 0.0
        %1329 = vmatprep.subr.mxu0 0.0
        %1330 = vmatpush1.msra.mxu0 0.0
        %1331 = vmatprep.subr.mxu0 0.0
        %1332 = vmatpush1.msra.mxu0 0.0
        %1333 = vmatprep.mubr.f32.mxu0 0.0
        %1334 = vmatmul.mubr.f32.gmra.mrb[0].mxu0 %v1264
        %v1335 = vpop.f32.mrb[0].mxu0
        %v1336 = vadd.f32 0.0, %v1335
        %v1337 = vpop.f32.mrb[0].mxu0
        %v1338 = vadd.f32 0.0, %v1337
        %1339 = vmatprep.mubr.f32.mxu0 0.0
        %1340 = vmatmul.mubr.f32.gmra.mrb[0].mxu0 %v1267
        %v1341 = vpop.f32.mrb[0].mxu0
        %v1342 = vadd.f32 0.0, %v1341
        %v1343 = vpop.f32.mrb[0].mxu0
        %v1344 = vadd.f32 0.0, %v1343
        %1345 = vdwg.mxu0
        %v1346 = vld [vmem:[#allocation5] sm:$0xff]
        %v1347 = vld [vmem:[#allocation5 + $0x8] sm:$0xff]
        %v1348 = vld [vmem:[#allocation5 + $0x10] sm:$0xff]
        %v1349 = vld [vmem:[#allocation5 + $0x18] sm:$0xff]
        %v1350 = vld [vmem:[#allocation5 + $0x20] sm:$0xff]
        %v1351 = vld [vmem:[#allocation5 + $0x28] sm:$0xff]
        %v1352 = vld [vmem:[#allocation5 + $0x30] sm:$0xff]
        %v1353 = vld [vmem:[#allocation5 + $0x38] sm:$0xff]
        %v1354 = vld [vmem:[#allocation5 + $0x40] sm:$0xff]
        %v1355 = vld [vmem:[#allocation5 + $0x48] sm:$0xff]
        %v1356 = vld [vmem:[#allocation5 + $0x50] sm:$0xff]
        %v1357 = vld [vmem:[#allocation5 + $0x58] sm:$0xff]
        %v1358 = vld [vmem:[#allocation5 + $0x60] sm:$0xff]
        %v1359 = vld [vmem:[#allocation5 + $0x68] sm:$0xff]
        %v1360 = vld [vmem:[#allocation5 + $0x70] sm:$0xff]
        %v1361 = vld [vmem:[#allocation5 + $0x78] sm:$0xff]
        %v1362 = vld [vmem:[#allocation5 + $0x80] sm:$0xff]
        %v1363 = vld [vmem:[#allocation5 + $0x88] sm:$0xff]
        %vm1364 = vcmask 130048
        %v1366 = vsel %vm1364, %v1252, 0
        %v1369 = vsel %vm1364, %v1258, 0
        %1371 = vmatprep.subr.mxu0 0.0
        %1372 = vmatpush1.msra.mxu0 %v1346
        %1373 = vmatprep.subr.mxu0 0.0
        %1374 = vmatpush1.msra.mxu0 %v1347
        %1375 = vmatprep.subr.mxu0 0.0
        %1376 = vmatpush1.msra.mxu0 %v1348
        %1377 = vmatprep.subr.mxu0 0.0
        %1378 = vmatpush1.msra.mxu0 %v1349
        %1379 = vmatprep.subr.mxu0 0.0
        %1380 = vmatpush1.msra.mxu0 %v1350
        %1381 = vmatprep.subr.mxu0 0.0
        %1382 = vmatpush1.msra.mxu0 %v1351
        %1383 = vmatprep.subr.mxu0 0.0
        %1384 = vmatpush1.msra.mxu0 %v1352
        %1385 = vmatprep.subr.mxu0 0.0
        %1386 = vmatpush1.msra.mxu0 %v1353
        %1387 = vmatprep.subr.mxu0 0.0
        %1388 = vmatpush1.msra.mxu0 %v1354
        %1389 = vmatprep.subr.mxu0 0.0
        %1390 = vmatpush1.msra.mxu0 %v1355
        %1391 = vmatprep.subr.mxu0 0.0
        %1392 = vmatpush1.msra.mxu0 %v1356
        %1393 = vmatprep.subr.mxu0 0.0
        %1394 = vmatpush1.msra.mxu0 %v1357
        %1395 = vmatprep.subr.mxu0 0.0
        %1396 = vmatpush1.msra.mxu0 %v1358
        %1397 = vmatprep.subr.mxu0 0.0
        %1398 = vmatpush1.msra.mxu0 %v1359
        %1399 = vmatprep.subr.mxu0 0.0
        %1400 = vmatpush1.msra.mxu0 %v1360
        %1401 = vmatprep.subr.mxu0 0.0
        %1402 = vmatpush1.msra.mxu0 %v1361
        %1403 = vmatprep.subr.mxu0 0.0
        %1404 = vmatpush1.msra.mxu0 %v1362
        %1405 = vmatprep.subr.mxu0 0.0
        %1406 = vmatpush1.msra.mxu0 %v1363
        %1407 = vmatprep.subr.mxu0 0.0
        %1408 = vmatpush1.msra.mxu0 0.0
        %1409 = vmatprep.subr.mxu0 0.0
        %1410 = vmatpush1.msra.mxu0 0.0
        %1411 = vmatprep.subr.mxu0 0.0
        %1412 = vmatpush1.msra.mxu0 0.0
        %1413 = vmatprep.subr.mxu0 0.0
        %1414 = vmatpush1.msra.mxu0 0.0
        %1415 = vmatprep.subr.mxu0 0.0
        %1416 = vmatpush1.msra.mxu0 0.0
        %1417 = vmatprep.subr.mxu0 0.0
        %1418 = vmatpush1.msra.mxu0 0.0
        %1419 = vmatprep.subr.mxu0 0.0
        %1420 = vmatpush1.msra.mxu0 0.0
        %1421 = vmatprep.subr.mxu0 0.0
        %1422 = vmatpush1.msra.mxu0 0.0
        %1423 = vmatprep.subr.mxu0 0.0
        %1424 = vmatpush1.msra.mxu0 0.0
        %1425 = vmatprep.subr.mxu0 0.0
        %1426 = vmatpush1.msra.mxu0 0.0
        %1427 = vmatprep.subr.mxu0 0.0
        %1428 = vmatpush1.msra.mxu0 0.0
        %1429 = vmatprep.subr.mxu0 0.0
        %1430 = vmatpush1.msra.mxu0 0.0
        %1431 = vmatprep.subr.mxu0 0.0
        %1432 = vmatpush1.msra.mxu0 0.0
        %1433 = vmatprep.subr.mxu0 0.0
        %1434 = vmatpush1.msra.mxu0 0.0
        %1435 = vmatprep.mubr.f32.mxu0 %v1366
        %1436 = vmatmul.mubr.f32.gmra.mrb[0].mxu0 %v1250
        %v1437 = vpop.f32.mrb[0].mxu0
        %v1438 = vadd.f32 0.0, %v1437
        %v1439 = vpop.f32.mrb[0].mxu0
        %1440 = vmatprep.mubr.f32.mxu0 %v1369
        %1441 = vmatmul.mubr.f32.gmra.mrb[0].mxu0 %v1256
        %v1442 = vpop.f32.mrb[0].mxu0
        %v1443 = vadd.f32 0.0, %v1442
        %v1444 = vpop.f32.mrb[0].mxu0
        %1445 = vdwg.mxu0
        %s1446 = scalar_lea.vmem [#allocation5], 144
        %v1447 = vld [vmem:[%s1446] sm:$0xff]
        %v1448 = vld [vmem:[%s1446 + $0x8] sm:$0xff]
        %v1449 = vld [vmem:[%s1446 + $0x10] sm:$0xff]
        %v1450 = vld [vmem:[%s1446 + $0x18] sm:$0xff]
        %v1451 = vld [vmem:[%s1446 + $0x20] sm:$0xff]
        %v1452 = vld [vmem:[%s1446 + $0x28] sm:$0xff]
        %v1453 = vld [vmem:[%s1446 + $0x30] sm:$0xff]
        %v1454 = vld [vmem:[%s1446 + $0x38] sm:$0xff]
        %v1455 = vld [vmem:[%s1446 + $0x40] sm:$0xff]
        %v1456 = vld [vmem:[%s1446 + $0x48] sm:$0xff]
        %v1457 = vld [vmem:[%s1446 + $0x50] sm:$0xff]
        %v1458 = vld [vmem:[%s1446 + $0x58] sm:$0xff]
        %v1459 = vld [vmem:[%s1446 + $0x60] sm:$0xff]
        %v1460 = vld [vmem:[%s1446 + $0x68] sm:$0xff]
        %v1461 = vld [vmem:[%s1446 + $0x70] sm:$0xff]
        %v1462 = vld [vmem:[%s1446 + $0x78] sm:$0xff]
        %v1463 = vld [vmem:[%s1446 + $0x80] sm:$0xff]
        %v1464 = vld [vmem:[%s1446 + $0x88] sm:$0xff]
        %1465 = vmatprep.subr.mxu0 0.0
        %1466 = vmatpush1.msra.mxu0 %v1447
        %1467 = vmatprep.subr.mxu0 0.0
        %1468 = vmatpush1.msra.mxu0 %v1448
        %1469 = vmatprep.subr.mxu0 0.0
        %1470 = vmatpush1.msra.mxu0 %v1449
        %1471 = vmatprep.subr.mxu0 0.0
        %1472 = vmatpush1.msra.mxu0 %v1450
        %1473 = vmatprep.subr.mxu0 0.0
        %1474 = vmatpush1.msra.mxu0 %v1451
        %1475 = vmatprep.subr.mxu0 0.0
        %1476 = vmatpush1.msra.mxu0 %v1452
        %1477 = vmatprep.subr.mxu0 0.0
        %1478 = vmatpush1.msra.mxu0 %v1453
        %1479 = vmatprep.subr.mxu0 0.0
        %1480 = vmatpush1.msra.mxu0 %v1454
        %1481 = vmatprep.subr.mxu0 0.0
        %1482 = vmatpush1.msra.mxu0 %v1455
        %1483 = vmatprep.subr.mxu0 0.0
        %1484 = vmatpush1.msra.mxu0 %v1456
        %1485 = vmatprep.subr.mxu0 0.0
        %1486 = vmatpush1.msra.mxu0 %v1457
        %1487 = vmatprep.subr.mxu0 0.0
        %1488 = vmatpush1.msra.mxu0 %v1458
        %1489 = vmatprep.subr.mxu0 0.0
        %1490 = vmatpush1.msra.mxu0 %v1459
        %1491 = vmatprep.subr.mxu0 0.0
        %1492 = vmatpush1.msra.mxu0 %v1460
        %1493 = vmatprep.subr.mxu0 0.0
        %1494 = vmatpush1.msra.mxu0 %v1461
        %1495 = vmatprep.subr.mxu0 0.0
        %1496 = vmatpush1.msra.mxu0 %v1462
        %1497 = vmatprep.subr.mxu0 0.0
        %1498 = vmatpush1.msra.mxu0 %v1463
        %1499 = vmatprep.subr.mxu0 0.0
        %1500 = vmatpush1.msra.mxu0 %v1464
        %1501 = vmatprep.subr.mxu0 0.0
        %1502 = vmatpush1.msra.mxu0 0.0
        %1503 = vmatprep.subr.mxu0 0.0
        %1504 = vmatpush1.msra.mxu0 0.0
        %1505 = vmatprep.subr.mxu0 0.0
        %1506 = vmatpush1.msra.mxu0 0.0
        %1507 = vmatprep.subr.mxu0 0.0
        %1508 = vmatpush1.msra.mxu0 0.0
        %1509 = vmatprep.subr.mxu0 0.0
        %1510 = vmatpush1.msra.mxu0 0.0
        %1511 = vmatprep.subr.mxu0 0.0
        %1512 = vmatpush1.msra.mxu0 0.0
        %1513 = vmatprep.subr.mxu0 0.0
        %1514 = vmatpush1.msra.mxu0 0.0
        %1515 = vmatprep.subr.mxu0 0.0
        %1516 = vmatpush1.msra.mxu0 0.0
        %1517 = vmatprep.subr.mxu0 0.0
        %1518 = vmatpush1.msra.mxu0 0.0
        %1519 = vmatprep.subr.mxu0 0.0
        %1520 = vmatpush1.msra.mxu0 0.0
        %1521 = vmatprep.subr.mxu0 0.0
        %1522 = vmatpush1.msra.mxu0 0.0
        %1523 = vmatprep.subr.mxu0 0.0
        %1524 = vmatpush1.msra.mxu0 0.0
        %1525 = vmatprep.subr.mxu0 0.0
        %1526 = vmatpush1.msra.mxu0 0.0
        %1527 = vmatprep.subr.mxu0 0.0
        %1528 = vmatpush1.msra.mxu0 0.0
        %1529 = vmatprep.mubr.f32.mxu0 %v1366
        %1530 = vmatmul.mubr.f32.gmra.mrb[0].mxu0 %v1250
        %v1531 = vpop.f32.mrb[0].mxu0
        %v1532 = vadd.f32 0.0, %v1531
        %v1533 = vpop.f32.mrb[0].mxu0
        %1534 = vmatprep.mubr.f32.mxu0 %v1369
        %1535 = vmatmul.mubr.f32.gmra.mrb[0].mxu0 %v1256
        %v1536 = vpop.f32.mrb[0].mxu0
        %v1537 = vadd.f32 0.0, %v1536
        %v1538 = vpop.f32.mrb[0].mxu0
        %1539 = vdwg.mxu0
        %v1540 = vmax.f32 %v1438, %v1532
        %v1541 = vmax.f32 %v1443, %v1537
        %v1543 = vsel %vm1364, %v1338, 0
        %v1546 = vsel %vm1364, %v1344, 0
        %1548 = vmatprep.subr.mxu0 0.0
        %1549 = vmatpush1.msra.mxu0 %v1346
        %1550 = vmatprep.subr.mxu0 0.0
        %1551 = vmatpush1.msra.mxu0 %v1347
        %1552 = vmatprep.subr.mxu0 0.0
        %1553 = vmatpush1.msra.mxu0 %v1348
        %1554 = vmatprep.subr.mxu0 0.0
        %1555 = vmatpush1.msra.mxu0 %v1349
        %1556 = vmatprep.subr.mxu0 0.0
        %1557 = vmatpush1.msra.mxu0 %v1350
        %1558 = vmatprep.subr.mxu0 0.0
        %1559 = vmatpush1.msra.mxu0 %v1351
        %1560 = vmatprep.subr.mxu0 0.0
        %1561 = vmatpush1.msra.mxu0 %v1352
        %1562 = vmatprep.subr.mxu0 0.0
        %1563 = vmatpush1.msra.mxu0 %v1353
        %1564 = vmatprep.subr.mxu0 0.0
        %1565 = vmatpush1.msra.mxu0 %v1354
        %1566 = vmatprep.subr.mxu0 0.0
        %1567 = vmatpush1.msra.mxu0 %v1355
        %1568 = vmatprep.subr.mxu0 0.0
        %1569 = vmatpush1.msra.mxu0 %v1356
        %1570 = vmatprep.subr.mxu0 0.0
        %1571 = vmatpush1.msra.mxu0 %v1357
        %1572 = vmatprep.subr.mxu0 0.0
        %1573 = vmatpush1.msra.mxu0 %v1358
        %1574 = vmatprep.subr.mxu0 0.0
        %1575 = vmatpush1.msra.mxu0 %v1359
        %1576 = vmatprep.subr.mxu0 0.0
        %1577 = vmatpush1.msra.mxu0 %v1360
        %1578 = vmatprep.subr.mxu0 0.0
        %1579 = vmatpush1.msra.mxu0 %v1361
        %1580 = vmatprep.subr.mxu0 0.0
        %1581 = vmatpush1.msra.mxu0 %v1362
        %1582 = vmatprep.subr.mxu0 0.0
        %1583 = vmatpush1.msra.mxu0 %v1363
        %1584 = vmatprep.subr.mxu0 0.0
        %1585 = vmatpush1.msra.mxu0 0.0
        %1586 = vmatprep.subr.mxu0 0.0
        %1587 = vmatpush1.msra.mxu0 0.0
        %1588 = vmatprep.subr.mxu0 0.0
        %1589 = vmatpush1.msra.mxu0 0.0
        %1590 = vmatprep.subr.mxu0 0.0
        %1591 = vmatpush1.msra.mxu0 0.0
        %1592 = vmatprep.subr.mxu0 0.0
        %1593 = vmatpush1.msra.mxu0 0.0
        %1594 = vmatprep.subr.mxu0 0.0
        %1595 = vmatpush1.msra.mxu0 0.0
        %1596 = vmatprep.subr.mxu0 0.0
        %1597 = vmatpush1.msra.mxu0 0.0
        %1598 = vmatprep.subr.mxu0 0.0
        %1599 = vmatpush1.msra.mxu0 0.0
        %1600 = vmatprep.subr.mxu0 0.0
        %1601 = vmatpush1.msra.mxu0 0.0
        %1602 = vmatprep.subr.mxu0 0.0
        %1603 = vmatpush1.msra.mxu0 0.0
        %1604 = vmatprep.subr.mxu0 0.0
        %1605 = vmatpush1.msra.mxu0 0.0
        %1606 = vmatprep.subr.mxu0 0.0
        %1607 = vmatpush1.msra.mxu0 0.0
        %1608 = vmatprep.subr.mxu0 0.0
        %1609 = vmatpush1.msra.mxu0 0.0
        %1610 = vmatprep.subr.mxu0 0.0
        %1611 = vmatpush1.msra.mxu0 0.0
        %1612 = vmatprep.mubr.f32.mxu0 %v1543
        %1613 = vmatmul.mubr.f32.gmra.mrb[0].mxu0 %v1336
        %v1614 = vpop.f32.mrb[0].mxu0
        %v1615 = vadd.f32 0.0, %v1614
        %v1616 = vpop.f32.mrb[0].mxu0
        %1617 = vmatprep.mubr.f32.mxu0 %v1546
        %1618 = vmatmul.mubr.f32.gmra.mrb[0].mxu0 %v1342
        %v1619 = vpop.f32.mrb[0].mxu0
        %v1620 = vadd.f32 0.0, %v1619
        %v1621 = vpop.f32.mrb[0].mxu0
        %1622 = vdwg.mxu0
        %1623 = vmatprep.subr.mxu0 0.0
        %1624 = vmatpush1.msra.mxu0 %v1447
        %1625 = vmatprep.subr.mxu0 0.0
        %1626 = vmatpush1.msra.mxu0 %v1448
        %1627 = vmatprep.subr.mxu0 0.0
        %1628 = vmatpush1.msra.mxu0 %v1449
        %1629 = vmatprep.subr.mxu0 0.0
        %1630 = vmatpush1.msra.mxu0 %v1450
        %1631 = vmatprep.subr.mxu0 0.0
        %1632 = vmatpush1.msra.mxu0 %v1451
        %1633 = vmatprep.subr.mxu0 0.0
        %1634 = vmatpush1.msra.mxu0 %v1452
        %1635 = vmatprep.subr.mxu0 0.0
        %1636 = vmatpush1.msra.mxu0 %v1453
        %1637 = vmatprep.subr.mxu0 0.0
        %1638 = vmatpush1.msra.mxu0 %v1454
        %1639 = vmatprep.subr.mxu0 0.0
        %1640 = vmatpush1.msra.mxu0 %v1455
        %1641 = vmatprep.subr.mxu0 0.0
        %1642 = vmatpush1.msra.mxu0 %v1456
        %1643 = vmatprep.subr.mxu0 0.0
        %1644 = vmatpush1.msra.mxu0 %v1457
        %1645 = vmatprep.subr.mxu0 0.0
        %1646 = vmatpush1.msra.mxu0 %v1458
        %1647 = vmatprep.subr.mxu0 0.0
        %1648 = vmatpush1.msra.mxu0 %v1459
        %1649 = vmatprep.subr.mxu0 0.0
        %1650 = vmatpush1.msra.mxu0 %v1460
        %1651 = vmatprep.subr.mxu0 0.0
        %1652 = vmatpush1.msra.mxu0 %v1461
        %1653 = vmatprep.subr.mxu0 0.0
        %1654 = vmatpush1.msra.mxu0 %v1462
        %1655 = vmatprep.subr.mxu0 0.0
        %1656 = vmatpush1.msra.mxu0 %v1463
        %1657 = vmatprep.subr.mxu0 0.0
        %1658 = vmatpush1.msra.mxu0 %v1464
        %1659 = vmatprep.subr.mxu0 0.0
        %1660 = vmatpush1.msra.mxu0 0.0
        %1661 = vmatprep.subr.mxu0 0.0
        %1662 = vmatpush1.msra.mxu0 0.0
        %1663 = vmatprep.subr.mxu0 0.0
        %1664 = vmatpush1.msra.mxu0 0.0
        %1665 = vmatprep.subr.mxu0 0.0
        %1666 = vmatpush1.msra.mxu0 0.0
        %1667 = vmatprep.subr.mxu0 0.0
        %1668 = vmatpush1.msra.mxu0 0.0
        %1669 = vmatprep.subr.mxu0 0.0
        %1670 = vmatpush1.msra.mxu0 0.0
        %1671 = vmatprep.subr.mxu0 0.0
        %1672 = vmatpush1.msra.mxu0 0.0
        %1673 = vmatprep.subr.mxu0 0.0
        %1674 = vmatpush1.msra.mxu0 0.0
        %1675 = vmatprep.subr.mxu0 0.0
        %1676 = vmatpush1.msra.mxu0 0.0
        %1677 = vmatprep.subr.mxu0 0.0
        %1678 = vmatpush1.msra.mxu0 0.0
        %1679 = vmatprep.subr.mxu0 0.0
        %1680 = vmatpush1.msra.mxu0 0.0
        %1681 = vmatprep.subr.mxu0 0.0
        %1682 = vmatpush1.msra.mxu0 0.0
        %1683 = vmatprep.subr.mxu0 0.0
        %1684 = vmatpush1.msra.mxu0 0.0
        %1685 = vmatprep.subr.mxu0 0.0
        %1686 = vmatpush1.msra.mxu0 0.0
        %1687 = vmatprep.mubr.f32.mxu0 %v1543
        %1688 = vmatmul.mubr.f32.gmra.mrb[0].mxu0 %v1336
        %v1689 = vpop.f32.mrb[0].mxu0
        %v1690 = vadd.f32 0.0, %v1689
        %v1691 = vpop.f32.mrb[0].mxu0
        %1692 = vmatprep.mubr.f32.mxu0 %v1546
        %1693 = vmatmul.mubr.f32.gmra.mrb[0].mxu0 %v1342
        %v1694 = vpop.f32.mrb[0].mxu0
        %v1695 = vadd.f32 0.0, %v1694
        %v1696 = vpop.f32.mrb[0].mxu0
        %1697 = vdwg.mxu0
        %v1698 = vmax.f32 %v1615, %v1690
        %v1699 = vmax.f32 %v1620, %v1695
        %v1700 = vmax.f32 %v1540, %v1698
        %v1701 = vmax.f32 %v1541, %v1699
        %v1702 = vld [vmem:[%s5] sm:$0xff]
        %v1703 = vld [vmem:[%s5 + $0x8] sm:$0xff]
        %v1704 = vld [vmem:[%s5 + $0x10] sm:$0xff]
        %v1705 = vld [vmem:[%s5 + $0x18] sm:$0xff]
        %v1706 = vld [vmem:[%s5 + $0x20] sm:$0xff]
        %v1707 = vld [vmem:[%s5 + $0x28] sm:$0xff]
        %v1708 = vld [vmem:[%s5 + $0x30] sm:$0xff]
        %v1709 = vld [vmem:[%s5 + $0x38] sm:$0xff]
        %v1710 = vld [vmem:[%s5 + $0x40] sm:$0xff]
        %s1711 = scalar_lea.vmem %s5, 72
        %v1712 = vld [vmem:[%s1711] sm:$0xff]
        %v1713 = vld [vmem:[%s1711 + $0x8] sm:$0xff]
        %v1714 = vld [vmem:[%s1711 + $0x10] sm:$0xff]
        %v1715 = vld [vmem:[%s1711 + $0x18] sm:$0xff]
        %v1716 = vld [vmem:[%s1711 + $0x20] sm:$0xff]
        %v1717 = vld [vmem:[%s1711 + $0x28] sm:$0xff]
        %v1718 = vld [vmem:[%s1711 + $0x30] sm:$0xff]
        %v1719 = vld [vmem:[%s1711 + $0x38] sm:$0xff]
        %v1720 = vld [vmem:[%s1711 + $0x40] sm:$0xff]
        %v1723 = vrot.slane %v1700, 1
        %v1724 = vrot.slane %v1701, 1
        %v1725 = vsel %vm597, %v1723, %v1724
        %vm1726 = vcmask 588800
        %v1727 = vsel %vm1726, %v1725, 0
        %1729 = vmatprep.subr.mxu0 0.0
        %1730 = vmatpush1.msra.mxu0 %v1712
        %1731 = vmatprep.subr.mxu0 0.0
        %1732 = vmatpush1.msra.mxu0 %v1713
        %1733 = vmatprep.subr.mxu0 0.0
        %1734 = vmatpush1.msra.mxu0 %v1714
        %1735 = vmatprep.subr.mxu0 0.0
        %1736 = vmatpush1.msra.mxu0 %v1715
        %1737 = vmatprep.subr.mxu0 0.0
        %1738 = vmatpush1.msra.mxu0 %v1716
        %1739 = vmatprep.subr.mxu0 0.0
        %1740 = vmatpush1.msra.mxu0 %v1717
        %1741 = vmatprep.subr.mxu0 0.0
        %1742 = vmatpush1.msra.mxu0 %v1718
        %1743 = vmatprep.subr.mxu0 0.0
        %1744 = vmatpush1.msra.mxu0 %v1719
        %1745 = vmatprep.subr.mxu0 0.0
        %1746 = vmatpush1.msra.mxu0 %v1720
        %1747 = vmatprep.subr.mxu0 0.0
        %1748 = vmatpush1.msra.mxu0 0.0
        %1749 = vmatprep.subr.mxu0 0.0
        %1750 = vmatpush1.msra.mxu0 0.0
        %1751 = vmatprep.subr.mxu0 0.0
        %1752 = vmatpush1.msra.mxu0 0.0
        %1753 = vmatprep.subr.mxu0 0.0
        %1754 = vmatpush1.msra.mxu0 0.0
        %1755 = vmatprep.subr.mxu0 0.0
        %1756 = vmatpush1.msra.mxu0 0.0
        %1757 = vmatprep.subr.mxu0 0.0
        %1758 = vmatpush1.msra.mxu0 0.0
        %1759 = vmatprep.subr.mxu0 0.0
        %1760 = vmatpush1.msra.mxu0 0.0
        %1761 = vmatprep.subr.mxu0 0.0
        %1762 = vmatpush1.msra.mxu0 0.0
        %1763 = vmatprep.subr.mxu0 0.0
        %1764 = vmatpush1.msra.mxu0 0.0
        %1765 = vmatprep.subr.mxu0 0.0
        %1766 = vmatpush1.msra.mxu0 0.0
        %1767 = vmatprep.subr.mxu0 0.0
        %1768 = vmatpush1.msra.mxu0 0.0
        %1769 = vmatprep.subr.mxu0 0.0
        %1770 = vmatpush1.msra.mxu0 0.0
        %1771 = vmatprep.subr.mxu0 0.0
        %1772 = vmatpush1.msra.mxu0 0.0
        %1773 = vmatprep.subr.mxu0 0.0
        %1774 = vmatpush1.msra.mxu0 0.0
        %1775 = vmatprep.subr.mxu0 0.0
        %1776 = vmatpush1.msra.mxu0 0.0
        %1777 = vmatprep.subr.mxu0 0.0
        %1778 = vmatpush1.msra.mxu0 0.0
        %1779 = vmatprep.subr.mxu0 0.0
        %1780 = vmatpush1.msra.mxu0 0.0
        %1781 = vmatprep.subr.mxu0 0.0
        %1782 = vmatpush1.msra.mxu0 0.0
        %1783 = vmatprep.subr.mxu0 0.0
        %1784 = vmatpush1.msra.mxu0 0.0
        %1785 = vmatprep.subr.mxu0 0.0
        %1786 = vmatpush1.msra.mxu0 0.0
        %1787 = vmatprep.subr.mxu0 0.0
        %1788 = vmatpush1.msra.mxu0 0.0
        %1789 = vmatprep.subr.mxu0 0.0
        %1790 = vmatpush1.msra.mxu0 0.0
        %1791 = vmatprep.subr.mxu0 0.0
        %1792 = vmatpush1.msra.mxu0 0.0
        %1793 = vmatprep.mubr.f32.mxu0 0.0
        %1794 = vmatmul.mubr.f32.gmra.mrb[0].mxu0 %v1727
        %v1795 = vpop.f32.mrb[0].mxu0
        %v1796 = vadd.f32 0.0, %v1795
        %v1797 = vpop.f32.mrb[0].mxu0
        %1798 = vdwg.mxu0
        %v1799 = vsel %vm1726, %v1700, 0
        %1801 = vmatprep.subr.mxu0 0.0
        %1802 = vmatpush1.msra.mxu0 %v1702
        %1803 = vmatprep.subr.mxu0 0.0
        %1804 = vmatpush1.msra.mxu0 %v1703
        %1805 = vmatprep.subr.mxu0 0.0
        %1806 = vmatpush1.msra.mxu0 %v1704
        %1807 = vmatprep.subr.mxu0 0.0
        %1808 = vmatpush1.msra.mxu0 %v1705
        %1809 = vmatprep.subr.mxu0 0.0
        %1810 = vmatpush1.msra.mxu0 %v1706
        %1811 = vmatprep.subr.mxu0 0.0
        %1812 = vmatpush1.msra.mxu0 %v1707
        %1813 = vmatprep.subr.mxu0 0.0
        %1814 = vmatpush1.msra.mxu0 %v1708
        %1815 = vmatprep.subr.mxu0 0.0
        %1816 = vmatpush1.msra.mxu0 %v1709
        %1817 = vmatprep.subr.mxu0 0.0
        %1818 = vmatpush1.msra.mxu0 %v1710
        %1819 = vmatprep.subr.mxu0 0.0
        %1820 = vmatpush1.msra.mxu0 0.0
        %1821 = vmatprep.subr.mxu0 0.0
        %1822 = vmatpush1.msra.mxu0 0.0
        %1823 = vmatprep.subr.mxu0 0.0
        %1824 = vmatpush1.msra.mxu0 0.0
        %1825 = vmatprep.subr.mxu0 0.0
        %1826 = vmatpush1.msra.mxu0 0.0
        %1827 = vmatprep.subr.mxu0 0.0
        %1828 = vmatpush1.msra.mxu0 0.0
        %1829 = vmatprep.subr.mxu0 0.0
        %1830 = vmatpush1.msra.mxu0 0.0
        %1831 = vmatprep.subr.mxu0 0.0
        %1832 = vmatpush1.msra.mxu0 0.0
        %1833 = vmatprep.subr.mxu0 0.0
        %1834 = vmatpush1.msra.mxu0 0.0
        %1835 = vmatprep.subr.mxu0 0.0
        %1836 = vmatpush1.msra.mxu0 0.0
        %1837 = vmatprep.subr.mxu0 0.0
        %1838 = vmatpush1.msra.mxu0 0.0
        %1839 = vmatprep.subr.mxu0 0.0
        %1840 = vmatpush1.msra.mxu0 0.0
        %1841 = vmatprep.subr.mxu0 0.0
        %1842 = vmatpush1.msra.mxu0 0.0
        %1843 = vmatprep.subr.mxu0 0.0
        %1844 = vmatpush1.msra.mxu0 0.0
        %1845 = vmatprep.subr.mxu0 0.0
        %1846 = vmatpush1.msra.mxu0 0.0
        %1847 = vmatprep.subr.mxu0 0.0
        %1848 = vmatpush1.msra.mxu0 0.0
        %1849 = vmatprep.subr.mxu0 0.0
        %1850 = vmatpush1.msra.mxu0 0.0
        %1851 = vmatprep.subr.mxu0 0.0
        %1852 = vmatpush1.msra.mxu0 0.0
        %1853 = vmatprep.subr.mxu0 0.0
        %1854 = vmatpush1.msra.mxu0 0.0
        %1855 = vmatprep.subr.mxu0 0.0
        %1856 = vmatpush1.msra.mxu0 0.0
        %1857 = vmatprep.subr.mxu0 0.0
        %1858 = vmatpush1.msra.mxu0 0.0
        %1859 = vmatprep.subr.mxu0 0.0
        %1860 = vmatpush1.msra.mxu0 0.0
        %1861 = vmatprep.subr.mxu0 0.0
        %1862 = vmatpush1.msra.mxu0 0.0
        %1863 = vmatprep.subr.mxu0 0.0
        %1864 = vmatpush1.msra.mxu0 0.0
        %1865 = vmatprep.mubr.f32.mxu0 0.0
        %1866 = vmatmul.mubr.f32.gmra.mrb[0].mxu0 %v1799
        %v1867 = vpop.f32.mrb[0].mxu0
        %v1868 = vadd.f32 %v1796, %v1867
        %v1869 = vpop.f32.mrb[0].mxu0
        %1870 = vdwg.mxu0
        %s1871 = scalar_lea.vmem %s5, 144
        %v1872 = vld [vmem:[%s1871] sm:$0xff]
        %v1873 = vld [vmem:[%s1871 + $0x8] sm:$0xff]
        %v1874 = vld [vmem:[%s1871 + $0x10] sm:$0xff]
        %v1875 = vld [vmem:[%s1871 + $0x18] sm:$0xff]
        %v1876 = vld [vmem:[%s1871 + $0x20] sm:$0xff]
        %v1877 = vld [vmem:[%s1871 + $0x28] sm:$0xff]
        %v1878 = vld [vmem:[%s1871 + $0x30] sm:$0xff]
        %v1879 = vld [vmem:[%s1871 + $0x38] sm:$0xff]
        %v1880 = vld [vmem:[%s1871 + $0x40] sm:$0xff]
        %v1881 = vrot.slane %v1700, 2
        %v1882 = vrot.slane %v1701, 2
        %v1883 = vsel %vm806, %v1881, %v1882
        %v1884 = vsel %vm1726, %v1883, 0
        %1886 = vmatprep.subr.mxu0 0.0
        %1887 = vmatpush1.msra.mxu0 %v1872
        %1888 = vmatprep.subr.mxu0 0.0
        %1889 = vmatpush1.msra.mxu0 %v1873
        %1890 = vmatprep.subr.mxu0 0.0
        %1891 = vmatpush1.msra.mxu0 %v1874
        %1892 = vmatprep.subr.mxu0 0.0
        %1893 = vmatpush1.msra.mxu0 %v1875
        %1894 = vmatprep.subr.mxu0 0.0
        %1895 = vmatpush1.msra.mxu0 %v1876
        %1896 = vmatprep.subr.mxu0 0.0
        %1897 = vmatpush1.msra.mxu0 %v1877
        %1898 = vmatprep.subr.mxu0 0.0
        %1899 = vmatpush1.msra.mxu0 %v1878
        %1900 = vmatprep.subr.mxu0 0.0
        %1901 = vmatpush1.msra.mxu0 %v1879
        %1902 = vmatprep.subr.mxu0 0.0
        %1903 = vmatpush1.msra.mxu0 %v1880
        %1904 = vmatprep.subr.mxu0 0.0
        %1905 = vmatpush1.msra.mxu0 0.0
        %1906 = vmatprep.subr.mxu0 0.0
        %1907 = vmatpush1.msra.mxu0 0.0
        %1908 = vmatprep.subr.mxu0 0.0
        %1909 = vmatpush1.msra.mxu0 0.0
        %1910 = vmatprep.subr.mxu0 0.0
        %1911 = vmatpush1.msra.mxu0 0.0
        %1912 = vmatprep.subr.mxu0 0.0
        %1913 = vmatpush1.msra.mxu0 0.0
        %1914 = vmatprep.subr.mxu0 0.0
        %1915 = vmatpush1.msra.mxu0 0.0
        %1916 = vmatprep.subr.mxu0 0.0
        %1917 = vmatpush1.msra.mxu0 0.0
        %1918 = vmatprep.subr.mxu0 0.0
        %1919 = vmatpush1.msra.mxu0 0.0
        %1920 = vmatprep.subr.mxu0 0.0
        %1921 = vmatpush1.msra.mxu0 0.0
        %1922 = vmatprep.subr.mxu0 0.0
        %1923 = vmatpush1.msra.mxu0 0.0
        %1924 = vmatprep.subr.mxu0 0.0
        %1925 = vmatpush1.msra.mxu0 0.0
        %1926 = vmatprep.subr.mxu0 0.0
        %1927 = vmatpush1.msra.mxu0 0.0
        %1928 = vmatprep.subr.mxu0 0.0
        %1929 = vmatpush1.msra.mxu0 0.0
        %1930 = vmatprep.subr.mxu0 0.0
        %1931 = vmatpush1.msra.mxu0 0.0
        %1932 = vmatprep.subr.mxu0 0.0
        %1933 = vmatpush1.msra.mxu0 0.0
        %1934 = vmatprep.subr.mxu0 0.0
        %1935 = vmatpush1.msra.mxu0 0.0
        %1936 = vmatprep.subr.mxu0 0.0
        %1937 = vmatpush1.msra.mxu0 0.0
        %1938 = vmatprep.subr.mxu0 0.0
        %1939 = vmatpush1.msra.mxu0 0.0
        %1940 = vmatprep.subr.mxu0 0.0
        %1941 = vmatpush1.msra.mxu0 0.0
        %1942 = vmatprep.subr.mxu0 0.0
        %1943 = vmatpush1.msra.mxu0 0.0
        %1944 = vmatprep.subr.mxu0 0.0
        %1945 = vmatpush1.msra.mxu0 0.0
        %1946 = vmatprep.subr.mxu0 0.0
        %1947 = vmatpush1.msra.mxu0 0.0
        %1948 = vmatprep.subr.mxu0 0.0
        %1949 = vmatpush1.msra.mxu0 0.0
        %1950 = vmatprep.mubr.f32.mxu0 0.0
        %1951 = vmatmul.mubr.f32.gmra.mrb[0].mxu0 %v1884
        %v1952 = vpop.f32.mrb[0].mxu0
        %v1953 = vadd.f32 0.0, %v1952
        %v1954 = vpop.f32.mrb[0].mxu0
        %1955 = vdwg.mxu0
        %v1956 = vadd.f32 %v1868, %v1953
        %s1957 = scalar_lea.vmem %s5, 216
        %v1958 = vld [vmem:[%s1957] sm:$0xff]
        %v1959 = vld [vmem:[%s1957 + $0x8] sm:$0xff]
        %v1960 = vld [vmem:[%s1957 + $0x10] sm:$0xff]
        %v1961 = vld [vmem:[%s1957 + $0x18] sm:$0xff]
        %v1962 = vld [vmem:[%s1957 + $0x20] sm:$0xff]
        %v1963 = vld [vmem:[%s1957 + $0x28] sm:$0xff]
        %v1964 = vld [vmem:[%s1957 + $0x30] sm:$0xff]
        %v1965 = vld [vmem:[%s1957 + $0x38] sm:$0xff]
        %v1966 = vld [vmem:[%s1957 + $0x40] sm:$0xff]
        %v1967 = vrot.slane %v1700, 3
        %v1968 = vrot.slane %v1701, 3
        %v1969 = vsel %vm924, %v1967, %v1968
        %v1970 = vsel %vm1726, %v1969, 0
        %1972 = vmatprep.subr.mxu0 0.0
        %1973 = vmatpush1.msra.mxu0 %v1958
        %1974 = vmatprep.subr.mxu0 0.0
        %1975 = vmatpush1.msra.mxu0 %v1959
        %1976 = vmatprep.subr.mxu0 0.0
        %1977 = vmatpush1.msra.mxu0 %v1960
        %1978 = vmatprep.subr.mxu0 0.0
        %1979 = vmatpush1.msra.mxu0 %v1961
        %1980 = vmatprep.subr.mxu0 0.0
        %1981 = vmatpush1.msra.mxu0 %v1962
        %1982 = vmatprep.subr.mxu0 0.0
        %1983 = vmatpush1.msra.mxu0 %v1963
        %1984 = vmatprep.subr.mxu0 0.0
        %1985 = vmatpush1.msra.mxu0 %v1964
        %1986 = vmatprep.subr.mxu0 0.0
        %1987 = vmatpush1.msra.mxu0 %v1965
        %1988 = vmatprep.subr.mxu0 0.0
        %1989 = vmatpush1.msra.mxu0 %v1966
        %1990 = vmatprep.subr.mxu0 0.0
        %1991 = vmatpush1.msra.mxu0 0.0
        %1992 = vmatprep.subr.mxu0 0.0
        %1993 = vmatpush1.msra.mxu0 0.0
        %1994 = vmatprep.subr.mxu0 0.0
        %1995 = vmatpush1.msra.mxu0 0.0
        %1996 = vmatprep.subr.mxu0 0.0
        %1997 = vmatpush1.msra.mxu0 0.0
        %1998 = vmatprep.subr.mxu0 0.0
        %1999 = vmatpush1.msra.mxu0 0.0
        %2000 = vmatprep.subr.mxu0 0.0
        %2001 = vmatpush1.msra.mxu0 0.0
        %2002 = vmatprep.subr.mxu0 0.0
        %2003 = vmatpush1.msra.mxu0 0.0
        %2004 = vmatprep.subr.mxu0 0.0
        %2005 = vmatpush1.msra.mxu0 0.0
        %2006 = vmatprep.subr.mxu0 0.0
        %2007 = vmatpush1.msra.mxu0 0.0
        %2008 = vmatprep.subr.mxu0 0.0
        %2009 = vmatpush1.msra.mxu0 0.0
        %2010 = vmatprep.subr.mxu0 0.0
        %2011 = vmatpush1.msra.mxu0 0.0
        %2012 = vmatprep.subr.mxu0 0.0
        %2013 = vmatpush1.msra.mxu0 0.0
        %2014 = vmatprep.subr.mxu0 0.0
        %2015 = vmatpush1.msra.mxu0 0.0
        %2016 = vmatprep.subr.mxu0 0.0
        %2017 = vmatpush1.msra.mxu0 0.0
        %2018 = vmatprep.subr.mxu0 0.0
        %2019 = vmatpush1.msra.mxu0 0.0
        %2020 = vmatprep.subr.mxu0 0.0
        %2021 = vmatpush1.msra.mxu0 0.0
        %2022 = vmatprep.subr.mxu0 0.0
        %2023 = vmatpush1.msra.mxu0 0.0
        %2024 = vmatprep.subr.mxu0 0.0
        %2025 = vmatpush1.msra.mxu0 0.0
        %2026 = vmatprep.subr.mxu0 0.0
        %2027 = vmatpush1.msra.mxu0 0.0
        %2028 = vmatprep.subr.mxu0 0.0
        %2029 = vmatpush1.msra.mxu0 0.0
        %2030 = vmatprep.subr.mxu0 0.0
        %2031 = vmatpush1.msra.mxu0 0.0
        %2032 = vmatprep.subr.mxu0 0.0
        %2033 = vmatpush1.msra.mxu0 0.0
        %2034 = vmatprep.subr.mxu0 0.0
        %2035 = vmatpush1.msra.mxu0 0.0
        %2036 = vmatprep.mubr.f32.mxu0 0.0
        %2037 = vmatmul.mubr.f32.gmra.mrb[0].mxu0 %v1970
        %v2038 = vpop.f32.mrb[0].mxu0
        %v2039 = vadd.f32 0.0, %v2038
        %v2040 = vpop.f32.mrb[0].mxu0
        %2041 = vdwg.mxu0
        %v2042 = vadd.f32 %v1956, %v2039
        %s2043 = scalar_lea.vmem %s5, 288
        %v2044 = vld [vmem:[%s2043] sm:$0xff]
        %v2045 = vld [vmem:[%s2043 + $0x8] sm:$0xff]
        %v2046 = vld [vmem:[%s2043 + $0x10] sm:$0xff]
        %v2047 = vld [vmem:[%s2043 + $0x18] sm:$0xff]
        %v2048 = vld [vmem:[%s2043 + $0x20] sm:$0xff]
        %v2049 = vld [vmem:[%s2043 + $0x28] sm:$0xff]
        %v2050 = vld [vmem:[%s2043 + $0x30] sm:$0xff]
        %v2051 = vld [vmem:[%s2043 + $0x38] sm:$0xff]
        %v2052 = vld [vmem:[%s2043 + $0x40] sm:$0xff]
        %v2053 = vrot.slane %v1700, 4
        %v2054 = vrot.slane %v1701, 4
        %v2055 = vsel %vm612, %v2053, %v2054
        %v2056 = vsel %vm1726, %v2055, 0
        %2058 = vmatprep.subr.mxu0 0.0
        %2059 = vmatpush1.msra.mxu0 %v2044
        %2060 = vmatprep.subr.mxu0 0.0
        %2061 = vmatpush1.msra.mxu0 %v2045
        %2062 = vmatprep.subr.mxu0 0.0
        %2063 = vmatpush1.msra.mxu0 %v2046
        %2064 = vmatprep.subr.mxu0 0.0
        %2065 = vmatpush1.msra.mxu0 %v2047
        %2066 = vmatprep.subr.mxu0 0.0
        %2067 = vmatpush1.msra.mxu0 %v2048
        %2068 = vmatprep.subr.mxu0 0.0
        %2069 = vmatpush1.msra.mxu0 %v2049
        %2070 = vmatprep.subr.mxu0 0.0
        %2071 = vmatpush1.msra.mxu0 %v2050
        %2072 = vmatprep.subr.mxu0 0.0
        %2073 = vmatpush1.msra.mxu0 %v2051
        %2074 = vmatprep.subr.mxu0 0.0
        %2075 = vmatpush1.msra.mxu0 %v2052
        %2076 = vmatprep.subr.mxu0 0.0
        %2077 = vmatpush1.msra.mxu0 0.0
        %2078 = vmatprep.subr.mxu0 0.0
        %2079 = vmatpush1.msra.mxu0 0.0
        %2080 = vmatprep.subr.mxu0 0.0
        %2081 = vmatpush1.msra.mxu0 0.0
        %2082 = vmatprep.subr.mxu0 0.0
        %2083 = vmatpush1.msra.mxu0 0.0
        %2084 = vmatprep.subr.mxu0 0.0
        %2085 = vmatpush1.msra.mxu0 0.0
        %2086 = vmatprep.subr.mxu0 0.0
        %2087 = vmatpush1.msra.mxu0 0.0
        %2088 = vmatprep.subr.mxu0 0.0
        %2089 = vmatpush1.msra.mxu0 0.0
        %2090 = vmatprep.subr.mxu0 0.0
        %2091 = vmatpush1.msra.mxu0 0.0
        %2092 = vmatprep.subr.mxu0 0.0
        %2093 = vmatpush1.msra.mxu0 0.0
        %2094 = vmatprep.subr.mxu0 0.0
        %2095 = vmatpush1.msra.mxu0 0.0
        %2096 = vmatprep.subr.mxu0 0.0
        %2097 = vmatpush1.msra.mxu0 0.0
        %2098 = vmatprep.subr.mxu0 0.0
        %2099 = vmatpush1.msra.mxu0 0.0
        %2100 = vmatprep.subr.mxu0 0.0
        %2101 = vmatpush1.msra.mxu0 0.0
        %2102 = vmatprep.subr.mxu0 0.0
        %2103 = vmatpush1.msra.mxu0 0.0
        %2104 = vmatprep.subr.mxu0 0.0
        %2105 = vmatpush1.msra.mxu0 0.0
        %2106 = vmatprep.subr.mxu0 0.0
        %2107 = vmatpush1.msra.mxu0 0.0
        %2108 = vmatprep.subr.mxu0 0.0
        %2109 = vmatpush1.msra.mxu0 0.0
        %2110 = vmatprep.subr.mxu0 0.0
        %2111 = vmatpush1.msra.mxu0 0.0
        %2112 = vmatprep.subr.mxu0 0.0
        %2113 = vmatpush1.msra.mxu0 0.0
        %2114 = vmatprep.subr.mxu0 0.0
        %2115 = vmatpush1.msra.mxu0 0.0
        %2116 = vmatprep.subr.mxu0 0.0
        %2117 = vmatpush1.msra.mxu0 0.0
        %2118 = vmatprep.subr.mxu0 0.0
        %2119 = vmatpush1.msra.mxu0 0.0
        %2120 = vmatprep.subr.mxu0 0.0
        %2121 = vmatpush1.msra.mxu0 0.0
        %2122 = vmatprep.mubr.f32.mxu0 0.0
        %2123 = vmatmul.mubr.f32.gmra.mrb[0].mxu0 %v2056
        %v2124 = vpop.f32.mrb[0].mxu0
        %v2125 = vadd.f32 0.0, %v2124
        %v2126 = vpop.f32.mrb[0].mxu0
        %2127 = vdwg.mxu0
        %v2128 = vadd.f32 %v2042, %v2125
        %v2129 = vld [vmem:[%s6] sm:$0x1]
        %v2131 = vlaneseq
        %v2132 = vshrl.u32 %v2131, 7
        %v2133 = vsub.s32 0, %v2132
        %v2134 = vrot.slane %v2129, %v2133
        %v2136 = vadd.f32 %v2128, %v2134
        %v2137 = vmax.f32 %v2136, 0.0
        %v2138 = vld [vmem:[#allocation7] sm:$0xf]
        %vm2139 = vcmask 64512
        %v2141 = vsel %vm2139, %v2138, 0
        %2143 = vmatprep.subr.mxu0 0.0
        %2144 = vmatpush1.msra.mxu0 %v2137
        %2145 = vmatprep.subr.mxu0 0.0
        %2146 = vmatpush1.msra.mxu0 0.0
        %2147 = vmatprep.subr.mxu0 0.0
        %2148 = vmatpush1.msra.mxu0 0.0
        %2149 = vmatprep.subr.mxu0 0.0
        %2150 = vmatpush1.msra.mxu0 0.0
        %2151 = vmatprep.subr.mxu0 0.0
        %2152 = vmatpush1.msra.mxu0 0.0
        %2153 = vmatprep.subr.mxu0 0.0
        %2154 = vmatpush1.msra.mxu0 0.0
        %2155 = vmatprep.subr.mxu0 0.0
        %2156 = vmatpush1.msra.mxu0 0.0
        %2157 = vmatprep.subr.mxu0 0.0
        %2158 = vmatpush1.msra.mxu0 0.0
        %2159 = vmatprep.subr.mxu0 0.0
        %2160 = vmatpush1.msra.mxu0 0.0
        %2161 = vmatprep.subr.mxu0 0.0
        %2162 = vmatpush1.msra.mxu0 0.0
        %2163 = vmatprep.subr.mxu0 0.0
        %2164 = vmatpush1.msra.mxu0 0.0
        %2165 = vmatprep.subr.mxu0 0.0
        %2166 = vmatpush1.msra.mxu0 0.0
        %2167 = vmatprep.subr.mxu0 0.0
        %2168 = vmatpush1.msra.mxu0 0.0
        %2169 = vmatprep.subr.mxu0 0.0
        %2170 = vmatpush1.msra.mxu0 0.0
        %2171 = vmatprep.subr.mxu0 0.0
        %2172 = vmatpush1.msra.mxu0 0.0
        %2173 = vmatprep.subr.mxu0 0.0
        %2174 = vmatpush1.msra.mxu0 0.0
        %2175 = vmatprep.subr.mxu0 0.0
        %2176 = vmatpush1.msra.mxu0 0.0
        %2177 = vmatprep.subr.mxu0 0.0
        %2178 = vmatpush1.msra.mxu0 0.0
        %2179 = vmatprep.subr.mxu0 0.0
        %2180 = vmatpush1.msra.mxu0 0.0
        %2181 = vmatprep.subr.mxu0 0.0
        %2182 = vmatpush1.msra.mxu0 0.0
        %2183 = vmatprep.subr.mxu0 0.0
        %2184 = vmatpush1.msra.mxu0 0.0
        %2185 = vmatprep.subr.mxu0 0.0
        %2186 = vmatpush1.msra.mxu0 0.0
        %2187 = vmatprep.subr.mxu0 0.0
        %2188 = vmatpush1.msra.mxu0 0.0
        %2189 = vmatprep.subr.mxu0 0.0
        %2190 = vmatpush1.msra.mxu0 0.0
        %2191 = vmatprep.subr.mxu0 0.0
        %2192 = vmatpush1.msra.mxu0 0.0
        %2193 = vmatprep.subr.mxu0 0.0
        %2194 = vmatpush1.msra.mxu0 0.0
        %2195 = vmatprep.subr.mxu0 0.0
        %2196 = vmatpush1.msra.mxu0 0.0
        %2197 = vmatprep.subr.mxu0 0.0
        %2198 = vmatpush1.msra.mxu0 0.0
        %2199 = vmatprep.subr.mxu0 0.0
        %2200 = vmatpush1.msra.mxu0 0.0
        %2201 = vmatprep.subr.mxu0 0.0
        %2202 = vmatpush1.msra.mxu0 0.0
        %2203 = vmatprep.subr.mxu0 0.0
        %2204 = vmatpush1.msra.mxu0 0.0
        %2205 = vmatprep.subr.mxu0 0.0
        %2206 = vmatpush1.msra.mxu0 0.0
        %2207 = vmatprep.mubr.f32.mxu0 0.0
        %2208 = vmatmul.mubr.f32.gmra.mrb[0].mxu0 %v2141
        %v2209 = vpop.f32.mrb[0].mxu0
        %v2210 = vadd.f32 0.0, %v2209
        %v2211 = vpop.f32.mrb[0].mxu0
        %2212 = vdwg.mxu0
        %s2213 = scalar_lea.vmem [#allocation7], 4
        %v2214 = vld [vmem:[%s2213] sm:$0xf]
        %v2216 = vsel %vm2139, %v2214, 0
        %2218 = vmatprep.subr.mxu0 0.0
        %2219 = vmatpush1.msra.mxu0 %v2137
        %2220 = vmatprep.subr.mxu0 0.0
        %2221 = vmatpush1.msra.mxu0 0.0
        %2222 = vmatprep.subr.mxu0 0.0
        %2223 = vmatpush1.msra.mxu0 0.0
        %2224 = vmatprep.subr.mxu0 0.0
        %2225 = vmatpush1.msra.mxu0 0.0
        %2226 = vmatprep.subr.mxu0 0.0
        %2227 = vmatpush1.msra.mxu0 0.0
        %2228 = vmatprep.subr.mxu0 0.0
        %2229 = vmatpush1.msra.mxu0 0.0
        %2230 = vmatprep.subr.mxu0 0.0
        %2231 = vmatpush1.msra.mxu0 0.0
        %2232 = vmatprep.subr.mxu0 0.0
        %2233 = vmatpush1.msra.mxu0 0.0
        %2234 = vmatprep.subr.mxu0 0.0
        %2235 = vmatpush1.msra.mxu0 0.0
        %2236 = vmatprep.subr.mxu0 0.0
        %2237 = vmatpush1.msra.mxu0 0.0
        %2238 = vmatprep.subr.mxu0 0.0
        %2239 = vmatpush1.msra.mxu0 0.0
        %2240 = vmatprep.subr.mxu0 0.0
        %2241 = vmatpush1.msra.mxu0 0.0
        %2242 = vmatprep.subr.mxu0 0.0
        %2243 = vmatpush1.msra.mxu0 0.0
        %2244 = vmatprep.subr.mxu0 0.0
        %2245 = vmatpush1.msra.mxu0 0.0
        %2246 = vmatprep.subr.mxu0 0.0
        %2247 = vmatpush1.msra.mxu0 0.0
        %2248 = vmatprep.subr.mxu0 0.0
        %2249 = vmatpush1.msra.mxu0 0.0
        %2250 = vmatprep.subr.mxu0 0.0
        %2251 = vmatpush1.msra.mxu0 0.0
        %2252 = vmatprep.subr.mxu0 0.0
        %2253 = vmatpush1.msra.mxu0 0.0
        %2254 = vmatprep.subr.mxu0 0.0
        %2255 = vmatpush1.msra.mxu0 0.0
        %2256 = vmatprep.subr.mxu0 0.0
        %2257 = vmatpush1.msra.mxu0 0.0
        %2258 = vmatprep.subr.mxu0 0.0
        %2259 = vmatpush1.msra.mxu0 0.0
        %2260 = vmatprep.subr.mxu0 0.0
        %2261 = vmatpush1.msra.mxu0 0.0
        %2262 = vmatprep.subr.mxu0 0.0
        %2263 = vmatpush1.msra.mxu0 0.0
        %2264 = vmatprep.subr.mxu0 0.0
        %2265 = vmatpush1.msra.mxu0 0.0
        %2266 = vmatprep.subr.mxu0 0.0
        %2267 = vmatpush1.msra.mxu0 0.0
        %2268 = vmatprep.subr.mxu0 0.0
        %2269 = vmatpush1.msra.mxu0 0.0
        %2270 = vmatprep.subr.mxu0 0.0
        %2271 = vmatpush1.msra.mxu0 0.0
        %2272 = vmatprep.subr.mxu0 0.0
        %2273 = vmatpush1.msra.mxu0 0.0
        %2274 = vmatprep.subr.mxu0 0.0
        %2275 = vmatpush1.msra.mxu0 0.0
        %2276 = vmatprep.subr.mxu0 0.0
        %2277 = vmatpush1.msra.mxu0 0.0
        %2278 = vmatprep.subr.mxu0 0.0
        %2279 = vmatpush1.msra.mxu0 0.0
        %2280 = vmatprep.subr.mxu0 0.0
        %2281 = vmatpush1.msra.mxu0 0.0
        %2282 = vmatprep.mubr.f32.mxu0 0.0
        %2283 = vmatmul.mubr.f32.gmra.mrb[0].mxu0 %v2216
        %v2284 = vpop.f32.mrb[0].mxu0
        %v2285 = vadd.f32 0.0, %v2284
        %v2286 = vpop.f32.mrb[0].mxu0
        %2287 = vdwg.mxu0
        %v2288 = vld [vmem:[%s8] sm:$0xff]
        %v2289 = vld [vmem:[%s8 + $0x8] sm:$0xff]
        %v2290 = vld [vmem:[%s8 + $0x10] sm:$0xff]
        %v2291 = vld [vmem:[%s8 + $0x18] sm:$0xff]
        %v2292 = vld [vmem:[%s8 + $0x20] sm:$0xff]
        %v2293 = vld [vmem:[%s8 + $0x28] sm:$0xff]
        %v2294 = vld [vmem:[%s8 + $0x30] sm:$0xff]
        %v2295 = vld [vmem:[%s8 + $0x38] sm:$0xff]
        %v2296 = vld [vmem:[%s8 + $0x40] sm:$0xff]
        %v2297 = vld [vmem:[%s8 + $0x48] sm:$0xff]
        %v2298 = vld [vmem:[%s8 + $0x50] sm:$0xff]
        %v2299 = vld [vmem:[%s8 + $0x58] sm:$0xff]
        %vm2300 = vcmask 785408
        %v2302 = vsel %vm2300, %v2210, 0
        %2304 = vmatprep.subr.mxu0 0.0
        %2305 = vmatpush1.msra.mxu0 %v2288
        %2306 = vmatprep.subr.mxu0 0.0
        %2307 = vmatpush1.msra.mxu0 %v2289
        %2308 = vmatprep.subr.mxu0 0.0
        %2309 = vmatpush1.msra.mxu0 %v2290
        %2310 = vmatprep.subr.mxu0 0.0
        %2311 = vmatpush1.msra.mxu0 %v2291
        %2312 = vmatprep.subr.mxu0 0.0
        %2313 = vmatpush1.msra.mxu0 %v2292
        %2314 = vmatprep.subr.mxu0 0.0
        %2315 = vmatpush1.msra.mxu0 %v2293
        %2316 = vmatprep.subr.mxu0 0.0
        %2317 = vmatpush1.msra.mxu0 %v2294
        %2318 = vmatprep.subr.mxu0 0.0
        %2319 = vmatpush1.msra.mxu0 %v2295
        %2320 = vmatprep.subr.mxu0 0.0
        %2321 = vmatpush1.msra.mxu0 %v2296
        %2322 = vmatprep.subr.mxu0 0.0
        %2323 = vmatpush1.msra.mxu0 %v2297
        %2324 = vmatprep.subr.mxu0 0.0
        %2325 = vmatpush1.msra.mxu0 %v2298
        %2326 = vmatprep.subr.mxu0 0.0
        %2327 = vmatpush1.msra.mxu0 %v2299
        %2328 = vmatprep.subr.mxu0 0.0
        %2329 = vmatpush1.msra.mxu0 0.0
        %2330 = vmatprep.subr.mxu0 0.0
        %2331 = vmatpush1.msra.mxu0 0.0
        %2332 = vmatprep.subr.mxu0 0.0
        %2333 = vmatpush1.msra.mxu0 0.0
        %2334 = vmatprep.subr.mxu0 0.0
        %2335 = vmatpush1.msra.mxu0 0.0
        %2336 = vmatprep.subr.mxu0 0.0
        %2337 = vmatpush1.msra.mxu0 0.0
        %2338 = vmatprep.subr.mxu0 0.0
        %2339 = vmatpush1.msra.mxu0 0.0
        %2340 = vmatprep.subr.mxu0 0.0
        %2341 = vmatpush1.msra.mxu0 0.0
        %2342 = vmatprep.subr.mxu0 0.0
        %2343 = vmatpush1.msra.mxu0 0.0
        %2344 = vmatprep.subr.mxu0 0.0
        %2345 = vmatpush1.msra.mxu0 0.0
        %2346 = vmatprep.subr.mxu0 0.0
        %2347 = vmatpush1.msra.mxu0 0.0
        %2348 = vmatprep.subr.mxu0 0.0
        %2349 = vmatpush1.msra.mxu0 0.0
        %2350 = vmatprep.subr.mxu0 0.0
        %2351 = vmatpush1.msra.mxu0 0.0
        %2352 = vmatprep.subr.mxu0 0.0
        %2353 = vmatpush1.msra.mxu0 0.0
        %2354 = vmatprep.subr.mxu0 0.0
        %2355 = vmatpush1.msra.mxu0 0.0
        %2356 = vmatprep.subr.mxu0 0.0
        %2357 = vmatpush1.msra.mxu0 0.0
        %2358 = vmatprep.subr.mxu0 0.0
        %2359 = vmatpush1.msra.mxu0 0.0
        %2360 = vmatprep.subr.mxu0 0.0
        %2361 = vmatpush1.msra.mxu0 0.0
        %2362 = vmatprep.subr.mxu0 0.0
        %2363 = vmatpush1.msra.mxu0 0.0
        %2364 = vmatprep.subr.mxu0 0.0
        %2365 = vmatpush1.msra.mxu0 0.0
        %2366 = vmatprep.subr.mxu0 0.0
        %2367 = vmatpush1.msra.mxu0 0.0
        %2368 = vmatprep.mubr.f32.mxu0 0.0
        %2369 = vmatmul.mubr.f32.gmra.mrb[0].mxu0 %v2302
        %v2370 = vpop.f32.mrb[0].mxu0
        %v2371 = vadd.f32 0.0, %v2370
        %v2372 = vpop.f32.mrb[0].mxu0
        %2373 = vdwg.mxu0
        %s2374 = scalar_lea.vmem %s8, 96
        %v2375 = vld [vmem:[%s2374] sm:$0xff]
        %v2376 = vld [vmem:[%s2374 + $0x8] sm:$0xff]
        %v2377 = vld [vmem:[%s2374 + $0x10] sm:$0xff]
        %v2378 = vld [vmem:[%s2374 + $0x18] sm:$0xff]
        %v2379 = vld [vmem:[%s2374 + $0x20] sm:$0xff]
        %v2380 = vld [vmem:[%s2374 + $0x28] sm:$0xff]
        %v2381 = vld [vmem:[%s2374 + $0x30] sm:$0xff]
        %v2382 = vld [vmem:[%s2374 + $0x38] sm:$0xff]
        %v2383 = vld [vmem:[%s2374 + $0x40] sm:$0xff]
        %v2384 = vld [vmem:[%s2374 + $0x48] sm:$0xff]
        %v2385 = vld [vmem:[%s2374 + $0x50] sm:$0xff]
        %v2386 = vld [vmem:[%s2374 + $0x58] sm:$0xff]
        %2387 = vmatprep.subr.mxu0 0.0
        %2388 = vmatpush1.msra.mxu0 %v2375
        %2389 = vmatprep.subr.mxu0 0.0
        %2390 = vmatpush1.msra.mxu0 %v2376
        %2391 = vmatprep.subr.mxu0 0.0
        %2392 = vmatpush1.msra.mxu0 %v2377
        %2393 = vmatprep.subr.mxu0 0.0
        %2394 = vmatpush1.msra.mxu0 %v2378
        %2395 = vmatprep.subr.mxu0 0.0
        %2396 = vmatpush1.msra.mxu0 %v2379
        %2397 = vmatprep.subr.mxu0 0.0
        %2398 = vmatpush1.msra.mxu0 %v2380
        %2399 = vmatprep.subr.mxu0 0.0
        %2400 = vmatpush1.msra.mxu0 %v2381
        %2401 = vmatprep.subr.mxu0 0.0
        %2402 = vmatpush1.msra.mxu0 %v2382
        %2403 = vmatprep.subr.mxu0 0.0
        %2404 = vmatpush1.msra.mxu0 %v2383
        %2405 = vmatprep.subr.mxu0 0.0
        %2406 = vmatpush1.msra.mxu0 %v2384
        %2407 = vmatprep.subr.mxu0 0.0
        %2408 = vmatpush1.msra.mxu0 %v2385
        %2409 = vmatprep.subr.mxu0 0.0
        %2410 = vmatpush1.msra.mxu0 %v2386
        %2411 = vmatprep.subr.mxu0 0.0
        %2412 = vmatpush1.msra.mxu0 0.0
        %2413 = vmatprep.subr.mxu0 0.0
        %2414 = vmatpush1.msra.mxu0 0.0
        %2415 = vmatprep.subr.mxu0 0.0
        %2416 = vmatpush1.msra.mxu0 0.0
        %2417 = vmatprep.subr.mxu0 0.0
        %2418 = vmatpush1.msra.mxu0 0.0
        %2419 = vmatprep.subr.mxu0 0.0
        %2420 = vmatpush1.msra.mxu0 0.0
        %2421 = vmatprep.subr.mxu0 0.0
        %2422 = vmatpush1.msra.mxu0 0.0
        %2423 = vmatprep.subr.mxu0 0.0
        %2424 = vmatpush1.msra.mxu0 0.0
        %2425 = vmatprep.subr.mxu0 0.0
        %2426 = vmatpush1.msra.mxu0 0.0
        %2427 = vmatprep.subr.mxu0 0.0
        %2428 = vmatpush1.msra.mxu0 0.0
        %2429 = vmatprep.subr.mxu0 0.0
        %2430 = vmatpush1.msra.mxu0 0.0
        %2431 = vmatprep.subr.mxu0 0.0
        %2432 = vmatpush1.msra.mxu0 0.0
        %2433 = vmatprep.subr.mxu0 0.0
        %2434 = vmatpush1.msra.mxu0 0.0
        %2435 = vmatprep.subr.mxu0 0.0
        %2436 = vmatpush1.msra.mxu0 0.0
        %2437 = vmatprep.subr.mxu0 0.0
        %2438 = vmatpush1.msra.mxu0 0.0
        %2439 = vmatprep.subr.mxu0 0.0
        %2440 = vmatpush1.msra.mxu0 0.0
        %2441 = vmatprep.subr.mxu0 0.0
        %2442 = vmatpush1.msra.mxu0 0.0
        %2443 = vmatprep.subr.mxu0 0.0
        %2444 = vmatpush1.msra.mxu0 0.0
        %2445 = vmatprep.subr.mxu0 0.0
        %2446 = vmatpush1.msra.mxu0 0.0
        %2447 = vmatprep.subr.mxu0 0.0
        %2448 = vmatpush1.msra.mxu0 0.0
        %2449 = vmatprep.subr.mxu0 0.0
        %2450 = vmatpush1.msra.mxu0 0.0
        %2451 = vmatprep.mubr.f32.mxu0 0.0
        %2452 = vmatmul.mubr.f32.gmra.mrb[0].mxu0 %v2302
        %v2453 = vpop.f32.mrb[0].mxu0
        %v2454 = vadd.f32 0.0, %v2453
        %v2455 = vpop.f32.mrb[0].mxu0
        %2456 = vdwg.mxu0
        %v2457 = vmax.f32 %v2371, %v2454
        %v2459 = vsel %vm2300, %v2285, 0
        %2461 = vmatprep.subr.mxu0 0.0
        %2462 = vmatpush1.msra.mxu0 %v2288
        %2463 = vmatprep.subr.mxu0 0.0
        %2464 = vmatpush1.msra.mxu0 %v2289
        %2465 = vmatprep.subr.mxu0 0.0
        %2466 = vmatpush1.msra.mxu0 %v2290
        %2467 = vmatprep.subr.mxu0 0.0
        %2468 = vmatpush1.msra.mxu0 %v2291
        %2469 = vmatprep.subr.mxu0 0.0
        %2470 = vmatpush1.msra.mxu0 %v2292
        %2471 = vmatprep.subr.mxu0 0.0
        %2472 = vmatpush1.msra.mxu0 %v2293
        %2473 = vmatprep.subr.mxu0 0.0
        %2474 = vmatpush1.msra.mxu0 %v2294
        %2475 = vmatprep.subr.mxu0 0.0
        %2476 = vmatpush1.msra.mxu0 %v2295
        %2477 = vmatprep.subr.mxu0 0.0
        %2478 = vmatpush1.msra.mxu0 %v2296
        %2479 = vmatprep.subr.mxu0 0.0
        %2480 = vmatpush1.msra.mxu0 %v2297
        %2481 = vmatprep.subr.mxu0 0.0
        %2482 = vmatpush1.msra.mxu0 %v2298
        %2483 = vmatprep.subr.mxu0 0.0
        %2484 = vmatpush1.msra.mxu0 %v2299
        %2485 = vmatprep.subr.mxu0 0.0
        %2486 = vmatpush1.msra.mxu0 0.0
        %2487 = vmatprep.subr.mxu0 0.0
        %2488 = vmatpush1.msra.mxu0 0.0
        %2489 = vmatprep.subr.mxu0 0.0
        %2490 = vmatpush1.msra.mxu0 0.0
        %2491 = vmatprep.subr.mxu0 0.0
        %2492 = vmatpush1.msra.mxu0 0.0
        %2493 = vmatprep.subr.mxu0 0.0
        %2494 = vmatpush1.msra.mxu0 0.0
        %2495 = vmatprep.subr.mxu0 0.0
        %2496 = vmatpush1.msra.mxu0 0.0
        %2497 = vmatprep.subr.mxu0 0.0
        %2498 = vmatpush1.msra.mxu0 0.0
        %2499 = vmatprep.subr.mxu0 0.0
        %2500 = vmatpush1.msra.mxu0 0.0
        %2501 = vmatprep.subr.mxu0 0.0
        %2502 = vmatpush1.msra.mxu0 0.0
        %2503 = vmatprep.subr.mxu0 0.0
        %2504 = vmatpush1.msra.mxu0 0.0
        %2505 = vmatprep.subr.mxu0 0.0
        %2506 = vmatpush1.msra.mxu0 0.0
        %2507 = vmatprep.subr.mxu0 0.0
        %2508 = vmatpush1.msra.mxu0 0.0
        %2509 = vmatprep.subr.mxu0 0.0
        %2510 = vmatpush1.msra.mxu0 0.0
        %2511 = vmatprep.subr.mxu0 0.0
        %2512 = vmatpush1.msra.mxu0 0.0
        %2513 = vmatprep.subr.mxu0 0.0
        %2514 = vmatpush1.msra.mxu0 0.0
        %2515 = vmatprep.subr.mxu0 0.0
        %2516 = vmatpush1.msra.mxu0 0.0
        %2517 = vmatprep.subr.mxu0 0.0
        %2518 = vmatpush1.msra.mxu0 0.0
        %2519 = vmatprep.subr.mxu0 0.0
        %2520 = vmatpush1.msra.mxu0 0.0
        %2521 = vmatprep.subr.mxu0 0.0
        %2522 = vmatpush1.msra.mxu0 0.0
        %2523 = vmatprep.subr.mxu0 0.0
        %2524 = vmatpush1.msra.mxu0 0.0
        %2525 = vmatprep.mubr.f32.mxu0 0.0
        %2526 = vmatmul.mubr.f32.gmra.mrb[0].mxu0 %v2459
        %v2527 = vpop.f32.mrb[0].mxu0
        %v2528 = vadd.f32 0.0, %v2527
        %v2529 = vpop.f32.mrb[0].mxu0
        %2530 = vdwg.mxu0
        %2531 = vmatprep.subr.mxu0 0.0
        %2532 = vmatpush1.msra.mxu0 %v2375
        %2533 = vmatprep.subr.mxu0 0.0
        %2534 = vmatpush1.msra.mxu0 %v2376
        %2535 = vmatprep.subr.mxu0 0.0
        %2536 = vmatpush1.msra.mxu0 %v2377
        %2537 = vmatprep.subr.mxu0 0.0
        %2538 = vmatpush1.msra.mxu0 %v2378
        %2539 = vmatprep.subr.mxu0 0.0
        %2540 = vmatpush1.msra.mxu0 %v2379
        %2541 = vmatprep.subr.mxu0 0.0
        %2542 = vmatpush1.msra.mxu0 %v2380
        %2543 = vmatprep.subr.mxu0 0.0
        %2544 = vmatpush1.msra.mxu0 %v2381
        %2545 = vmatprep.subr.mxu0 0.0
        %2546 = vmatpush1.msra.mxu0 %v2382
        %2547 = vmatprep.subr.mxu0 0.0
        %2548 = vmatpush1.msra.mxu0 %v2383
        %2549 = vmatprep.subr.mxu0 0.0
        %2550 = vmatpush1.msra.mxu0 %v2384
        %2551 = vmatprep.subr.mxu0 0.0
        %2552 = vmatpush1.msra.mxu0 %v2385
        %2553 = vmatprep.subr.mxu0 0.0
        %2554 = vmatpush1.msra.mxu0 %v2386
        %2555 = vmatprep.subr.mxu0 0.0
        %2556 = vmatpush1.msra.mxu0 0.0
        %2557 = vmatprep.subr.mxu0 0.0
        %2558 = vmatpush1.msra.mxu0 0.0
        %2559 = vmatprep.subr.mxu0 0.0
        %2560 = vmatpush1.msra.mxu0 0.0
        %2561 = vmatprep.subr.mxu0 0.0
        %2562 = vmatpush1.msra.mxu0 0.0
        %2563 = vmatprep.subr.mxu0 0.0
        %2564 = vmatpush1.msra.mxu0 0.0
        %2565 = vmatprep.subr.mxu0 0.0
        %2566 = vmatpush1.msra.mxu0 0.0
        %2567 = vmatprep.subr.mxu0 0.0
        %2568 = vmatpush1.msra.mxu0 0.0
        %2569 = vmatprep.subr.mxu0 0.0
        %2570 = vmatpush1.msra.mxu0 0.0
        %2571 = vmatprep.subr.mxu0 0.0
        %2572 = vmatpush1.msra.mxu0 0.0
        %2573 = vmatprep.subr.mxu0 0.0
        %2574 = vmatpush1.msra.mxu0 0.0
        %2575 = vmatprep.subr.mxu0 0.0
        %2576 = vmatpush1.msra.mxu0 0.0
        %2577 = vmatprep.subr.mxu0 0.0
        %2578 = vmatpush1.msra.mxu0 0.0
        %2579 = vmatprep.subr.mxu0 0.0
        %2580 = vmatpush1.msra.mxu0 0.0
        %2581 = vmatprep.subr.mxu0 0.0
        %2582 = vmatpush1.msra.mxu0 0.0
        %2583 = vmatprep.subr.mxu0 0.0
        %2584 = vmatpush1.msra.mxu0 0.0
        %2585 = vmatprep.subr.mxu0 0.0
        %2586 = vmatpush1.msra.mxu0 0.0
        %2587 = vmatprep.subr.mxu0 0.0
        %2588 = vmatpush1.msra.mxu0 0.0
        %2589 = vmatprep.subr.mxu0 0.0
        %2590 = vmatpush1.msra.mxu0 0.0
        %2591 = vmatprep.subr.mxu0 0.0
        %2592 = vmatpush1.msra.mxu0 0.0
        %2593 = vmatprep.subr.mxu0 0.0
        %2594 = vmatpush1.msra.mxu0 0.0
        %2595 = vmatprep.mubr.f32.mxu0 0.0
        %2596 = vmatmul.mubr.f32.gmra.mrb[0].mxu0 %v2459
        %v2597 = vpop.f32.mrb[0].mxu0
        %v2598 = vadd.f32 0.0, %v2597
        %v2599 = vpop.f32.mrb[0].mxu0
        %2600 = vdwg.mxu0
        %v2601 = vmax.f32 %v2528, %v2598
        %v2602 = vmax.f32 %v2457, %v2601
        %v2603 = vld [vmem:[#allocation8] sm:$0x1]
        %v2604 = vld [vmem:[%s9] sm:$0xff]
        %v2605 = vld [vmem:[%s9 + $0x8] sm:$0xff]
        %v2606 = vld [vmem:[%s9 + $0x10] sm:$0xff]
        %v2607 = vld [vmem:[%s9 + $0x18] sm:$0xff]
        %v2608 = vld [vmem:[%s9 + $0x20] sm:$0xff]
        %v2609 = vld [vmem:[%s9 + $0x28] sm:$0xff]
        %vm2610 = vcmask 392192
        %v2612 = vsel %vm2610, %v2602, 0
        %2614 = vmatprep.subr.mxu0 0.0
        %2615 = vmatpush1.msra.mxu0 %v2604
        %2616 = vmatprep.subr.mxu0 0.0
        %2617 = vmatpush1.msra.mxu0 %v2605
        %2618 = vmatprep.subr.mxu0 0.0
        %2619 = vmatpush1.msra.mxu0 %v2606
        %2620 = vmatprep.subr.mxu0 0.0
        %2621 = vmatpush1.msra.mxu0 %v2607
        %2622 = vmatprep.subr.mxu0 0.0
        %2623 = vmatpush1.msra.mxu0 %v2608
        %2624 = vmatprep.subr.mxu0 0.0
        %2625 = vmatpush1.msra.mxu0 %v2609
        %2626 = vmatprep.subr.mxu0 0.0
        %2627 = vmatpush1.msra.mxu0 0.0
        %2628 = vmatprep.subr.mxu0 0.0
        %2629 = vmatpush1.msra.mxu0 0.0
        %2630 = vmatprep.subr.mxu0 0.0
        %2631 = vmatpush1.msra.mxu0 0.0
        %2632 = vmatprep.subr.mxu0 0.0
        %2633 = vmatpush1.msra.mxu0 0.0
        %2634 = vmatprep.subr.mxu0 0.0
        %2635 = vmatpush1.msra.mxu0 0.0
        %2636 = vmatprep.subr.mxu0 0.0
        %2637 = vmatpush1.msra.mxu0 0.0
        %2638 = vmatprep.subr.mxu0 0.0
        %2639 = vmatpush1.msra.mxu0 0.0
        %2640 = vmatprep.subr.mxu0 0.0
        %2641 = vmatpush1.msra.mxu0 0.0
        %2642 = vmatprep.subr.mxu0 0.0
        %2643 = vmatpush1.msra.mxu0 0.0
        %2644 = vmatprep.subr.mxu0 0.0
        %2645 = vmatpush1.msra.mxu0 0.0
        %2646 = vmatprep.subr.mxu0 0.0
        %2647 = vmatpush1.msra.mxu0 0.0
        %2648 = vmatprep.subr.mxu0 0.0
        %2649 = vmatpush1.msra.mxu0 0.0
        %2650 = vmatprep.subr.mxu0 0.0
        %2651 = vmatpush1.msra.mxu0 0.0
        %2652 = vmatprep.subr.mxu0 0.0
        %2653 = vmatpush1.msra.mxu0 0.0
        %2654 = vmatprep.subr.mxu0 0.0
        %2655 = vmatpush1.msra.mxu0 0.0
        %2656 = vmatprep.subr.mxu0 0.0
        %2657 = vmatpush1.msra.mxu0 0.0
        %2658 = vmatprep.subr.mxu0 0.0
        %2659 = vmatpush1.msra.mxu0 0.0
        %2660 = vmatprep.subr.mxu0 0.0
        %2661 = vmatpush1.msra.mxu0 0.0
        %2662 = vmatprep.subr.mxu0 0.0
        %2663 = vmatpush1.msra.mxu0 0.0
        %2664 = vmatprep.subr.mxu0 0.0
        %2665 = vmatpush1.msra.mxu0 0.0
        %2666 = vmatprep.subr.mxu0 0.0
        %2667 = vmatpush1.msra.mxu0 0.0
        %2668 = vmatprep.subr.mxu0 0.0
        %2669 = vmatpush1.msra.mxu0 0.0
        %2670 = vmatprep.subr.mxu0 0.0
        %2671 = vmatpush1.msra.mxu0 0.0
        %2672 = vmatprep.subr.mxu0 0.0
        %2673 = vmatpush1.msra.mxu0 0.0
        %2674 = vmatprep.subr.mxu0 0.0
        %2675 = vmatpush1.msra.mxu0 0.0
        %2676 = vmatprep.subr.mxu0 0.0
        %2677 = vmatpush1.msra.mxu0 0.0
        %2678 = vmatprep.mubr.f32.mxu0 0.0
        %2679 = vmatmul.mubr.f32.gmra.mrb[0].mxu0 %v2612
        %v2680 = vpop.f32.mrb[0].mxu0
        %v2681 = vadd.f32 0.0, %v2680
        %v2682 = vpop.f32.mrb[0].mxu0
        %2683 = vdwg.mxu0
        %v2684 = vadd.f32 %v2603, %v2681
        %s2685 = scalar_lea.vmem %s9, 48
        %v2686 = vld [vmem:[%s2685] sm:$0xff]
        %v2687 = vld [vmem:[%s2685 + $0x8] sm:$0xff]
        %v2688 = vld [vmem:[%s2685 + $0x10] sm:$0xff]
        %v2689 = vld [vmem:[%s2685 + $0x18] sm:$0xff]
        %v2690 = vld [vmem:[%s2685 + $0x20] sm:$0xff]
        %v2691 = vld [vmem:[%s2685 + $0x28] sm:$0xff]
        %v2692 = vrot.slane %v2602, 1
        %v2693 = vsel %vm2610, %v2692, 0
        %2695 = vmatprep.subr.mxu0 0.0
        %2696 = vmatpush1.msra.mxu0 %v2686
        %2697 = vmatprep.subr.mxu0 0.0
        %2698 = vmatpush1.msra.mxu0 %v2687
        %2699 = vmatprep.subr.mxu0 0.0
        %2700 = vmatpush1.msra.mxu0 %v2688
        %2701 = vmatprep.subr.mxu0 0.0
        %2702 = vmatpush1.msra.mxu0 %v2689
        %2703 = vmatprep.subr.mxu0 0.0
        %2704 = vmatpush1.msra.mxu0 %v2690
        %2705 = vmatprep.subr.mxu0 0.0
        %2706 = vmatpush1.msra.mxu0 %v2691
        %2707 = vmatprep.subr.mxu0 0.0
        %2708 = vmatpush1.msra.mxu0 0.0
        %2709 = vmatprep.subr.mxu0 0.0
        %2710 = vmatpush1.msra.mxu0 0.0
        %2711 = vmatprep.subr.mxu0 0.0
        %2712 = vmatpush1.msra.mxu0 0.0
        %2713 = vmatprep.subr.mxu0 0.0
        %2714 = vmatpush1.msra.mxu0 0.0
        %2715 = vmatprep.subr.mxu0 0.0
        %2716 = vmatpush1.msra.mxu0 0.0
        %2717 = vmatprep.subr.mxu0 0.0
        %2718 = vmatpush1.msra.mxu0 0.0
        %2719 = vmatprep.subr.mxu0 0.0
        %2720 = vmatpush1.msra.mxu0 0.0
        %2721 = vmatprep.subr.mxu0 0.0
        %2722 = vmatpush1.msra.mxu0 0.0
        %2723 = vmatprep.subr.mxu0 0.0
        %2724 = vmatpush1.msra.mxu0 0.0
        %2725 = vmatprep.subr.mxu0 0.0
        %2726 = vmatpush1.msra.mxu0 0.0
        %2727 = vmatprep.subr.mxu0 0.0
        %2728 = vmatpush1.msra.mxu0 0.0
        %2729 = vmatprep.subr.mxu0 0.0
        %2730 = vmatpush1.msra.mxu0 0.0
        %2731 = vmatprep.subr.mxu0 0.0
        %2732 = vmatpush1.msra.mxu0 0.0
        %2733 = vmatprep.subr.mxu0 0.0
        %2734 = vmatpush1.msra.mxu0 0.0
        %2735 = vmatprep.subr.mxu0 0.0
        %2736 = vmatpush1.msra.mxu0 0.0
        %2737 = vmatprep.subr.mxu0 0.0
        %2738 = vmatpush1.msra.mxu0 0.0
        %2739 = vmatprep.subr.mxu0 0.0
        %2740 = vmatpush1.msra.mxu0 0.0
        %2741 = vmatprep.subr.mxu0 0.0
        %2742 = vmatpush1.msra.mxu0 0.0
        %2743 = vmatprep.subr.mxu0 0.0
        %2744 = vmatpush1.msra.mxu0 0.0
        %2745 = vmatprep.subr.mxu0 0.0
        %2746 = vmatpush1.msra.mxu0 0.0
        %2747 = vmatprep.subr.mxu0 0.0
        %2748 = vmatpush1.msra.mxu0 0.0
        %2749 = vmatprep.subr.mxu0 0.0
        %2750 = vmatpush1.msra.mxu0 0.0
        %2751 = vmatprep.subr.mxu0 0.0
        %2752 = vmatpush1.msra.mxu0 0.0
        %2753 = vmatprep.subr.mxu0 0.0
        %2754 = vmatpush1.msra.mxu0 0.0
        %2755 = vmatprep.subr.mxu0 0.0
        %2756 = vmatpush1.msra.mxu0 0.0
        %2757 = vmatprep.subr.mxu0 0.0
        %2758 = vmatpush1.msra.mxu0 0.0
        %2759 = vmatprep.mubr.f32.mxu0 0.0
        %2760 = vmatmul.mubr.f32.gmra.mrb[0].mxu0 %v2693
        %v2761 = vpop.f32.mrb[0].mxu0
        %v2762 = vadd.f32 0.0, %v2761
        %v2763 = vpop.f32.mrb[0].mxu0
        %2764 = vdwg.mxu0
        %v2765 = vadd.f32 %v2684, %v2762
        %s2766 = scalar_lea.vmem %s9, 96
        %v2767 = vld [vmem:[%s2766] sm:$0xff]
        %v2768 = vld [vmem:[%s2766 + $0x8] sm:$0xff]
        %v2769 = vld [vmem:[%s2766 + $0x10] sm:$0xff]
        %v2770 = vld [vmem:[%s2766 + $0x18] sm:$0xff]
        %v2771 = vld [vmem:[%s2766 + $0x20] sm:$0xff]
        %v2772 = vld [vmem:[%s2766 + $0x28] sm:$0xff]
        %v2773 = vrot.slane %v2602, 2
        %v2774 = vsel %vm2610, %v2773, 0
        %2776 = vmatprep.subr.mxu0 0.0
        %2777 = vmatpush1.msra.mxu0 %v2767
        %2778 = vmatprep.subr.mxu0 0.0
        %2779 = vmatpush1.msra.mxu0 %v2768
        %2780 = vmatprep.subr.mxu0 0.0
        %2781 = vmatpush1.msra.mxu0 %v2769
        %2782 = vmatprep.subr.mxu0 0.0
        %2783 = vmatpush1.msra.mxu0 %v2770
        %2784 = vmatprep.subr.mxu0 0.0
        %2785 = vmatpush1.msra.mxu0 %v2771
        %2786 = vmatprep.subr.mxu0 0.0
        %2787 = vmatpush1.msra.mxu0 %v2772
        %2788 = vmatprep.subr.mxu0 0.0
        %2789 = vmatpush1.msra.mxu0 0.0
        %2790 = vmatprep.subr.mxu0 0.0
        %2791 = vmatpush1.msra.mxu0 0.0
        %2792 = vmatprep.subr.mxu0 0.0
        %2793 = vmatpush1.msra.mxu0 0.0
        %2794 = vmatprep.subr.mxu0 0.0
        %2795 = vmatpush1.msra.mxu0 0.0
        %2796 = vmatprep.subr.mxu0 0.0
        %2797 = vmatpush1.msra.mxu0 0.0
        %2798 = vmatprep.subr.mxu0 0.0
        %2799 = vmatpush1.msra.mxu0 0.0
        %2800 = vmatprep.subr.mxu0 0.0
        %2801 = vmatpush1.msra.mxu0 0.0
        %2802 = vmatprep.subr.mxu0 0.0
        %2803 = vmatpush1.msra.mxu0 0.0
        %2804 = vmatprep.subr.mxu0 0.0
        %2805 = vmatpush1.msra.mxu0 0.0
        %2806 = vmatprep.subr.mxu0 0.0
        %2807 = vmatpush1.msra.mxu0 0.0
        %2808 = vmatprep.subr.mxu0 0.0
        %2809 = vmatpush1.msra.mxu0 0.0
        %2810 = vmatprep.subr.mxu0 0.0
        %2811 = vmatpush1.msra.mxu0 0.0
        %2812 = vmatprep.subr.mxu0 0.0
        %2813 = vmatpush1.msra.mxu0 0.0
        %2814 = vmatprep.subr.mxu0 0.0
        %2815 = vmatpush1.msra.mxu0 0.0
        %2816 = vmatprep.subr.mxu0 0.0
        %2817 = vmatpush1.msra.mxu0 0.0
        %2818 = vmatprep.subr.mxu0 0.0
        %2819 = vmatpush1.msra.mxu0 0.0
        %2820 = vmatprep.subr.mxu0 0.0
        %2821 = vmatpush1.msra.mxu0 0.0
        %2822 = vmatprep.subr.mxu0 0.0
        %2823 = vmatpush1.msra.mxu0 0.0
        %2824 = vmatprep.subr.mxu0 0.0
        %2825 = vmatpush1.msra.mxu0 0.0
        %2826 = vmatprep.subr.mxu0 0.0
        %2827 = vmatpush1.msra.mxu0 0.0
        %2828 = vmatprep.subr.mxu0 0.0
        %2829 = vmatpush1.msra.mxu0 0.0
        %2830 = vmatprep.subr.mxu0 0.0
        %2831 = vmatpush1.msra.mxu0 0.0
        %2832 = vmatprep.subr.mxu0 0.0
        %2833 = vmatpush1.msra.mxu0 0.0
        %2834 = vmatprep.subr.mxu0 0.0
        %2835 = vmatpush1.msra.mxu0 0.0
        %2836 = vmatprep.subr.mxu0 0.0
        %2837 = vmatpush1.msra.mxu0 0.0
        %2838 = vmatprep.subr.mxu0 0.0
        %2839 = vmatpush1.msra.mxu0 0.0
        %2840 = vmatprep.mubr.f32.mxu0 0.0
        %2841 = vmatmul.mubr.f32.gmra.mrb[0].mxu0 %v2774
        %v2842 = vpop.f32.mrb[0].mxu0
        %v2843 = vadd.f32 0.0, %v2842
        %v2844 = vpop.f32.mrb[0].mxu0
        %2845 = vdwg.mxu0
        %v2846 = vadd.f32 %v2765, %v2843
        %s2847 = scalar_lea.vmem %s9, 144
        %v2848 = vld [vmem:[%s2847] sm:$0xff]
        %v2849 = vld [vmem:[%s2847 + $0x8] sm:$0xff]
        %v2850 = vld [vmem:[%s2847 + $0x10] sm:$0xff]
        %v2851 = vld [vmem:[%s2847 + $0x18] sm:$0xff]
        %v2852 = vld [vmem:[%s2847 + $0x20] sm:$0xff]
        %v2853 = vld [vmem:[%s2847 + $0x28] sm:$0xff]
        %v2854 = vrot.slane %v2602, 3
        %v2855 = vsel %vm2610, %v2854, 0
        %2857 = vmatprep.subr.mxu0 0.0
        %2858 = vmatpush1.msra.mxu0 %v2848
        %2859 = vmatprep.subr.mxu0 0.0
        %2860 = vmatpush1.msra.mxu0 %v2849
        %2861 = vmatprep.subr.mxu0 0.0
        %2862 = vmatpush1.msra.mxu0 %v2850
        %2863 = vmatprep.subr.mxu0 0.0
        %2864 = vmatpush1.msra.mxu0 %v2851
        %2865 = vmatprep.subr.mxu0 0.0
        %2866 = vmatpush1.msra.mxu0 %v2852
        %2867 = vmatprep.subr.mxu0 0.0
        %2868 = vmatpush1.msra.mxu0 %v2853
        %2869 = vmatprep.subr.mxu0 0.0
        %2870 = vmatpush1.msra.mxu0 0.0
        %2871 = vmatprep.subr.mxu0 0.0
        %2872 = vmatpush1.msra.mxu0 0.0
        %2873 = vmatprep.subr.mxu0 0.0
        %2874 = vmatpush1.msra.mxu0 0.0
        %2875 = vmatprep.subr.mxu0 0.0
        %2876 = vmatpush1.msra.mxu0 0.0
        %2877 = vmatprep.subr.mxu0 0.0
        %2878 = vmatpush1.msra.mxu0 0.0
        %2879 = vmatprep.subr.mxu0 0.0
        %2880 = vmatpush1.msra.mxu0 0.0
        %2881 = vmatprep.subr.mxu0 0.0
        %2882 = vmatpush1.msra.mxu0 0.0
        %2883 = vmatprep.subr.mxu0 0.0
        %2884 = vmatpush1.msra.mxu0 0.0
        %2885 = vmatprep.subr.mxu0 0.0
        %2886 = vmatpush1.msra.mxu0 0.0
        %2887 = vmatprep.subr.mxu0 0.0
        %2888 = vmatpush1.msra.mxu0 0.0
        %2889 = vmatprep.subr.mxu0 0.0
        %2890 = vmatpush1.msra.mxu0 0.0
        %2891 = vmatprep.subr.mxu0 0.0
        %2892 = vmatpush1.msra.mxu0 0.0
        %2893 = vmatprep.subr.mxu0 0.0
        %2894 = vmatpush1.msra.mxu0 0.0
        %2895 = vmatprep.subr.mxu0 0.0
        %2896 = vmatpush1.msra.mxu0 0.0
        %2897 = vmatprep.subr.mxu0 0.0
        %2898 = vmatpush1.msra.mxu0 0.0
        %2899 = vmatprep.subr.mxu0 0.0
        %2900 = vmatpush1.msra.mxu0 0.0
        %2901 = vmatprep.subr.mxu0 0.0
        %2902 = vmatpush1.msra.mxu0 0.0
        %2903 = vmatprep.subr.mxu0 0.0
        %2904 = vmatpush1.msra.mxu0 0.0
        %2905 = vmatprep.subr.mxu0 0.0
        %2906 = vmatpush1.msra.mxu0 0.0
        %2907 = vmatprep.subr.mxu0 0.0
        %2908 = vmatpush1.msra.mxu0 0.0
        %2909 = vmatprep.subr.mxu0 0.0
        %2910 = vmatpush1.msra.mxu0 0.0
        %2911 = vmatprep.subr.mxu0 0.0
        %2912 = vmatpush1.msra.mxu0 0.0
        %2913 = vmatprep.subr.mxu0 0.0
        %2914 = vmatpush1.msra.mxu0 0.0
        %2915 = vmatprep.subr.mxu0 0.0
        %2916 = vmatpush1.msra.mxu0 0.0
        %2917 = vmatprep.subr.mxu0 0.0
        %2918 = vmatpush1.msra.mxu0 0.0
        %2919 = vmatprep.subr.mxu0 0.0
        %2920 = vmatpush1.msra.mxu0 0.0
        %2921 = vmatprep.mubr.f32.mxu0 0.0
        %2922 = vmatmul.mubr.f32.gmra.mrb[0].mxu0 %v2855
        %v2923 = vpop.f32.mrb[0].mxu0
        %v2924 = vadd.f32 0.0, %v2923
        %v2925 = vpop.f32.mrb[0].mxu0
        %2926 = vdwg.mxu0
        %v2927 = vadd.f32 %v2846, %v2924
        %v2928 = vmax.f32 %v2927, 0.0
        %v2929 = vld [vmem:[%s11] sm:$0xff]
        %v2930 = vld [vmem:[%s11 + $0x8] sm:$0xff]
        %v2931 = vld [vmem:[%s11 + $0x10] sm:$0xff]
        %v2932 = vld [vmem:[%s11 + $0x18] sm:$0xff]
        %v2933 = vld [vmem:[%s11 + $0x20] sm:$0xff]
        %v2934 = vld [vmem:[%s11 + $0x28] sm:$0xff]
        %v2935 = vld [vmem:[%s11 + $0x30] sm:$0xff]
        %v2936 = vld [vmem:[%s11 + $0x38] sm:$0xff]
        %v2937 = vld [vmem:[%s11 + $0x40] sm:$0xff]
        %v2938 = vld [vmem:[%s11 + $0x48] sm:$0xff]
        %v2939 = vld [vmem:[%s11 + $0x50] sm:$0xff]
        %v2940 = vld [vmem:[%s11 + $0x58] sm:$0xff]
        %v2941 = vld [vmem:[%s11 + $0x60] sm:$0xff]
        %v2942 = vld [vmem:[%s11 + $0x68] sm:$0xff]
        %v2943 = vld [vmem:[%s11 + $0x70] sm:$0xff]
        %v2944 = vld [vmem:[#allocation10] sm:$0x1]
        %vm2945 = vcmask 982016
        %v2947 = vsel %vm2945, %v2928, 0
        %2949 = vmatprep.subr.mxu0 0.0
        %2950 = vmatpush1.msra.mxu0 %v2929
        %2951 = vmatprep.subr.mxu0 0.0
        %2952 = vmatpush1.msra.mxu0 %v2930
        %2953 = vmatprep.subr.mxu0 0.0
        %2954 = vmatpush1.msra.mxu0 %v2931
        %2955 = vmatprep.subr.mxu0 0.0
        %2956 = vmatpush1.msra.mxu0 %v2932
        %2957 = vmatprep.subr.mxu0 0.0
        %2958 = vmatpush1.msra.mxu0 %v2933
        %2959 = vmatprep.subr.mxu0 0.0
        %2960 = vmatpush1.msra.mxu0 %v2934
        %2961 = vmatprep.subr.mxu0 0.0
        %2962 = vmatpush1.msra.mxu0 %v2935
        %2963 = vmatprep.subr.mxu0 0.0
        %2964 = vmatpush1.msra.mxu0 %v2936
        %2965 = vmatprep.subr.mxu0 0.0
        %2966 = vmatpush1.msra.mxu0 %v2937
        %2967 = vmatprep.subr.mxu0 0.0
        %2968 = vmatpush1.msra.mxu0 %v2938
        %2969 = vmatprep.subr.mxu0 0.0
        %2970 = vmatpush1.msra.mxu0 %v2939
        %2971 = vmatprep.subr.mxu0 0.0
        %2972 = vmatpush1.msra.mxu0 %v2940
        %2973 = vmatprep.subr.mxu0 0.0
        %2974 = vmatpush1.msra.mxu0 %v2941
        %2975 = vmatprep.subr.mxu0 0.0
        %2976 = vmatpush1.msra.mxu0 %v2942
        %2977 = vmatprep.subr.mxu0 0.0
        %2978 = vmatpush1.msra.mxu0 %v2943
        %2979 = vmatprep.subr.mxu0 0.0
        %2980 = vmatpush1.msra.mxu0 0.0
        %2981 = vmatprep.subr.mxu0 0.0
        %2982 = vmatpush1.msra.mxu0 0.0
        %2983 = vmatprep.subr.mxu0 0.0
        %2984 = vmatpush1.msra.mxu0 0.0
        %2985 = vmatprep.subr.mxu0 0.0
        %2986 = vmatpush1.msra.mxu0 0.0
        %2987 = vmatprep.subr.mxu0 0.0
        %2988 = vmatpush1.msra.mxu0 0.0
        %2989 = vmatprep.subr.mxu0 0.0
        %2990 = vmatpush1.msra.mxu0 0.0
        %2991 = vmatprep.subr.mxu0 0.0
        %2992 = vmatpush1.msra.mxu0 0.0
        %2993 = vmatprep.subr.mxu0 0.0
        %2994 = vmatpush1.msra.mxu0 0.0
        %2995 = vmatprep.subr.mxu0 0.0
        %2996 = vmatpush1.msra.mxu0 0.0
        %2997 = vmatprep.subr.mxu0 0.0
        %2998 = vmatpush1.msra.mxu0 0.0
        %2999 = vmatprep.subr.mxu0 0.0
        %3000 = vmatpush1.msra.mxu0 0.0
        %3001 = vmatprep.subr.mxu0 0.0
        %3002 = vmatpush1.msra.mxu0 0.0
        %3003 = vmatprep.subr.mxu0 0.0
        %3004 = vmatpush1.msra.mxu0 0.0
        %3005 = vmatprep.subr.mxu0 0.0
        %3006 = vmatpush1.msra.mxu0 0.0
        %3007 = vmatprep.subr.mxu0 0.0
        %3008 = vmatpush1.msra.mxu0 0.0
        %3009 = vmatprep.subr.mxu0 0.0
        %3010 = vmatpush1.msra.mxu0 0.0
        %3011 = vmatprep.subr.mxu0 0.0
        %3012 = vmatpush1.msra.mxu0 0.0
        %3013 = vmatprep.mubr.f32.mxu0 0.0
        %3014 = vmatmul.mubr.f32.gmra.mrb[0].mxu0 %v2947
        %v3015 = vpop.f32.mrb[0].mxu0
        %v3016 = vadd.f32 %v2944, %v3015
        %v3017 = vpop.f32.mrb[0].mxu0
        %3018 = vdwg.mxu0
        %v3019 = vmax.f32 %v3016, 0.0
        %v3020 = vld [vmem:[%s13] sm:$0xff]
        %v3021 = vld [vmem:[%s13 + $0x8] sm:$0xff]
        %v3022 = vld [vmem:[%s13 + $0x10] sm:$0xff]
        %v3023 = vld [vmem:[%s13 + $0x18] sm:$0xff]
        %v3024 = vld [vmem:[%s13 + $0x20] sm:$0xff]
        %v3025 = vld [vmem:[%s13 + $0x28] sm:$0xff]
        %v3026 = vld [vmem:[%s13 + $0x30] sm:$0xff]
        %v3027 = vld [vmem:[%s13 + $0x38] sm:$0xf]
        %v3028 = vld [vmem:[#allocation11] sm:$0x1]
        %vm3029 = vcmask 490496
        %v3031 = vsel %vm3029, %v3019, 0
        %v3034 = vsel %vm612, %v3027, 0
        %3036 = vmatprep.subr.mxu0 0.0
        %3037 = vmatpush1.msra.mxu0 %v3020
        %3038 = vmatprep.subr.mxu0 0.0
        %3039 = vmatpush1.msra.mxu0 %v3021
        %3040 = vmatprep.subr.mxu0 0.0
        %3041 = vmatpush1.msra.mxu0 %v3022
        %3042 = vmatprep.subr.mxu0 0.0
        %3043 = vmatpush1.msra.mxu0 %v3023
        %3044 = vmatprep.subr.mxu0 0.0
        %3045 = vmatpush1.msra.mxu0 %v3024
        %3046 = vmatprep.subr.mxu0 0.0
        %3047 = vmatpush1.msra.mxu0 %v3025
        %3048 = vmatprep.subr.mxu0 0.0
        %3049 = vmatpush1.msra.mxu0 %v3026
        %3050 = vmatprep.subr.mxu0 0.0
        %3051 = vmatpush1.msra.mxu0 %v3034
        %3052 = vmatprep.subr.mxu0 0.0
        %3053 = vmatpush1.msra.mxu0 0.0
        %3054 = vmatprep.subr.mxu0 0.0
        %3055 = vmatpush1.msra.mxu0 0.0
        %3056 = vmatprep.subr.mxu0 0.0
        %3057 = vmatpush1.msra.mxu0 0.0
        %3058 = vmatprep.subr.mxu0 0.0
        %3059 = vmatpush1.msra.mxu0 0.0
        %3060 = vmatprep.subr.mxu0 0.0
        %3061 = vmatpush1.msra.mxu0 0.0
        %3062 = vmatprep.subr.mxu0 0.0
        %3063 = vmatpush1.msra.mxu0 0.0
        %3064 = vmatprep.subr.mxu0 0.0
        %3065 = vmatpush1.msra.mxu0 0.0
        %3066 = vmatprep.subr.mxu0 0.0
        %3067 = vmatpush1.msra.mxu0 0.0
        %3068 = vmatprep.subr.mxu0 0.0
        %3069 = vmatpush1.msra.mxu0 0.0
        %3070 = vmatprep.subr.mxu0 0.0
        %3071 = vmatpush1.msra.mxu0 0.0
        %3072 = vmatprep.subr.mxu0 0.0
        %3073 = vmatpush1.msra.mxu0 0.0
        %3074 = vmatprep.subr.mxu0 0.0
        %3075 = vmatpush1.msra.mxu0 0.0
        %3076 = vmatprep.subr.mxu0 0.0
        %3077 = vmatpush1.msra.mxu0 0.0
        %3078 = vmatprep.subr.mxu0 0.0
        %3079 = vmatpush1.msra.mxu0 0.0
        %3080 = vmatprep.subr.mxu0 0.0
        %3081 = vmatpush1.msra.mxu0 0.0
        %3082 = vmatprep.subr.mxu0 0.0
        %3083 = vmatpush1.msra.mxu0 0.0
        %3084 = vmatprep.subr.mxu0 0.0
        %3085 = vmatpush1.msra.mxu0 0.0
        %3086 = vmatprep.subr.mxu0 0.0
        %3087 = vmatpush1.msra.mxu0 0.0
        %3088 = vmatprep.subr.mxu0 0.0
        %3089 = vmatpush1.msra.mxu0 0.0
        %3090 = vmatprep.subr.mxu0 0.0
        %3091 = vmatpush1.msra.mxu0 0.0
        %3092 = vmatprep.subr.mxu0 0.0
        %3093 = vmatpush1.msra.mxu0 0.0
        %3094 = vmatprep.subr.mxu0 0.0
        %3095 = vmatpush1.msra.mxu0 0.0
        %3096 = vmatprep.subr.mxu0 0.0
        %3097 = vmatpush1.msra.mxu0 0.0
        %3098 = vmatprep.subr.mxu0 0.0
        %3099 = vmatpush1.msra.mxu0 0.0
        %3100 = vmatprep.mubr.f32.mxu0 0.0
        %3101 = vmatmul.mubr.f32.gmra.mrb[0].mxu0 %v3031
        %v3102 = vpop.f32.mrb[0].mxu0
        %v3103 = vadd.f32 %v3028, %v3102
        %v3104 = vpop.f32.mrb[0].mxu0
        %3105 = vdwg.mxu0
        %vm3106 = vcmask 73728
        %3107 = vst.msk [vmem:[%s566] sm:$0x1] %vm3106, %v3103
        %s3108 = sand.u32 %s361, 1
        %s3109 = scalar_lea.sflag [#allocation4], %s3108
        %s3110 = sand.u32 %s361, 1
        %s3111 = scalar_lea.vmem [#allocation13], %s3110
        // Predicated region
        $region105: #{network_forward.1} parent=79 // pred_check
          %p3112 = pneg %p371
        $region106: #{network_forward.1} parent=79 // pred_check_branch
          %3114 = sbr.rel (%p3112) target = $region108
        $region107: #{network_forward.1} parent=79 // pred_region
          %s3116 = ssub.s32 16, 16
          %3117 = vsyncadd %s3109, %s3116
          %s3118 = smul.addr %s33, 16
          %s3119 = scalar_lea.hbm %s15, %s3118
          %s3121 = sshll.u32 %s3111, 4
          %s3122 = int_to_ptr.vmem [resolvable:$true] %s3121
          %3124 = dma.vmem_to_hbm [thread:$0]  %s3122, 16, %s3119, %s3109
        $region108: #{network_forward.1} parent=79 // pred_fallthru
          _
      $region80: #{network_forward.1} parent=5 // pred_fallthru
        _
      %p3125 = scmp.le.s32.totalorder 2, %s28
      // Predicated region
      $region109: #{network_forward.1} parent=5 // pred_check
        %p3126 = pneg %p3125
      $region110: #{network_forward.1} parent=5 // pred_check_branch
        %3128 = sbr.rel (%p3126) target = $region112
      $region111: #{network_forward.1} parent=5 // pred_region
        %s3129 = ssub.s32 %s28, 2
        // Predicated region
        $region113: #{network_forward.1} parent=111 // pred_check
          %p3130 = pneg %p377
        $region114: #{network_forward.1} parent=111 // pred_check_branch
          %3132 = sbr.rel (%p3130) target = $region116
        $region115: #{network_forward.1} parent=111 // pred_region
          %s3133 = sand.u32 %s362, 1
          %s3134 = scalar_lea.sflag [#allocation4], %s3133
          %s3135 = sand.u32 %s362, 1
          %s3136 = scalar_lea.vmem [#allocation13], %s3135
          %3137 = dma.done %s3134, 16
        $region116: #{network_forward.1} parent=111 // pred_fallthru
          _
      $region112: #{network_forward.1} parent=5 // pred_fallthru
        _
    $region6: #{network_forward.1} parent=1 // loop_footer
      %s32 = sadd.s32 1, %s28
    $region7: #{network_forward.1} parent=1 // loop_footer_branch
      %27 = sbr.rel target = $region3
    $region8: #{network_forward.1} parent=1 // loop_exit
      _
    %3138 = vsyncpa [#allocation3], 1
    %s3139 = scalar_lea.sflag [#allocation3], 1
    %3140 = vsyncpa %s3139, 1
    %3141 = vsyncpa [#allocation6], 1
    %3142 = vsyncpa [#allocation9], 1
    %3143 = vsyncpa [#allocation12], 1
    %3144 = vsyncpa [#allocation4], 1
    %s3145 = scalar_lea.sflag [#allocation4], 1
    %3146 = vsyncpa %s3145, 1

</llo_original>
